<compile_context>
chip_gen: v7x
topology: tpu7x:2x2x1
jax: 0.10.0
libtpu: 0.0.40
codegen_flags: <defaults>
</compile_context>

<pallas_src>
import functools
import math

import jax
import jax.numpy as jnp
from jax.experimental import pallas as pl
from jax.experimental.pallas import tpu as pltpu

BN_EPS = 1e-5


def _row_tile(n, target=512):
    """Row tile: full extent if small, else `target` (pl.cdiv edge block)."""
    return n if n <= target else target


def _nbytes(shape, itemsize):
    return math.prod(shape) * itemsize


def _vmem_limit(block_bytes):
    """Scoped-VMEM budget: blocks x (double-buffer + margin), clamped so the
    same kernel fits v5e/v6e (128 MiB physical) and v7x (64 MiB physical)."""
    return int(min(64 << 20, max(32 << 20, 3 * block_bytes)))


# ----------------------------- Pallas kernels -----------------------------

def _stem_kernel(x_ref, w_ref, s_ref, b_ref, h1_ref, sc_ref, *, mid):
    # Fused conv1 (1x1 + BN + ReLU) and shortcut (1x1 + BN): x is read once
    # and pushed through the MXU once against the concatenated weight.
    y = jnp.dot(x_ref[...], w_ref[...], preferred_element_type=jnp.float32)
    y = y * s_ref[...] + b_ref[...]
    h1_ref[...] = jnp.maximum(y[:, :mid], 0.0).astype(h1_ref.dtype)
    sc_ref[...] = y[:, mid:].astype(sc_ref.dtype)


def stem_conv1_shortcut(x, wcat, scat, bcat, mid):
    """x: (M, Cin) bf16, wcat: (Cin, mid+cout) bf16
       -> (h1 (M, mid) bf16, shortcut (M, cout) bf16)."""
    M, Cin = x.shape
    ncat = wcat.shape[1]
    cout = ncat - mid
    tm = _row_tile(M)
    blk = (_nbytes((tm, Cin), 2) + _nbytes((Cin, ncat), 2)
           + 2 * _nbytes((1, ncat), 4)
           + _nbytes((tm, mid), 2) + _nbytes((tm, cout), 2)
           + _nbytes((tm, ncat), 4))          # in-kernel f32 result
    return pl.pallas_call(
        functools.partial(_stem_kernel, mid=mid),
        out_shape=(jax.ShapeDtypeStruct((M, mid), jnp.bfloat16),
                   jax.ShapeDtypeStruct((M, cout), jnp.bfloat16)),
        grid=(pl.cdiv(M, tm),),
        in_specs=[
            pl.BlockSpec((tm, Cin), lambda i: (i, 0)),
            pl.BlockSpec((Cin, ncat), lambda i: (0, 0)),
            pl.BlockSpec((1, ncat), lambda i: (0, 0)),
            pl.BlockSpec((1, ncat), lambda i: (0, 0)),
        ],
        out_specs=(pl.BlockSpec((tm, mid), lambda i: (i, 0)),
                   pl.BlockSpec((tm, cout), lambda i: (i, 0))),
        compiler_params=pltpu.CompilerParams(
            dimension_semantics=("parallel",),
            vmem_limit_bytes=_vmem_limit(blk)),
    )(x, wcat, scat.reshape(1, -1), bcat.reshape(1, -1))


def _branch_convs_kernel(x_ref, w_ref, s_ref, b_ref, f_ref, fsum_ref, *,
                         H, W, m, pmax):
    # All m dilated 3x3 grouped convs (dense block-diagonal per-tap weights)
    # + folded BN + ReLU for one sample. The un-padded feature map is read
    # from HBM once; zero padding and the 9 tap matmuls stay in VMEM.
    # The per-sample spatial sum (GAP numerator) is a fused second output.
    C = x_ref.shape[3]
    Wp = W + 2 * pmax
    x = x_ref[0]                                           # (H, W, C) bf16
    zw = jnp.zeros((H, pmax, C), x.dtype)
    zh = jnp.zeros((pmax, Wp, C), x.dtype)
    xw = jnp.concatenate([zw, x, zw], axis=1)              # (H, Wp, C)
    xp = jnp.concatenate([zh, xw, zh], axis=0)             # (Hp, Wp, C)

    for i in range(m):
        dil = i + 1
        acc = jnp.zeros((H * W, C), jnp.float32)
        for ky in range(3):
            for kx in range(3):
                oy = pmax + (ky - 1) * dil
                ox = pmax + (kx - 1) * dil
                win = xp[oy:oy + H, ox:ox + W, :].reshape(H * W, C)
                acc = acc + jnp.dot(win, w_ref[i, ky * 3 + kx],
                                    preferred_element_type=jnp.float32)
        y = jnp.maximum(acc * s_ref[i:i + 1, :] + b_ref[i:i + 1, :], 0.0)
        f_ref[i, 0] = y.astype(f_ref.dtype)
        fsum_ref[i, 0] = jnp.sum(y, axis=0, keepdims=True)


def branch_convs_bn_relu(h1_nhwc, wtaps, scale, bias, *, m):
    """h1: (N, H, W, C) bf16, wtaps: (m, 9, C, C) bf16, scale/bias: (m, C) f32
       -> (f (m, N, H*W, C) bf16, per-sample spatial sum (m, N, 1, C) f32)."""
    N, H, W, C = h1_nhwc.shape
    pmax = m
    blk = (_nbytes((1, H, W, C), 2) + _nbytes((m, 9, C, C), 2)
           + 2 * _nbytes((m, C), 4)
           + _nbytes((m, 1, H * W, C), 2) + _nbytes((m, 1, 1, C), 4)
           + 2 * _nbytes((H * W, C), 4)                       # acc + relu temp
           + _nbytes((H + 2 * pmax, W + 2 * pmax, C), 2))     # padded buffer
    return pl.pallas_call(
        functools.partial(_branch_convs_kernel, H=H, W=W, m=m, pmax=pmax),
        out_shape=(jax.ShapeDtypeStruct((m, N, H * W, C), jnp.bfloat16),
                   jax.ShapeDtypeStruct((m, N, 1, C), jnp.float32)),
        grid=(N,),
        in_specs=[
            pl.BlockSpec((1, H, W, C), lambda n: (n, 0, 0, 0)),
            pl.BlockSpec((m, 9, C, C), lambda n: (0, 0, 0, 0)),
            pl.BlockSpec((m, C), lambda n: (0, 0)),
            pl.BlockSpec((m, C), lambda n: (0, 0)),
        ],
        out_specs=(pl.BlockSpec((m, 1, H * W, C), lambda n: (0, n, 0, 0)),
                   pl.BlockSpec((m, 1, 1, C), lambda n: (0, n, 0, 0))),
        compiler_params=pltpu.CompilerParams(
            dimension_semantics=("parallel",),
            vmem_limit_bytes=_vmem_limit(blk)),
    )(h1_nhwc, wtaps, scale, bias)


def _sk_fuse_kernel(f_ref, a_ref, o_ref, *, m):
    # Exact softmax over the branch axis + attention-weighted branch sum.
    logits = a_ref[0]                                     # (m, C) f32
    mx = jnp.max(logits, axis=0, keepdims=True)
    e = jnp.exp(logits - mx)
    att = e / jnp.sum(e, axis=0, keepdims=True)
    acc = att[0:1, :] * f_ref[0, 0].astype(jnp.float32)
    for i in range(1, m):
        acc = acc + att[i:i + 1, :] * f_ref[i, 0].astype(jnp.float32)
    o_ref[0] = acc.astype(o_ref.dtype)


def sk_fuse(f, att_logits):
    """f: (m, N, HW, C) bf16, att_logits: (N, m, C) f32 -> (N, HW, C) bf16,
       tiled per sample over HW so block VMEM is batch-size independent."""
    m, N, HW, C = f.shape
    thw = _row_tile(HW)
    blk = (_nbytes((m, 1, thw, C), 2) + _nbytes((1, m, C), 4)
           + _nbytes((1, thw, C), 2) + _nbytes((thw, C), 4))
    return pl.pallas_call(
        functools.partial(_sk_fuse_kernel, m=m),
        out_shape=jax.ShapeDtypeStruct((N, HW, C), jnp.bfloat16),
        grid=(N, pl.cdiv(HW, thw)),
        in_specs=[
            pl.BlockSpec((m, 1, thw, C), lambda n, j: (0, n, j, 0)),
            pl.BlockSpec((1, m, C), lambda n, j: (n, 0, 0)),
        ],
        out_specs=pl.BlockSpec((1, thw, C), lambda n, j: (n, j, 0)),
        compiler_params=pltpu.CompilerParams(
            dimension_semantics=("parallel", "parallel"),
            vmem_limit_bytes=_vmem_limit(blk)),
    )(f, att_logits)


def _conv3_add_relu_kernel(v_ref, w_ref, s_ref, b_ref, sc_ref, o_ref):
    # conv3 (1x1) + folded BN + residual shortcut add + ReLU, fused.
    y = jnp.dot(v_ref[...], w_ref[...], preferred_element_type=jnp.float32)
    y = y * s_ref[...] + b_ref[...] + sc_ref[...].astype(jnp.float32)
    o_ref[...] = jnp.maximum(y, 0.0).astype(o_ref.dtype)


def conv3_add_relu(v, w3, scale, bias, shortcut):
    """v: (M, mid) bf16, shortcut: (M, cout) bf16 -> (M, cout) bf16."""
    M, mid = v.shape
    cout = w3.shape[1]
    tm = _row_tile(M)
    blk = (_nbytes((tm, mid), 2) + _nbytes((mid, cout), 2)
           + 2 * _nbytes((1, cout), 4)
           + 2 * _nbytes((tm, cout), 2) + _nbytes((tm, cout), 4))
    return pl.pallas_call(
        _conv3_add_relu_kernel,
        out_shape=jax.ShapeDtypeStruct((M, cout), jnp.bfloat16),
        grid=(pl.cdiv(M, tm),),
        in_specs=[
            pl.BlockSpec((tm, mid), lambda i: (i, 0)),
            pl.BlockSpec((mid, cout), lambda i: (0, 0)),
            pl.BlockSpec((1, cout), lambda i: (0, 0)),
            pl.BlockSpec((1, cout), lambda i: (0, 0)),
            pl.BlockSpec((tm, cout), lambda i: (i, 0)),
        ],
        out_specs=pl.BlockSpec((tm, cout), lambda i: (i, 0)),
        compiler_params=pltpu.CompilerParams(
            dimension_semantics=("parallel",),
            vmem_limit_bytes=_vmem_limit(blk)),
    )(v, w3, scale.reshape(1, -1), bias.reshape(1, -1), shortcut)


# --------------------------------- glue -----------------------------------

def fold_bn(gamma, beta, mean, var, eps=BN_EPS):
    scale = gamma / jnp.sqrt(var + eps)
    bias = beta - mean * scale
    return scale, bias


def grouped3x3_to_taps(w_oihw, groups):
    """Grouped conv weight (C, C//g, 3, 3) -> per-tap dense (9, C, C) matmul
    weights (zeros outside each group's block), tap-major (ky, kx) order."""
    C, Cg, _, _ = w_oihw.shape
    wt = jnp.transpose(w_oihw, (2, 3, 1, 0)).reshape(9, Cg, C)  # (9, Cg, Cout)
    dense = jnp.zeros((9, C, C), dtype=w_oihw.dtype)
    for gidx in range(groups):
        lo, hi = gidx * Cg, (gidx + 1) * Cg
        dense = dense.at[:, lo:hi, lo:hi].set(wt[:, :, lo:hi])
    return dense


def init_params(key, in_ch, mid_ch, out_ch, m, g, r, l):
    d = max(mid_ch // r, l)
    keys = jax.random.split(key, 64)
    it = iter(keys)

    def conv_w(shape):
        return 0.1 * jax.random.normal(next(it), shape, jnp.float32)

    def bn(ch):
        gamma = 1.0 + 0.1 * jax.random.normal(next(it), (ch,), jnp.float32)
        beta = 0.1 * jax.random.normal(next(it), (ch,), jnp.float32)
        mean = 0.1 * jax.random.normal(next(it), (ch,), jnp.float32)
        var = 0.5 + jax.random.uniform(next(it), (ch,), jnp.float32)
        return gamma, beta, mean, var

    p = {"d": d}
    p["conv1_w"] = conv_w((mid_ch, in_ch, 1, 1))
    p["bn1"] = bn(mid_ch)
    p["sk_conv_w"] = [conv_w((mid_ch, mid_ch // g, 3, 3)) for _ in range(m)]
    p["sk_bn"] = [bn(mid_ch) for _ in range(m)]
    p["sk_fc_w"] = conv_w((d, mid_ch, 1, 1))
    p["sk_fc_bn"] = bn(d)
    p["sk_fcs_w"] = [conv_w((mid_ch, d, 1, 1)) for _ in range(m)]
    p["sk_fcs_b"] = [0.1 * jax.random.normal(next(it), (mid_ch,), jnp.float32)
                     for _ in range(m)]
    p["conv3_w"] = conv_w((out_ch, mid_ch, 1, 1))
    p["bn3"] = bn(out_ch)
    p["short_w"] = conv_w((out_ch, in_ch, 1, 1))
    p["short_bn"] = bn(out_ch)
    return p


def sk_unit_forward(x_nchw, p, *, m, g):
    """SKUnit forward, stride=1, in_channels != out_channels (conv shortcut)."""
    N, Cin, H, W = x_nchw.shape
    M = N * H * W
    # TODO(synk): when chaining SKUnits, stay in NHWC / bf16 end-to-end to drop
    # these boundary transposes (each is a full HBM read+write pass).
    x = jnp.transpose(x_nchw, (0, 2, 3, 1)).reshape(M, Cin).astype(jnp.bfloat16)

    # fused conv1 (BN+ReLU) + shortcut (BN): one MXU pass over x, bf16 outputs.
    w1 = p["conv1_w"][:, :, 0, 0].T                             # (Cin, mid)
    ws = p["short_w"][:, :, 0, 0].T                             # (Cin, out)
    mid, cout = w1.shape[1], ws.shape[1]
    s1, b1 = fold_bn(*p["bn1"])
    ss, bs = fold_bn(*p["short_bn"])
    wcat = jnp.concatenate([w1, ws], axis=1).astype(jnp.bfloat16)
    scat = jnp.concatenate([s1, ss], axis=0)
    bcat = jnp.concatenate([b1, bs], axis=0)
    h1, shortcut = stem_conv1_shortcut(x, wcat, scat, bcat, mid)

    # ---- SKConv: all m branch convs in ONE kernel (h1 read once, in-VMEM
    # padding, 9-tap accumulation, fused GAP spatial sums) ----
    wtaps = jnp.stack(
        [grouped3x3_to_taps(p["sk_conv_w"][i], g) for i in range(m)], axis=0
    ).astype(jnp.bfloat16)                                      # (m, 9, mid, mid)
    sk_sb = [fold_bn(*p["sk_bn"][i]) for i in range(m)]
    sk_scale = jnp.stack([s for s, _ in sk_sb], axis=0)         # (m, mid)
    sk_bias = jnp.stack([b for _, b in sk_sb], axis=0)          # (m, mid)
    f, fsum = branch_convs_bn_relu(h1.reshape(N, H, W, mid), wtaps,
                                   sk_scale, sk_bias, m=m)

    # GAP of the branch-sum: spatial sums came fused out of the branch kernel.
    features_s = jnp.sum(fsum, axis=0)[:, 0, :] / float(H * W)  # (N, mid) f32

    # Tiny attention MLP (N rows): plain XLA — kernel launch overhead would
    # dominate its negligible compute.
    wz = p["sk_fc_w"][:, :, 0, 0].T                             # (mid, d)
    sz, bz = fold_bn(*p["sk_fc_bn"])
    z = jnp.maximum((features_s @ wz) * sz + bz, 0.0)           # (N, d)
    wa = jnp.concatenate([p["sk_fcs_w"][i][:, :, 0, 0].T for i in range(m)],
                         axis=1)                                # (d, m*mid)
    ba = jnp.concatenate([p["sk_fcs_b"][i] for i in range(m)], axis=0)
    att_logits = (z @ wa + ba).reshape(N, m, mid)               # (N, m, mid)

    # exact branch softmax + attention-weighted fusion (per-sample HW tiles)
    v = sk_fuse(f, att_logits).reshape(M, mid)                  # (M, mid) bf16

    # conv3 (1x1) + BN + residual add + ReLU, fused; bf16 store.
    w3 = p["conv3_w"][:, :, 0, 0].T.astype(jnp.bfloat16)
    s3, b3 = fold_bn(*p["bn3"])
    out = conv3_add_relu(v, w3, s3, b3, shortcut)               # (M, out) bf16
    out = jnp.transpose(out.reshape(N, H, W, cout), (0, 3, 1, 2))
    return out.astype(jnp.float32)


if __name__ == "__main__":
    # Small, module-consistent shapes: NCHW input (2, 16, 8, 8),
    # mid=32, out=32, m=2 branches, groups g=4 (divides mid), r=16, l=8.
    N, in_ch, H, W = 2, 16, 8, 8
    mid_ch, out_ch = 32, 32
    m, g, r, l = 2, 4, 16, 8

    key = jax.random.PRNGKey(0)
    kx, kp = jax.random.split(key)
    x = jax.random.normal(kx, (N, in_ch, H, W), jnp.float32)
    params = init_params(kp, in_ch, mid_ch, out_ch, m, g, r, l)

    fwd = jax.jit(functools.partial(sk_unit_forward, m=m, g=g))
    y = fwd(x, params)
    jax.block_until_ready(y)
    assert y.shape == (N, out_ch, H, W)
    assert bool(jnp.all(jnp.isfinite(y)))
    print("KERNEL_OK")
</pallas_src>

<mosaic_0001>
module attributes {stable_mosaic.version = 11 : i64} {
  func.func @_stem_kernel(%arg0: i32, %arg1: memref<128x16xbf16, #tpu.memory_space<vmem>>, %arg2: memref<16x64xbf16, #tpu.memory_space<vmem>>, %arg3: memref<1x64xf32, #tpu.memory_space<vmem>>, %arg4: memref<1x64xf32, #tpu.memory_space<vmem>>, %arg5: memref<128x32xbf16, #tpu.memory_space<vmem>>, %arg6: memref<128x32xbf16, #tpu.memory_space<vmem>>) attributes {dimension_semantics = [#tpu.dimension_semantics<parallel>], iteration_bounds = array<i64: 1>, scalar_prefetch = 0 : i64, scratch_operands = 0 : i64, tpu.core_type = #tpu.core_type<tc>, window_params = [{transform_indices = @transform_0, window_bounds = array<i64: 128, 16>}, {pipeline_mode = #tpu.pipeline_mode<synchronous>, transform_indices = @transform_1, window_bounds = array<i64: 16, 64>}, {pipeline_mode = #tpu.pipeline_mode<synchronous>, transform_indices = @transform_2, window_bounds = array<i64: 1, 64>}, {pipeline_mode = #tpu.pipeline_mode<synchronous>, transform_indices = @transform_3, window_bounds = array<i64: 1, 64>}, {transform_indices = @transform_4, window_bounds = array<i64: 128, 32>}, {transform_indices = @transform_5, window_bounds = array<i64: 128, 32>}]} {
    %c0 = arith.constant 0 : index
    %c0_0 = arith.constant 0 : index
    %0 = vector.load %arg1[%c0, %c0_0] : memref<128x16xbf16, #tpu.memory_space<vmem>>, vector<128x16xbf16>
    %c0_1 = arith.constant 0 : index
    %c0_2 = arith.constant 0 : index
    %1 = vector.load %arg2[%c0_1, %c0_2] : memref<16x64xbf16, #tpu.memory_space<vmem>>, vector<16x64xbf16>
    %cst = arith.constant dense<0.000000e+00> : vector<128x64xf32>
    %2 = tpu.matmul %0, %1, %cst {dimension_numbers = #tpu.dot_dimension_numbers<[1], [0], [0], [1], [0, 0, 1, 1], [], []>} : vector<128x16xbf16>, vector<16x64xbf16>, vector<128x64xf32> -> vector<128x64xf32>
    %c0_3 = arith.constant 0 : index
    %c0_4 = arith.constant 0 : index
    %3 = vector.load %arg3[%c0_3, %c0_4] : memref<1x64xf32, #tpu.memory_space<vmem>>, vector<1x64xf32>
    %4 = vector.broadcast %3 : vector<1x64xf32> to vector<128x64xf32>
    %5 = arith.mulf %2, %4 : vector<128x64xf32>
    %c0_5 = arith.constant 0 : index
    %c0_6 = arith.constant 0 : index
    %6 = vector.load %arg4[%c0_5, %c0_6] : memref<1x64xf32, #tpu.memory_space<vmem>>, vector<1x64xf32>
    %7 = vector.broadcast %6 : vector<1x64xf32> to vector<128x64xf32>
    %8 = arith.addf %5, %7 : vector<128x64xf32>
    %9 = vector.extract_strided_slice %8 {offsets = [0, 0], sizes = [128, 32], strides = [1, 1]} : vector<128x64xf32> to vector<128x32xf32>
    %cst_7 = arith.constant 0.000000e+00 : f32
    %10 = vector.broadcast %cst_7 : f32 to vector<128x32xf32>
    %11 = arith.maximumf %9, %10 : vector<128x32xf32>
    %12 = arith.truncf %11 : vector<128x32xf32> to vector<128x32xbf16>
    %c0_8 = arith.constant 0 : index
    %c0_9 = arith.constant 0 : index
    %13 = vector.load %arg5[%c0_8, %c0_9] : memref<128x32xbf16, #tpu.memory_space<vmem>>, vector<128x32xbf16>
    tpu.vector_store %arg5[%c0_8, %c0_9], %12 {strides = array<i32>} : memref<128x32xbf16, #tpu.memory_space<vmem>>, vector<128x32xbf16>,
    %14 = vector.extract_strided_slice %8 {offsets = [0, 32], sizes = [128, 32], strides = [1, 1]} : vector<128x64xf32> to vector<128x32xf32>
    %15 = arith.truncf %14 : vector<128x32xf32> to vector<128x32xbf16>
    %c0_10 = arith.constant 0 : index
    %c0_11 = arith.constant 0 : index
    %16 = vector.load %arg6[%c0_10, %c0_11] : memref<128x32xbf16, #tpu.memory_space<vmem>>, vector<128x32xbf16>
    tpu.vector_store %arg6[%c0_10, %c0_11], %15 {strides = array<i32>} : memref<128x32xbf16, #tpu.memory_space<vmem>>, vector<128x32xbf16>,
    return
  }
  func.func @transform_0(%arg0: i32) -> (i32, i32) {
    %c0_i32 = arith.constant 0 : i32
    %c0_i32_0 = arith.constant 0 : i32
    return %arg0, %c0_i32 : i32, i32
  }
  func.func @transform_1(%arg0: i32) -> (i32, i32) {
    %c0_i32 = arith.constant 0 : i32
    %c0_i32_0 = arith.constant 0 : i32
    %c0_i32_1 = arith.constant 0 : i32
    return %c0_i32, %c0_i32_0 : i32, i32
  }
  func.func @transform_2(%arg0: i32) -> (i32, i32) {
    %c0_i32 = arith.constant 0 : i32
    %c0_i32_0 = arith.constant 0 : i32
    %c0_i32_1 = arith.constant 0 : i32
    return %c0_i32, %c0_i32_0 : i32, i32
  }
  func.func @transform_3(%arg0: i32) -> (i32, i32) {
    %c0_i32 = arith.constant 0 : i32
    %c0_i32_0 = arith.constant 0 : i32
    %c0_i32_1 = arith.constant 0 : i32
    return %c0_i32, %c0_i32_0 : i32, i32
  }
  func.func @transform_4(%arg0: i32) -> (i32, i32) {
    %c0_i32 = arith.constant 0 : i32
    %c0_i32_0 = arith.constant 0 : i32
    return %arg0, %c0_i32 : i32, i32
  }
  func.func @transform_5(%arg0: i32) -> (i32, i32) {
    %c0_i32 = arith.constant 0 : i32
    %c0_i32_0 = arith.constant 0 : i32
    return %arg0, %c0_i32 : i32, i32
  }
}

module attributes {stable_mosaic.version = 11 : i64} {
  func.func @_branch_convs_kernel(%arg0: i32, %arg1: memref<1x8x8x32xbf16, #tpu.memory_space<vmem>>, %arg2: memref<2x9x32x32xbf16, #tpu.memory_space<vmem>>, %arg3: memref<2x32xf32, #tpu.memory_space<vmem>>, %arg4: memref<2x32xf32, #tpu.memory_space<vmem>>, %arg5: memref<2x1x64x32xbf16, #tpu.memory_space<vmem>>, %arg6: memref<2x1x1x32xf32, #tpu.memory_space<vmem>>) attributes {dimension_semantics = [#tpu.dimension_semantics<parallel>], iteration_bounds = array<i64: 2>, scalar_prefetch = 0 : i64, scratch_operands = 0 : i64, tpu.core_type = #tpu.core_type<tc>, window_params = [{transform_indices = @transform_0, window_bounds = array<i64: 1, 8, 8, 32>}, {pipeline_mode = #tpu.pipeline_mode<synchronous>, transform_indices = @transform_1, window_bounds = array<i64: 2, 9, 32, 32>}, {pipeline_mode = #tpu.pipeline_mode<synchronous>, transform_indices = @transform_2, window_bounds = array<i64: 2, 32>}, {pipeline_mode = #tpu.pipeline_mode<synchronous>, transform_indices = @transform_3, window_bounds = array<i64: 2, 32>}, {transform_indices = @transform_4, window_bounds = array<i64: 2, 1, 64, 32>}, {transform_indices = @transform_5, window_bounds = array<i64: 2, 1, 1, 32>}]} {
    %c0 = arith.constant 0 : index
    %c0_0 = arith.constant 0 : index
    %c0_1 = arith.constant 0 : index
    %c0_2 = arith.constant 0 : index
    %0 = vector.load %arg1[%c0, %c0_0, %c0_1, %c0_2] : memref<1x8x8x32xbf16, #tpu.memory_space<vmem>>, vector<1x8x8x32xbf16>
    %1 = vector.shape_cast %0 : vector<1x8x8x32xbf16> to vector<8x8x32xbf16>
    %cst = arith.constant 0.000000e+00 : bf16
    %2 = vector.broadcast %cst : bf16 to vector<8x2x32xbf16>
    %cst_3 = arith.constant 0.000000e+00 : bf16
    %3 = vector.broadcast %cst_3 : bf16 to vector<2x12x32xbf16>
    %4 = tpu.concatenate %2, %1, %2 in 1 : vector<8x2x32xbf16>, vector<8x8x32xbf16>, vector<8x2x32xbf16> -> vector<8x12x32xbf16>
    %5 = tpu.concatenate %3, %4, %3 in 0 : vector<2x12x32xbf16>, vector<8x12x32xbf16>, vector<2x12x32xbf16> -> vector<12x12x32xbf16>
    %cst_4 = arith.constant 0.000000e+00 : f32
    %6 = vector.broadcast %cst_4 : f32 to vector<64x32xf32>
    %7 = vector.extract_strided_slice %5 {offsets = [1, 1, 0], sizes = [8, 8, 32], strides = [1, 1, 1]} : vector<12x12x32xbf16> to vector<8x8x32xbf16>
    %8 = vector.shape_cast %7 : vector<8x8x32xbf16> to vector<64x32xbf16>
    %c0_5 = arith.constant 0 : index
    %c0_6 = arith.constant 0 : index
    %c0_7 = arith.constant 0 : index
    %c0_8 = arith.constant 0 : index
    %9 = vector.load %arg2[%c0_5, %c0_6, %c0_7, %c0_8] : memref<2x9x32x32xbf16, #tpu.memory_space<vmem>>, vector<1x1x32x32xbf16>
    %10 = vector.shape_cast %9 : vector<1x1x32x32xbf16> to vector<32x32xbf16>
    %cst_9 = arith.constant dense<0.000000e+00> : vector<64x32xf32>
    %11 = tpu.matmul %8, %10, %cst_9 {dimension_numbers = #tpu.dot_dimension_numbers<[1], [0], [0], [1], [0, 0, 1, 1], [], []>} : vector<64x32xbf16>, vector<32x32xbf16>, vector<64x32xf32> -> vector<64x32xf32>
    %12 = arith.addf %6, %11 : vector<64x32xf32>
    %13 = vector.extract_strided_slice %5 {offsets = [1, 2, 0], sizes = [8, 8, 32], strides = [1, 1, 1]} : vector<12x12x32xbf16> to vector<8x8x32xbf16>
    %14 = vector.shape_cast %13 : vector<8x8x32xbf16> to vector<64x32xbf16>
    %c0_10 = arith.constant 0 : index
    %c1 = arith.constant 1 : index
    %c0_11 = arith.constant 0 : index
    %c0_12 = arith.constant 0 : index
    %15 = vector.load %arg2[%c0_10, %c1, %c0_11, %c0_12] : memref<2x9x32x32xbf16, #tpu.memory_space<vmem>>, vector<1x1x32x32xbf16>
    %16 = vector.shape_cast %15 : vector<1x1x32x32xbf16> to vector<32x32xbf16>
    %cst_13 = arith.constant dense<0.000000e+00> : vector<64x32xf32>
    %17 = tpu.matmul %14, %16, %cst_13 {dimension_numbers = #tpu.dot_dimension_numbers<[1], [0], [0], [1], [0, 0, 1, 1], [], []>} : vector<64x32xbf16>, vector<32x32xbf16>, vector<64x32xf32> -> vector<64x32xf32>
    %18 = arith.addf %12, %17 : vector<64x32xf32>
    %19 = vector.extract_strided_slice %5 {offsets = [1, 3, 0], sizes = [8, 8, 32], strides = [1, 1, 1]} : vector<12x12x32xbf16> to vector<8x8x32xbf16>
    %20 = vector.shape_cast %19 : vector<8x8x32xbf16> to vector<64x32xbf16>
    %c0_14 = arith.constant 0 : index
    %c2 = arith.constant 2 : index
    %c0_15 = arith.constant 0 : index
    %c0_16 = arith.constant 0 : index
    %21 = vector.load %arg2[%c0_14, %c2, %c0_15, %c0_16] : memref<2x9x32x32xbf16, #tpu.memory_space<vmem>>, vector<1x1x32x32xbf16>
    %22 = vector.shape_cast %21 : vector<1x1x32x32xbf16> to vector<32x32xbf16>
    %cst_17 = arith.constant dense<0.000000e+00> : vector<64x32xf32>
    %23 = tpu.matmul %20, %22, %cst_17 {dimension_numbers = #tpu.dot_dimension_numbers<[1], [0], [0], [1], [0, 0, 1, 1], [], []>} : vector<64x32xbf16>, vector<32x32xbf16>, vector<64x32xf32> -> vector<64x32xf32>
    %24 = arith.addf %18, %23 : vector<64x32xf32>
    %25 = vector.extract_strided_slice %5 {offsets = [2, 1, 0], sizes = [8, 8, 32], strides = [1, 1, 1]} : vector<12x12x32xbf16> to vector<8x8x32xbf16>
    %26 = vector.shape_cast %25 : vector<8x8x32xbf16> to vector<64x32xbf16>
    %c0_18 = arith.constant 0 : index
    %c3 = arith.constant 3 : index
    %c0_19 = arith.constant 0 : index
    %c0_20 = arith.constant 0 : index
    %27 = vector.load %arg2[%c0_18, %c3, %c0_19, %c0_20] : memref<2x9x32x32xbf16, #tpu.memory_space<vmem>>, vector<1x1x32x32xbf16>
    %28 = vector.shape_cast %27 : vector<1x1x32x32xbf16> to vector<32x32xbf16>
    %cst_21 = arith.constant dense<0.000000e+00> : vector<64x32xf32>
    %29 = tpu.matmul %26, %28, %cst_21 {dimension_numbers = #tpu.dot_dimension_numbers<[1], [0], [0], [1], [0, 0, 1, 1], [], []>} : vector<64x32xbf16>, vector<32x32xbf16>, vector<64x32xf32> -> vector<64x32xf32>
    %30 = arith.addf %24, %29 : vector<64x32xf32>
    %31 = vector.extract_strided_slice %5 {offsets = [2, 2, 0], sizes = [8, 8, 32], strides = [1, 1, 1]} : vector<12x12x32xbf16> to vector<8x8x32xbf16>
    %32 = vector.shape_cast %31 : vector<8x8x32xbf16> to vector<64x32xbf16>
    %c0_22 = arith.constant 0 : index
    %c4 = arith.constant 4 : index
    %c0_23 = arith.constant 0 : index
    %c0_24 = arith.constant 0 : index
    %33 = vector.load %arg2[%c0_22, %c4, %c0_23, %c0_24] : memref<2x9x32x32xbf16, #tpu.memory_space<vmem>>, vector<1x1x32x32xbf16>
    %34 = vector.shape_cast %33 : vector<1x1x32x32xbf16> to vector<32x32xbf16>
    %cst_25 = arith.constant dense<0.000000e+00> : vector<64x32xf32>
    %35 = tpu.matmul %32, %34, %cst_25 {dimension_numbers = #tpu.dot_dimension_numbers<[1], [0], [0], [1], [0, 0, 1, 1], [], []>} : vector<64x32xbf16>, vector<32x32xbf16>, vector<64x32xf32> -> vector<64x32xf32>
    %36 = arith.addf %30, %35 : vector<64x32xf32>
    %37 = vector.extract_strided_slice %5 {offsets = [2, 3, 0], sizes = [8, 8, 32], strides = [1, 1, 1]} : vector<12x12x32xbf16> to vector<8x8x32xbf16>
    %38 = vector.shape_cast %37 : vector<8x8x32xbf16> to vector<64x32xbf16>
    %c0_26 = arith.constant 0 : index
    %c5 = arith.constant 5 : index
    %c0_27 = arith.constant 0 : index
    %c0_28 = arith.constant 0 : index
    %39 = vector.load %arg2[%c0_26, %c5, %c0_27, %c0_28] : memref<2x9x32x32xbf16, #tpu.memory_space<vmem>>, vector<1x1x32x32xbf16>
    %40 = vector.shape_cast %39 : vector<1x1x32x32xbf16> to vector<32x32xbf16>
    %cst_29 = arith.constant dense<0.000000e+00> : vector<64x32xf32>
    %41 = tpu.matmul %38, %40, %cst_29 {dimension_numbers = #tpu.dot_dimension_numbers<[1], [0], [0], [1], [0, 0, 1, 1], [], []>} : vector<64x32xbf16>, vector<32x32xbf16>, vector<64x32xf32> -> vector<64x32xf32>
    %42 = arith.addf %36, %41 : vector<64x32xf32>
    %43 = vector.extract_strided_slice %5 {offsets = [3, 1, 0], sizes = [8, 8, 32], strides = [1, 1, 1]} : vector<12x12x32xbf16> to vector<8x8x32xbf16>
    %44 = vector.shape_cast %43 : vector<8x8x32xbf16> to vector<64x32xbf16>
    %c0_30 = arith.constant 0 : index
    %c6 = arith.constant 6 : index
    %c0_31 = arith.constant 0 : index
    %c0_32 = arith.constant 0 : index
    %45 = vector.load %arg2[%c0_30, %c6, %c0_31, %c0_32] : memref<2x9x32x32xbf16, #tpu.memory_space<vmem>>, vector<1x1x32x32xbf16>
    %46 = vector.shape_cast %45 : vector<1x1x32x32xbf16> to vector<32x32xbf16>
    %cst_33 = arith.constant dense<0.000000e+00> : vector<64x32xf32>
    %47 = tpu.matmul %44, %46, %cst_33 {dimension_numbers = #tpu.dot_dimension_numbers<[1], [0], [0], [1], [0, 0, 1, 1], [], []>} : vector<64x32xbf16>, vector<32x32xbf16>, vector<64x32xf32> -> vector<64x32xf32>
    %48 = arith.addf %42, %47 : vector<64x32xf32>
    %49 = vector.extract_strided_slice %5 {offsets = [3, 2, 0], sizes = [8, 8, 32], strides = [1, 1, 1]} : vector<12x12x32xbf16> to vector<8x8x32xbf16>
    %50 = vector.shape_cast %49 : vector<8x8x32xbf16> to vector<64x32xbf16>
    %c0_34 = arith.constant 0 : index
    %c7 = arith.constant 7 : index
    %c0_35 = arith.constant 0 : index
    %c0_36 = arith.constant 0 : index
    %51 = vector.load %arg2[%c0_34, %c7, %c0_35, %c0_36] : memref<2x9x32x32xbf16, #tpu.memory_space<vmem>>, vector<1x1x32x32xbf16>
    %52 = vector.shape_cast %51 : vector<1x1x32x32xbf16> to vector<32x32xbf16>
    %cst_37 = arith.constant dense<0.000000e+00> : vector<64x32xf32>
    %53 = tpu.matmul %50, %52, %cst_37 {dimension_numbers = #tpu.dot_dimension_numbers<[1], [0], [0], [1], [0, 0, 1, 1], [], []>} : vector<64x32xbf16>, vector<32x32xbf16>, vector<64x32xf32> -> vector<64x32xf32>
    %54 = arith.addf %48, %53 : vector<64x32xf32>
    %55 = vector.extract_strided_slice %5 {offsets = [3, 3, 0], sizes = [8, 8, 32], strides = [1, 1, 1]} : vector<12x12x32xbf16> to vector<8x8x32xbf16>
    %56 = vector.shape_cast %55 : vector<8x8x32xbf16> to vector<64x32xbf16>
    %c0_38 = arith.constant 0 : index
    %c8 = arith.constant 8 : index
    %c0_39 = arith.constant 0 : index
    %c0_40 = arith.constant 0 : index
    %57 = vector.load %arg2[%c0_38, %c8, %c0_39, %c0_40] : memref<2x9x32x32xbf16, #tpu.memory_space<vmem>>, vector<1x1x32x32xbf16>
    %58 = vector.shape_cast %57 : vector<1x1x32x32xbf16> to vector<32x32xbf16>
    %cst_41 = arith.constant dense<0.000000e+00> : vector<64x32xf32>
    %59 = tpu.matmul %56, %58, %cst_41 {dimension_numbers = #tpu.dot_dimension_numbers<[1], [0], [0], [1], [0, 0, 1, 1], [], []>} : vector<64x32xbf16>, vector<32x32xbf16>, vector<64x32xf32> -> vector<64x32xf32>
    %60 = arith.addf %54, %59 : vector<64x32xf32>
    %c0_42 = arith.constant 0 : index
    %c0_43 = arith.constant 0 : index
    %61 = vector.load %arg3[%c0_42, %c0_43] : memref<2x32xf32, #tpu.memory_space<vmem>>, vector<1x32xf32>
    %62 = vector.broadcast %61 : vector<1x32xf32> to vector<64x32xf32>
    %63 = arith.mulf %60, %62 : vector<64x32xf32>
    %c0_44 = arith.constant 0 : index
    %c0_45 = arith.constant 0 : index
    %64 = vector.load %arg4[%c0_44, %c0_45] : memref<2x32xf32, #tpu.memory_space<vmem>>, vector<1x32xf32>
    %65 = vector.broadcast %64 : vector<1x32xf32> to vector<64x32xf32>
    %66 = arith.addf %63, %65 : vector<64x32xf32>
    %cst_46 = arith.constant 0.000000e+00 : f32
    %67 = vector.broadcast %cst_46 : f32 to vector<64x32xf32>
    %68 = arith.maximumf %66, %67 : vector<64x32xf32>
    %69 = arith.truncf %68 : vector<64x32xf32> to vector<64x32xbf16>
    %c0_47 = arith.constant 0 : index
    %c0_48 = arith.constant 0 : index
    %c0_49 = arith.constant 0 : index
    %c0_50 = arith.constant 0 : index
    %70 = vector.load %arg5[%c0_47, %c0_48, %c0_49, %c0_50] : memref<2x1x64x32xbf16, #tpu.memory_space<vmem>>, vector<1x1x64x32xbf16>
    %71 = vector.shape_cast %70 : vector<1x1x64x32xbf16> to vector<64x32xbf16>
    %72 = vector.shape_cast %69 : vector<64x32xbf16> to vector<1x1x64x32xbf16>
    tpu.vector_store %arg5[%c0_47, %c0_48, %c0_49, %c0_50], %72 {strides = array<i32>} : memref<2x1x64x32xbf16, #tpu.memory_space<vmem>>, vector<1x1x64x32xbf16>,
    %cst_51 = arith.constant dense<0.000000e+00> : vector<32xf32>
    %73 = vector.multi_reduction <add>, %68, %cst_51 [0] : vector<64x32xf32> to vector<32xf32>
    %74 = vector.shape_cast %73 : vector<32xf32> to vector<1x32xf32>
    %c0_52 = arith.constant 0 : index
    %c0_53 = arith.constant 0 : index
    %c0_54 = arith.constant 0 : index
    %c0_55 = arith.constant 0 : index
    %75 = vector.load %arg6[%c0_52, %c0_53, %c0_54, %c0_55] : memref<2x1x1x32xf32, #tpu.memory_space<vmem>>, vector<1x1x1x32xf32>
    %76 = vector.shape_cast %75 : vector<1x1x1x32xf32> to vector<1x32xf32>
    %77 = vector.shape_cast %74 : vector<1x32xf32> to vector<1x1x1x32xf32>
    tpu.vector_store %arg6[%c0_52, %c0_53, %c0_54, %c0_55], %77 {strides = array<i32>} : memref<2x1x1x32xf32, #tpu.memory_space<vmem>>, vector<1x1x1x32xf32>,
    %cst_56 = arith.constant 0.000000e+00 : f32
    %78 = vector.broadcast %cst_56 : f32 to vector<64x32xf32>
    %79 = vector.extract_strided_slice %5 {offsets = [0, 0, 0], sizes = [8, 8, 32], strides = [1, 1, 1]} : vector<12x12x32xbf16> to vector<8x8x32xbf16>
    %80 = vector.shape_cast %79 : vector<8x8x32xbf16> to vector<64x32xbf16>
    %c1_57 = arith.constant 1 : index
    %c0_58 = arith.constant 0 : index
    %c0_59 = arith.constant 0 : index
    %c0_60 = arith.constant 0 : index
    %81 = vector.load %arg2[%c1_57, %c0_58, %c0_59, %c0_60] : memref<2x9x32x32xbf16, #tpu.memory_space<vmem>>, vector<1x1x32x32xbf16>
    %82 = vector.shape_cast %81 : vector<1x1x32x32xbf16> to vector<32x32xbf16>
    %cst_61 = arith.constant dense<0.000000e+00> : vector<64x32xf32>
    %83 = tpu.matmul %80, %82, %cst_61 {dimension_numbers = #tpu.dot_dimension_numbers<[1], [0], [0], [1], [0, 0, 1, 1], [], []>} : vector<64x32xbf16>, vector<32x32xbf16>, vector<64x32xf32> -> vector<64x32xf32>
    %84 = arith.addf %78, %83 : vector<64x32xf32>
    %85 = vector.extract_strided_slice %5 {offsets = [0, 2, 0], sizes = [8, 8, 32], strides = [1, 1, 1]} : vector<12x12x32xbf16> to vector<8x8x32xbf16>
    %86 = vector.shape_cast %85 : vector<8x8x32xbf16> to vector<64x32xbf16>
    %c1_62 = arith.constant 1 : index
    %c1_63 = arith.constant 1 : index
    %c0_64 = arith.constant 0 : index
    %c0_65 = arith.constant 0 : index
    %87 = vector.load %arg2[%c1_62, %c1_63, %c0_64, %c0_65] : memref<2x9x32x32xbf16, #tpu.memory_space<vmem>>, vector<1x1x32x32xbf16>
    %88 = vector.shape_cast %87 : vector<1x1x32x32xbf16> to vector<32x32xbf16>
    %cst_66 = arith.constant dense<0.000000e+00> : vector<64x32xf32>
    %89 = tpu.matmul %86, %88, %cst_66 {dimension_numbers = #tpu.dot_dimension_numbers<[1], [0], [0], [1], [0, 0, 1, 1], [], []>} : vector<64x32xbf16>, vector<32x32xbf16>, vector<64x32xf32> -> vector<64x32xf32>
    %90 = arith.addf %84, %89 : vector<64x32xf32>
    %91 = vector.extract_strided_slice %5 {offsets = [0, 4, 0], sizes = [8, 8, 32], strides = [1, 1, 1]} : vector<12x12x32xbf16> to vector<8x8x32xbf16>
    %92 = vector.shape_cast %91 : vector<8x8x32xbf16> to vector<64x32xbf16>
    %c1_67 = arith.constant 1 : index
    %c2_68 = arith.constant 2 : index
    %c0_69 = arith.constant 0 : index
    %c0_70 = arith.constant 0 : index
    %93 = vector.load %arg2[%c1_67, %c2_68, %c0_69, %c0_70] : memref<2x9x32x32xbf16, #tpu.memory_space<vmem>>, vector<1x1x32x32xbf16>
    %94 = vector.shape_cast %93 : vector<1x1x32x32xbf16> to vector<32x32xbf16>
    %cst_71 = arith.constant dense<0.000000e+00> : vector<64x32xf32>
    %95 = tpu.matmul %92, %94, %cst_71 {dimension_numbers = #tpu.dot_dimension_numbers<[1], [0], [0], [1], [0, 0, 1, 1], [], []>} : vector<64x32xbf16>, vector<32x32xbf16>, vector<64x32xf32> -> vector<64x32xf32>
    %96 = arith.addf %90, %95 : vector<64x32xf32>
    %97 = vector.extract_strided_slice %5 {offsets = [2, 0, 0], sizes = [8, 8, 32], strides = [1, 1, 1]} : vector<12x12x32xbf16> to vector<8x8x32xbf16>
    %98 = vector.shape_cast %97 : vector<8x8x32xbf16> to vector<64x32xbf16>
    %c1_72 = arith.constant 1 : index
    %c3_73 = arith.constant 3 : index
    %c0_74 = arith.constant 0 : index
    %c0_75 = arith.constant 0 : index
    %99 = vector.load %arg2[%c1_72, %c3_73, %c0_74, %c0_75] : memref<2x9x32x32xbf16, #tpu.memory_space<vmem>>, vector<1x1x32x32xbf16>
    %100 = vector.shape_cast %99 : vector<1x1x32x32xbf16> to vector<32x32xbf16>
    %cst_76 = arith.constant dense<0.000000e+00> : vector<64x32xf32>
    %101 = tpu.matmul %98, %100, %cst_76 {dimension_numbers = #tpu.dot_dimension_numbers<[1], [0], [0], [1], [0, 0, 1, 1], [], []>} : vector<64x32xbf16>, vector<32x32xbf16>, vector<64x32xf32> -> vector<64x32xf32>
    %102 = arith.addf %96, %101 : vector<64x32xf32>
    %103 = vector.extract_strided_slice %5 {offsets = [2, 2, 0], sizes = [8, 8, 32], strides = [1, 1, 1]} : vector<12x12x32xbf16> to vector<8x8x32xbf16>
    %104 = vector.shape_cast %103 : vector<8x8x32xbf16> to vector<64x32xbf16>
    %c1_77 = arith.constant 1 : index
    %c4_78 = arith.constant 4 : index
    %c0_79 = arith.constant 0 : index
    %c0_80 = arith.constant 0 : index
    %105 = vector.load %arg2[%c1_77, %c4_78, %c0_79, %c0_80] : memref<2x9x32x32xbf16, #tpu.memory_space<vmem>>, vector<1x1x32x32xbf16>
    %106 = vector.shape_cast %105 : vector<1x1x32x32xbf16> to vector<32x32xbf16>
    %cst_81 = arith.constant dense<0.000000e+00> : vector<64x32xf32>
    %107 = tpu.matmul %104, %106, %cst_81 {dimension_numbers = #tpu.dot_dimension_numbers<[1], [0], [0], [1], [0, 0, 1, 1], [], []>} : vector<64x32xbf16>, vector<32x32xbf16>, vector<64x32xf32> -> vector<64x32xf32>
    %108 = arith.addf %102, %107 : vector<64x32xf32>
    %109 = vector.extract_strided_slice %5 {offsets = [2, 4, 0], sizes = [8, 8, 32], strides = [1, 1, 1]} : vector<12x12x32xbf16> to vector<8x8x32xbf16>
    %110 = vector.shape_cast %109 : vector<8x8x32xbf16> to vector<64x32xbf16>
    %c1_82 = arith.constant 1 : index
    %c5_83 = arith.constant 5 : index
    %c0_84 = arith.constant 0 : index
    %c0_85 = arith.constant 0 : index
    %111 = vector.load %arg2[%c1_82, %c5_83, %c0_84, %c0_85] : memref<2x9x32x32xbf16, #tpu.memory_space<vmem>>, vector<1x1x32x32xbf16>
    %112 = vector.shape_cast %111 : vector<1x1x32x32xbf16> to vector<32x32xbf16>
    %cst_86 = arith.constant dense<0.000000e+00> : vector<64x32xf32>
    %113 = tpu.matmul %110, %112, %cst_86 {dimension_numbers = #tpu.dot_dimension_numbers<[1], [0], [0], [1], [0, 0, 1, 1], [], []>} : vector<64x32xbf16>, vector<32x32xbf16>, vector<64x32xf32> -> vector<64x32xf32>
    %114 = arith.addf %108, %113 : vector<64x32xf32>
    %115 = vector.extract_strided_slice %5 {offsets = [4, 0, 0], sizes = [8, 8, 32], strides = [1, 1, 1]} : vector<12x12x32xbf16> to vector<8x8x32xbf16>
    %116 = vector.shape_cast %115 : vector<8x8x32xbf16> to vector<64x32xbf16>
    %c1_87 = arith.constant 1 : index
    %c6_88 = arith.constant 6 : index
    %c0_89 = arith.constant 0 : index
    %c0_90 = arith.constant 0 : index
    %117 = vector.load %arg2[%c1_87, %c6_88, %c0_89, %c0_90] : memref<2x9x32x32xbf16, #tpu.memory_space<vmem>>, vector<1x1x32x32xbf16>
    %118 = vector.shape_cast %117 : vector<1x1x32x32xbf16> to vector<32x32xbf16>
    %cst_91 = arith.constant dense<0.000000e+00> : vector<64x32xf32>
    %119 = tpu.matmul %116, %118, %cst_91 {dimension_numbers = #tpu.dot_dimension_numbers<[1], [0], [0], [1], [0, 0, 1, 1], [], []>} : vector<64x32xbf16>, vector<32x32xbf16>, vector<64x32xf32> -> vector<64x32xf32>
    %120 = arith.addf %114, %119 : vector<64x32xf32>
    %121 = vector.extract_strided_slice %5 {offsets = [4, 2, 0], sizes = [8, 8, 32], strides = [1, 1, 1]} : vector<12x12x32xbf16> to vector<8x8x32xbf16>
    %122 = vector.shape_cast %121 : vector<8x8x32xbf16> to vector<64x32xbf16>
    %c1_92 = arith.constant 1 : index
    %c7_93 = arith.constant 7 : index
    %c0_94 = arith.constant 0 : index
    %c0_95 = arith.constant 0 : index
    %123 = vector.load %arg2[%c1_92, %c7_93, %c0_94, %c0_95] : memref<2x9x32x32xbf16, #tpu.memory_space<vmem>>, vector<1x1x32x32xbf16>
    %124 = vector.shape_cast %123 : vector<1x1x32x32xbf16> to vector<32x32xbf16>
    %cst_96 = arith.constant dense<0.000000e+00> : vector<64x32xf32>
    %125 = tpu.matmul %122, %124, %cst_96 {dimension_numbers = #tpu.dot_dimension_numbers<[1], [0], [0], [1], [0, 0, 1, 1], [], []>} : vector<64x32xbf16>, vector<32x32xbf16>, vector<64x32xf32> -> vector<64x32xf32>
    %126 = arith.addf %120, %125 : vector<64x32xf32>
    %127 = vector.extract_strided_slice %5 {offsets = [4, 4, 0], sizes = [8, 8, 32], strides = [1, 1, 1]} : vector<12x12x32xbf16> to vector<8x8x32xbf16>
    %128 = vector.shape_cast %127 : vector<8x8x32xbf16> to vector<64x32xbf16>
    %c1_97 = arith.constant 1 : index
    %c8_98 = arith.constant 8 : index
    %c0_99 = arith.constant 0 : index
    %c0_100 = arith.constant 0 : index
    %129 = vector.load %arg2[%c1_97, %c8_98, %c0_99, %c0_100] : memref<2x9x32x32xbf16, #tpu.memory_space<vmem>>, vector<1x1x32x32xbf16>
    %130 = vector.shape_cast %129 : vector<1x1x32x32xbf16> to vector<32x32xbf16>
    %cst_101 = arith.constant dense<0.000000e+00> : vector<64x32xf32>
    %131 = tpu.matmul %128, %130, %cst_101 {dimension_numbers = #tpu.dot_dimension_numbers<[1], [0], [0], [1], [0, 0, 1, 1], [], []>} : vector<64x32xbf16>, vector<32x32xbf16>, vector<64x32xf32> -> vector<64x32xf32>
    %132 = arith.addf %126, %131 : vector<64x32xf32>
    %c1_102 = arith.constant 1 : index
    %c0_103 = arith.constant 0 : index
    %133 = vector.load %arg3[%c1_102, %c0_103] : memref<2x32xf32, #tpu.memory_space<vmem>>, vector<1x32xf32>
    %134 = vector.broadcast %133 : vector<1x32xf32> to vector<64x32xf32>
    %135 = arith.mulf %132, %134 : vector<64x32xf32>
    %c1_104 = arith.constant 1 : index
    %c0_105 = arith.constant 0 : index
    %136 = vector.load %arg4[%c1_104, %c0_105] : memref<2x32xf32, #tpu.memory_space<vmem>>, vector<1x32xf32>
    %137 = vector.broadcast %136 : vector<1x32xf32> to vector<64x32xf32>
    %138 = arith.addf %135, %137 : vector<64x32xf32>
    %cst_106 = arith.constant 0.000000e+00 : f32
    %139 = vector.broadcast %cst_106 : f32 to vector<64x32xf32>
    %140 = arith.maximumf %138, %139 : vector<64x32xf32>
    %141 = arith.truncf %140 : vector<64x32xf32> to vector<64x32xbf16>
    %c1_107 = arith.constant 1 : index
    %c0_108 = arith.constant 0 : index
    %c0_109 = arith.constant 0 : index
    %c0_110 = arith.constant 0 : index
    %142 = vector.load %arg5[%c1_107, %c0_108, %c0_109, %c0_110] : memref<2x1x64x32xbf16, #tpu.memory_space<vmem>>, vector<1x1x64x32xbf16>
    %143 = vector.shape_cast %142 : vector<1x1x64x32xbf16> to vector<64x32xbf16>
    %144 = vector.shape_cast %141 : vector<64x32xbf16> to vector<1x1x64x32xbf16>
    tpu.vector_store %arg5[%c1_107, %c0_108, %c0_109, %c0_110], %144 {strides = array<i32>} : memref<2x1x64x32xbf16, #tpu.memory_space<vmem>>, vector<1x1x64x32xbf16>,
    %cst_111 = arith.constant dense<0.000000e+00> : vector<32xf32>
    %145 = vector.multi_reduction <add>, %140, %cst_111 [0] : vector<64x32xf32> to vector<32xf32>
    %146 = vector.shape_cast %145 : vector<32xf32> to vector<1x32xf32>
    %c1_112 = arith.constant 1 : index
    %c0_113 = arith.constant 0 : index
    %c0_114 = arith.constant 0 : index
    %c0_115 = arith.constant 0 : index
    %147 = vector.load %arg6[%c1_112, %c0_113, %c0_114, %c0_115] : memref<2x1x1x32xf32, #tpu.memory_space<vmem>>, vector<1x1x1x32xf32>
    %148 = vector.shape_cast %147 : vector<1x1x1x32xf32> to vector<1x32xf32>
    %149 = vector.shape_cast %146 : vector<1x32xf32> to vector<1x1x1x32xf32>
    tpu.vector_store %arg6[%c1_112, %c0_113, %c0_114, %c0_115], %149 {strides = array<i32>} : memref<2x1x1x32xf32, #tpu.memory_space<vmem>>, vector<1x1x1x32xf32>,
    return
  }
  func.func @transform_0(%arg0: i32) -> (i32, i32, i32, i32) {
    %c0_i32 = arith.constant 0 : i32
    %c0_i32_0 = arith.constant 0 : i32
    %c0_i32_1 = arith.constant 0 : i32
    %c0_i32_2 = arith.constant 0 : i32
    return %arg0, %c0_i32, %c0_i32_0, %c0_i32_1 : i32, i32, i32, i32
  }
  func.func @transform_1(%arg0: i32) -> (i32, i32, i32, i32) {
    %c0_i32 = arith.constant 0 : i32
    %c0_i32_0 = arith.constant 0 : i32
    %c0_i32_1 = arith.constant 0 : i32
    %c0_i32_2 = arith.constant 0 : i32
    %c0_i32_3 = arith.constant 0 : i32
    return %c0_i32, %c0_i32_0, %c0_i32_1, %c0_i32_2 : i32, i32, i32, i32
  }
  func.func @transform_2(%arg0: i32) -> (i32, i32) {
    %c0_i32 = arith.constant 0 : i32
    %c0_i32_0 = arith.constant 0 : i32
    %c0_i32_1 = arith.constant 0 : i32
    return %c0_i32, %c0_i32_0 : i32, i32
  }
  func.func @transform_3(%arg0: i32) -> (i32, i32) {
    %c0_i32 = arith.constant 0 : i32
    %c0_i32_0 = arith.constant 0 : i32
    %c0_i32_1 = arith.constant 0 : i32
    return %c0_i32, %c0_i32_0 : i32, i32
  }
  func.func @transform_4(%arg0: i32) -> (i32, i32, i32, i32) {
    %c0_i32 = arith.constant 0 : i32
    %c0_i32_0 = arith.constant 0 : i32
    %c0_i32_1 = arith.constant 0 : i32
    %c0_i32_2 = arith.constant 0 : i32
    return %c0_i32, %arg0, %c0_i32_0, %c0_i32_1 : i32, i32, i32, i32
  }
  func.func @transform_5(%arg0: i32) -> (i32, i32, i32, i32) {
    %c0_i32 = arith.constant 0 : i32
    %c0_i32_0 = arith.constant 0 : i32
    %c0_i32_1 = arith.constant 0 : i32
    %c0_i32_2 = arith.constant 0 : i32
    return %c0_i32, %arg0, %c0_i32_0, %c0_i32_1 : i32, i32, i32, i32
  }
}

module attributes {stable_mosaic.version = 11 : i64} {
  func.func @_sk_fuse_kernel(%arg0: i32, %arg1: i32, %arg2: memref<2x1x64x32xbf16, #tpu.memory_space<vmem>>, %arg3: memref<1x2x32xf32, #tpu.memory_space<vmem>>, %arg4: memref<1x64x32xbf16, #tpu.memory_space<vmem>>) attributes {dimension_semantics = [#tpu.dimension_semantics<parallel>, #tpu.dimension_semantics<parallel>], iteration_bounds = array<i64: 2, 1>, scalar_prefetch = 0 : i64, scratch_operands = 0 : i64, tpu.core_type = #tpu.core_type<tc>, window_params = [{transform_indices = @transform_0, window_bounds = array<i64: 2, 1, 64, 32>}, {transform_indices = @transform_1, window_bounds = array<i64: 1, 2, 32>}, {transform_indices = @transform_2, window_bounds = array<i64: 1, 64, 32>}]} {
    %c0 = arith.constant 0 : index
    %c0_0 = arith.constant 0 : index
    %c0_1 = arith.constant 0 : index
    %0 = vector.load %arg3[%c0, %c0_0, %c0_1] : memref<1x2x32xf32, #tpu.memory_space<vmem>>, vector<1x2x32xf32>
    %1 = vector.shape_cast %0 : vector<1x2x32xf32> to vector<2x32xf32>
    %cst = arith.constant dense<0xFF800000> : vector<32xf32>
    %2 = vector.multi_reduction <maximumf>, %1, %cst [0] : vector<2x32xf32> to vector<32xf32>
    %3 = vector.shape_cast %2 : vector<32xf32> to vector<1x32xf32>
    %4 = vector.broadcast %3 : vector<1x32xf32> to vector<2x32xf32>
    %5 = arith.subf %1, %4 : vector<2x32xf32>
    %6 = math.exp %5 : vector<2x32xf32>
    %cst_2 = arith.constant dense<0.000000e+00> : vector<32xf32>
    %7 = vector.multi_reduction <add>, %6, %cst_2 [0] : vector<2x32xf32> to vector<32xf32>
    %8 = vector.shape_cast %7 : vector<32xf32> to vector<1x32xf32>
    %9 = vector.broadcast %8 : vector<1x32xf32> to vector<2x32xf32>
    %10 = arith.divf %6, %9 : vector<2x32xf32>
    %11 = vector.extract_strided_slice %10 {offsets = [0, 0], sizes = [1, 32], strides = [1, 1]} : vector<2x32xf32> to vector<1x32xf32>
    %c0_3 = arith.constant 0 : index
    %c0_4 = arith.constant 0 : index
    %c0_5 = arith.constant 0 : index
    %c0_6 = arith.constant 0 : index
    %12 = vector.load %arg2[%c0_3, %c0_4, %c0_5, %c0_6] : memref<2x1x64x32xbf16, #tpu.memory_space<vmem>>, vector<1x1x64x32xbf16>
    %13 = vector.shape_cast %12 : vector<1x1x64x32xbf16> to vector<64x32xbf16>
    %14 = arith.extf %13 : vector<64x32xbf16> to vector<64x32xf32>
    %15 = vector.broadcast %11 : vector<1x32xf32> to vector<64x32xf32>
    %16 = arith.mulf %15, %14 : vector<64x32xf32>
    %17 = vector.extract_strided_slice %10 {offsets = [1, 0], sizes = [1, 32], strides = [1, 1]} : vector<2x32xf32> to vector<1x32xf32>
    %c1 = arith.constant 1 : index
    %c0_7 = arith.constant 0 : index
    %c0_8 = arith.constant 0 : index
    %c0_9 = arith.constant 0 : index
    %18 = vector.load %arg2[%c1, %c0_7, %c0_8, %c0_9] : memref<2x1x64x32xbf16, #tpu.memory_space<vmem>>, vector<1x1x64x32xbf16>
    %19 = vector.shape_cast %18 : vector<1x1x64x32xbf16> to vector<64x32xbf16>
    %20 = arith.extf %19 : vector<64x32xbf16> to vector<64x32xf32>
    %21 = vector.broadcast %17 : vector<1x32xf32> to vector<64x32xf32>
    %22 = arith.mulf %21, %20 : vector<64x32xf32>
    %23 = arith.addf %16, %22 : vector<64x32xf32>
    %24 = arith.truncf %23 : vector<64x32xf32> to vector<64x32xbf16>
    %c0_10 = arith.constant 0 : index
    %c0_11 = arith.constant 0 : index
    %c0_12 = arith.constant 0 : index
    %25 = vector.load %arg4[%c0_10, %c0_11, %c0_12] : memref<1x64x32xbf16, #tpu.memory_space<vmem>>, vector<1x64x32xbf16>
    %26 = vector.shape_cast %25 : vector<1x64x32xbf16> to vector<64x32xbf16>
    %27 = vector.shape_cast %24 : vector<64x32xbf16> to vector<1x64x32xbf16>
    tpu.vector_store %arg4[%c0_10, %c0_11, %c0_12], %27 {strides = array<i32>} : memref<1x64x32xbf16, #tpu.memory_space<vmem>>, vector<1x64x32xbf16>,
    return
  }
  func.func @transform_0(%arg0: i32, %arg1: i32) -> (i32, i32, i32, i32) {
    %c0_i32 = arith.constant 0 : i32
    %c0_i32_0 = arith.constant 0 : i32
    %c0_i32_1 = arith.constant 0 : i32
    return %c0_i32, %arg0, %arg1, %c0_i32_0 : i32, i32, i32, i32
  }
  func.func @transform_1(%arg0: i32, %arg1: i32) -> (i32, i32, i32) {
    %c0_i32 = arith.constant 0 : i32
    %c0_i32_0 = arith.constant 0 : i32
    %c0_i32_1 = arith.constant 0 : i32
    return %arg0, %c0_i32, %c0_i32_0 : i32, i32, i32
  }
  func.func @transform_2(%arg0: i32, %arg1: i32) -> (i32, i32, i32) {
    %c0_i32 = arith.constant 0 : i32
    %c0_i32_0 = arith.constant 0 : i32
    return %arg0, %arg1, %c0_i32 : i32, i32, i32
  }
}

module attributes {stable_mosaic.version = 11 : i64} {
  func.func @_conv3_add_relu_kernel(%arg0: i32, %arg1: memref<128x32xbf16, #tpu.memory_space<vmem>>, %arg2: memref<32x32xbf16, #tpu.memory_space<vmem>>, %arg3: memref<1x32xf32, #tpu.memory_space<vmem>>, %arg4: memref<1x32xf32, #tpu.memory_space<vmem>>, %arg5: memref<128x32xbf16, #tpu.memory_space<vmem>>, %arg6: memref<128x32xbf16, #tpu.memory_space<vmem>>) attributes {dimension_semantics = [#tpu.dimension_semantics<parallel>], iteration_bounds = array<i64: 1>, scalar_prefetch = 0 : i64, scratch_operands = 0 : i64, tpu.core_type = #tpu.core_type<tc>, window_params = [{transform_indices = @transform_0, window_bounds = array<i64: 128, 32>}, {pipeline_mode = #tpu.pipeline_mode<synchronous>, transform_indices = @transform_1, window_bounds = array<i64: 32, 32>}, {pipeline_mode = #tpu.pipeline_mode<synchronous>, transform_indices = @transform_2, window_bounds = array<i64: 1, 32>}, {pipeline_mode = #tpu.pipeline_mode<synchronous>, transform_indices = @transform_3, window_bounds = array<i64: 1, 32>}, {transform_indices = @transform_4, window_bounds = array<i64: 128, 32>}, {transform_indices = @transform_5, window_bounds = array<i64: 128, 32>}]} {
    %c0 = arith.constant 0 : index
    %c0_0 = arith.constant 0 : index
    %0 = vector.load %arg1[%c0, %c0_0] : memref<128x32xbf16, #tpu.memory_space<vmem>>, vector<128x32xbf16>
    %c0_1 = arith.constant 0 : index
    %c0_2 = arith.constant 0 : index
    %1 = vector.load %arg2[%c0_1, %c0_2] : memref<32x32xbf16, #tpu.memory_space<vmem>>, vector<32x32xbf16>
    %cst = arith.constant dense<0.000000e+00> : vector<128x32xf32>
    %2 = tpu.matmul %0, %1, %cst {dimension_numbers = #tpu.dot_dimension_numbers<[1], [0], [0], [1], [0, 0, 1, 1], [], []>} : vector<128x32xbf16>, vector<32x32xbf16>, vector<128x32xf32> -> vector<128x32xf32>
    %c0_3 = arith.constant 0 : index
    %c0_4 = arith.constant 0 : index
    %3 = vector.load %arg3[%c0_3, %c0_4] : memref<1x32xf32, #tpu.memory_space<vmem>>, vector<1x32xf32>
    %4 = vector.broadcast %3 : vector<1x32xf32> to vector<128x32xf32>
    %5 = arith.mulf %2, %4 : vector<128x32xf32>
    %c0_5 = arith.constant 0 : index
    %c0_6 = arith.constant 0 : index
    %6 = vector.load %arg4[%c0_5, %c0_6] : memref<1x32xf32, #tpu.memory_space<vmem>>, vector<1x32xf32>
    %7 = vector.broadcast %6 : vector<1x32xf32> to vector<128x32xf32>
    %8 = arith.addf %5, %7 : vector<128x32xf32>
    %c0_7 = arith.constant 0 : index
    %c0_8 = arith.constant 0 : index
    %9 = vector.load %arg5[%c0_7, %c0_8] : memref<128x32xbf16, #tpu.memory_space<vmem>>, vector<128x32xbf16>
    %10 = arith.extf %9 : vector<128x32xbf16> to vector<128x32xf32>
    %11 = arith.addf %8, %10 : vector<128x32xf32>
    %cst_9 = arith.constant 0.000000e+00 : f32
    %12 = vector.broadcast %cst_9 : f32 to vector<128x32xf32>
    %13 = arith.maximumf %11, %12 : vector<128x32xf32>
    %14 = arith.truncf %13 : vector<128x32xf32> to vector<128x32xbf16>
    %c0_10 = arith.constant 0 : index
    %c0_11 = arith.constant 0 : index
    %15 = vector.load %arg6[%c0_10, %c0_11] : memref<128x32xbf16, #tpu.memory_space<vmem>>, vector<128x32xbf16>
    tpu.vector_store %arg6[%c0_10, %c0_11], %14 {strides = array<i32>} : memref<128x32xbf16, #tpu.memory_space<vmem>>, vector<128x32xbf16>,
    return
  }
  func.func @transform_0(%arg0: i32) -> (i32, i32) {
    %c0_i32 = arith.constant 0 : i32
    %c0_i32_0 = arith.constant 0 : i32
    return %arg0, %c0_i32 : i32, i32
  }
  func.func @transform_1(%arg0: i32) -> (i32, i32) {
    %c0_i32 = arith.constant 0 : i32
    %c0_i32_0 = arith.constant 0 : i32
    %c0_i32_1 = arith.constant 0 : i32
    return %c0_i32, %c0_i32_0 : i32, i32
  }
  func.func @transform_2(%arg0: i32) -> (i32, i32) {
    %c0_i32 = arith.constant 0 : i32
    %c0_i32_0 = arith.constant 0 : i32
    %c0_i32_1 = arith.constant 0 : i32
    return %c0_i32, %c0_i32_0 : i32, i32
  }
  func.func @transform_3(%arg0: i32) -> (i32, i32) {
    %c0_i32 = arith.constant 0 : i32
    %c0_i32_0 = arith.constant 0 : i32
    %c0_i32_1 = arith.constant 0 : i32
    return %c0_i32, %c0_i32_0 : i32, i32
  }
  func.func @transform_4(%arg0: i32) -> (i32, i32) {
    %c0_i32 = arith.constant 0 : i32
    %c0_i32_0 = arith.constant 0 : i32
    return %arg0, %c0_i32 : i32, i32
  }
  func.func @transform_5(%arg0: i32) -> (i32, i32) {
    %c0_i32 = arith.constant 0 : i32
    %c0_i32_0 = arith.constant 0 : i32
    return %arg0, %c0_i32 : i32, i32
  }
}

</mosaic_0001>

<llo_original>
// kernel: sk_unit_forward.4
$region0: #{sk_unit_forward.4}
  #allocation0 [shape = 'u32[]', space=smem, size = 0x4, offset = 0x4, fixed_abs, tag = 'smem constant byte address 0x4 - core index']
  #allocation1 [shape = 'u32[144,128]{1,0:T(1,128)}', space=vmem, size = 0x12000, scoped, tag = 'internal scratch']
  %s0 = inlined_call_operand.vmem [shape: bf16[128,16], index: 0, kind: input, shape index: {}]
  %s1 = inlined_call_operand.vmem [shape: bf16[16,64], index: 1, kind: input, shape index: {}]
  %s2 = inlined_call_operand.vmem [shape: f32[1,64], index: 2, kind: input, shape index: {}]
  %s3 = inlined_call_operand.vmem [shape: f32[1,64], index: 3, kind: input, shape index: {}]
  %s4 = inlined_call_operand.vmem [shape: bf16[128,32], index: 4, kind: output, shape index: {0}]
  %s5 = inlined_call_operand.vmem [shape: bf16[128,32], index: 5, kind: output, shape index: {1}]
  %6 = xla_tuple %s4, %s5
  %s7 = sld [smem:[#allocation0]]
  $region34: #{sk_unit_forward.4} parent=0
    _
  %s9 = ssub.s32 1, %s7
  %s10 = scalar_select 0, %s9, %s7
  // Predicated region
  $region2: #{sk_unit_forward.4} parent=0 // pred_check
    _
  $region3: #{sk_unit_forward.4} parent=0 // pred_check_branch
    %12 = sbr.rel (0) target = $region5
  $region4: #{sk_unit_forward.4} parent=0 // pred_region
    _
  $region5: #{sk_unit_forward.4} parent=0 // pred_fallthru
    _
  // Predicated region
  $region6: #{sk_unit_forward.4} parent=0 // pred_check
    _
  $region7: #{sk_unit_forward.4} parent=0 // pred_check_branch
    %14 = sbr.rel (0) target = $region9
  $region8: #{sk_unit_forward.4} parent=0 // pred_region
    _
  $region9: #{sk_unit_forward.4} parent=0 // pred_fallthru
    _
  // Predicated region
  $region10: #{sk_unit_forward.4} parent=0 // pred_check
    _
  $region11: #{sk_unit_forward.4} parent=0 // pred_check_branch
    %16 = sbr.rel (0) target = $region13
  $region12: #{sk_unit_forward.4} parent=0 // pred_region
    _
  $region13: #{sk_unit_forward.4} parent=0 // pred_fallthru
    _
  // Predicated region
  $region14: #{sk_unit_forward.4} parent=0 // pred_check
    _
  $region15: #{sk_unit_forward.4} parent=0 // pred_check_branch
    %18 = sbr.rel (0) target = $region17
  $region16: #{sk_unit_forward.4} parent=0 // pred_region
    _
  $region17: #{sk_unit_forward.4} parent=0 // pred_fallthru
    _
  %v20 = vld [vmem:[%s0] sm:$0xf]
  %v21 = vld [vmem:[%s0 + $0x4] sm:$0xf]
  %v22 = vld [vmem:[%s0 + $0x8] sm:$0xf]
  %v23 = vld [vmem:[%s0 + $0xc] sm:$0xf]
  %v24 = vld [vmem:[%s0 + $0x10] sm:$0xf]
  %v25 = vld [vmem:[%s0 + $0x14] sm:$0xf]
  %v26 = vld [vmem:[%s0 + $0x18] sm:$0xf]
  %v27 = vld [vmem:[%s0 + $0x1c] sm:$0xf]
  %v28 = vld [vmem:[%s0 + $0x20] sm:$0xf]
  %v29 = vld [vmem:[%s0 + $0x24] sm:$0xf]
  %v30 = vld [vmem:[%s0 + $0x28] sm:$0xf]
  %v31 = vld [vmem:[%s0 + $0x2c] sm:$0xf]
  %v32 = vld [vmem:[%s0 + $0x30] sm:$0xf]
  %v33 = vld [vmem:[%s0 + $0x34] sm:$0xf]
  %v34 = vld [vmem:[%s0 + $0x38] sm:$0xf]
  %v35 = vld [vmem:[%s0 + $0x3c] sm:$0xf]
  %v36 = vld [vmem:[%s1] sm:$0xf]
  %v37 = vld [vmem:[%s1 + $0x4] sm:$0xf]
  %v54 = vunpack.c.l.b16 %v20
  %v55 = vunpack.c.l.b16 %v21
  %v56 = vunpack.c.l.b16 %v22
  %v57 = vunpack.c.l.b16 %v23
  %v58 = vunpack.c.l.b16 %v24
  %v59 = vunpack.c.l.b16 %v25
  %v60 = vunpack.c.l.b16 %v26
  %v61 = vunpack.c.l.b16 %v27
  %v62 = vunpack.c.l.b16 %v28
  %v63 = vunpack.c.l.b16 %v29
  %v64 = vunpack.c.l.b16 %v30
  %v65 = vunpack.c.l.b16 %v31
  %v66 = vunpack.c.l.b16 %v32
  %v67 = vunpack.c.l.b16 %v33
  %v68 = vunpack.c.l.b16 %v34
  %v69 = vunpack.c.l.b16 %v35
  %v70 = vpack.c.b16 %v55, %v54
  %v71 = vpack.c.b16 %v57, %v56
  %v72 = vpack.c.b16 %v59, %v58
  %v73 = vpack.c.b16 %v61, %v60
  %v74 = vpack.c.b16 %v63, %v62
  %v75 = vpack.c.b16 %v65, %v64
  %v76 = vpack.c.b16 %v67, %v66
  %v77 = vpack.c.b16 %v69, %v68
  %v80 = vunpack.c.l.b16 %v36
  %v81 = vunpack.c.l.b16 %v37
  %v82 = vpack.c.b16 %v81, %v80
  %vm84 = vcmask 130048
  %v86 = vsel %vm84, %v70, 0
  %v89 = vsel %vm84, %v71, 0
  %v92 = vsel %vm84, %v72, 0
  %v95 = vsel %vm84, %v73, 0
  %v98 = vsel %vm84, %v74, 0
  %v101 = vsel %vm84, %v75, 0
  %v104 = vsel %vm84, %v76, 0
  %v107 = vsel %vm84, %v77, 0
  %109 = vmatprep.subr.bf16.mxu0 0
  %110 = vmatpush1.bf16.msra.mxu0 %v82
  %111 = vmatprep.subr.bf16.mxu0 0
  %112 = vmatpush1.bf16.msra.mxu0 0
  %113 = vmatprep.subr.bf16.mxu0 0
  %114 = vmatpush1.bf16.msra.mxu0 0
  %115 = vmatprep.subr.bf16.mxu0 0
  %116 = vmatpush1.bf16.msra.mxu0 0
  %117 = vmatprep.subr.bf16.mxu0 0
  %118 = vmatpush1.bf16.msra.mxu0 0
  %119 = vmatprep.subr.bf16.mxu0 0
  %120 = vmatpush1.bf16.msra.mxu0 0
  %121 = vmatprep.subr.bf16.mxu0 0
  %122 = vmatpush1.bf16.msra.mxu0 0
  %123 = vmatprep.subr.bf16.mxu0 0
  %124 = vmatpush1.bf16.msra.mxu0 0
  %125 = vmatprep.subr.bf16.mxu0 0
  %126 = vmatpush1.bf16.msra.mxu0 0
  %127 = vmatprep.subr.bf16.mxu0 0
  %128 = vmatpush1.bf16.msra.mxu0 0
  %129 = vmatprep.subr.bf16.mxu0 0
  %130 = vmatpush1.bf16.msra.mxu0 0
  %131 = vmatprep.subr.bf16.mxu0 0
  %132 = vmatpush1.bf16.msra.mxu0 0
  %133 = vmatprep.subr.bf16.mxu0 0
  %134 = vmatpush1.bf16.msra.mxu0 0
  %135 = vmatprep.subr.bf16.mxu0 0
  %136 = vmatpush1.bf16.msra.mxu0 0
  %137 = vmatprep.subr.bf16.mxu0 0
  %138 = vmatpush1.bf16.msra.mxu0 0
  %139 = vmatprep.subr.bf16.mxu0 0
  %140 = vmatpush1.bf16.msra.mxu0 0
  %141 = vmatprep.mubr.bf16.mxu0 0
  %142 = vmatmul.mubr.bf16.gmra.mrb[0].mxu0 %v86
  %v143 = vpop.f32.mrb[0].mxu0
  %v144 = vadd.f32 0.0, %v143
  %v145 = vpop.f32.mrb[0].mxu0
  %v146 = vpop.f32.mrb[0].mxu0
  %v147 = vadd.f32 0.0, %v146
  %v148 = vpop.f32.mrb[0].mxu0
  %149 = vmatprep.mubr.bf16.mxu0 0
  %150 = vmatmul.mubr.bf16.gmra.mrb[0].mxu0 %v89
  %v151 = vpop.f32.mrb[0].mxu0
  %v152 = vadd.f32 0.0, %v151
  %v153 = vpop.f32.mrb[0].mxu0
  %v154 = vpop.f32.mrb[0].mxu0
  %v155 = vadd.f32 0.0, %v154
  %v156 = vpop.f32.mrb[0].mxu0
  %157 = vmatprep.mubr.bf16.mxu0 0
  %158 = vmatmul.mubr.bf16.gmra.mrb[0].mxu0 %v92
  %v159 = vpop.f32.mrb[0].mxu0
  %v160 = vadd.f32 0.0, %v159
  %v161 = vpop.f32.mrb[0].mxu0
  %v162 = vpop.f32.mrb[0].mxu0
  %v163 = vadd.f32 0.0, %v162
  %v164 = vpop.f32.mrb[0].mxu0
  %165 = vmatprep.mubr.bf16.mxu0 0
  %166 = vmatmul.mubr.bf16.gmra.mrb[0].mxu0 %v95
  %v167 = vpop.f32.mrb[0].mxu0
  %v168 = vadd.f32 0.0, %v167
  %v169 = vpop.f32.mrb[0].mxu0
  %v170 = vpop.f32.mrb[0].mxu0
  %v171 = vadd.f32 0.0, %v170
  %v172 = vpop.f32.mrb[0].mxu0
  %173 = vmatprep.mubr.bf16.mxu0 0
  %174 = vmatmul.mubr.bf16.gmra.mrb[0].mxu0 %v98
  %v175 = vpop.f32.mrb[0].mxu0
  %v176 = vadd.f32 0.0, %v175
  %v177 = vpop.f32.mrb[0].mxu0
  %v178 = vpop.f32.mrb[0].mxu0
  %v179 = vadd.f32 0.0, %v178
  %v180 = vpop.f32.mrb[0].mxu0
  %181 = vmatprep.mubr.bf16.mxu0 0
  %182 = vmatmul.mubr.bf16.gmra.mrb[0].mxu0 %v101
  %v183 = vpop.f32.mrb[0].mxu0
  %v184 = vadd.f32 0.0, %v183
  %v185 = vpop.f32.mrb[0].mxu0
  %v186 = vpop.f32.mrb[0].mxu0
  %v187 = vadd.f32 0.0, %v186
  %v188 = vpop.f32.mrb[0].mxu0
  %189 = vmatprep.mubr.bf16.mxu0 0
  %190 = vmatmul.mubr.bf16.gmra.mrb[0].mxu0 %v104
  %v191 = vpop.f32.mrb[0].mxu0
  %v192 = vadd.f32 0.0, %v191
  %v193 = vpop.f32.mrb[0].mxu0
  %v194 = vpop.f32.mrb[0].mxu0
  %v195 = vadd.f32 0.0, %v194
  %v196 = vpop.f32.mrb[0].mxu0
  %197 = vmatprep.mubr.bf16.mxu0 0
  %198 = vmatmul.mubr.bf16.gmra.mrb[0].mxu0 %v107
  %v199 = vpop.f32.mrb[0].mxu0
  %v200 = vadd.f32 0.0, %v199
  %v201 = vpop.f32.mrb[0].mxu0
  %v202 = vpop.f32.mrb[0].mxu0
  %v203 = vadd.f32 0.0, %v202
  %v204 = vpop.f32.mrb[0].mxu0
  %205 = vdwg.mxu0
  %v206 = vld [vmem:[%s2] sm:$0x1]
  %v208 = vlaneseq
  %v209 = vshrl.u32 %v208, 7
  %v210 = vsub.s32 0, %v209
  %v211 = vrot.slane %v206, %v210
  %v213 = vmul.f32 %v144, %v211
  %v214 = vmul.f32 %v147, %v211
  %v215 = vmul.f32 %v152, %v211
  %v216 = vmul.f32 %v155, %v211
  %v217 = vmul.f32 %v160, %v211
  %v218 = vmul.f32 %v163, %v211
  %v219 = vmul.f32 %v168, %v211
  %v220 = vmul.f32 %v171, %v211
  %v221 = vmul.f32 %v176, %v211
  %v222 = vmul.f32 %v179, %v211
  %v223 = vmul.f32 %v184, %v211
  %v224 = vmul.f32 %v187, %v211
  %v225 = vmul.f32 %v192, %v211
  %v226 = vmul.f32 %v195, %v211
  %v227 = vmul.f32 %v200, %v211
  %v228 = vmul.f32 %v203, %v211
  %v229 = vld [vmem:[%s3] sm:$0x1]
  %v231 = vlaneseq
  %v232 = vshrl.u32 %v231, 7
  %v233 = vsub.s32 0, %v232
  %v234 = vrot.slane %v229, %v233
  %v236 = vadd.f32 %v213, %v234
  %v237 = vadd.f32 %v214, %v234
  %v238 = vadd.f32 %v215, %v234
  %v239 = vadd.f32 %v216, %v234
  %v240 = vadd.f32 %v217, %v234
  %v241 = vadd.f32 %v218, %v234
  %v242 = vadd.f32 %v219, %v234
  %v243 = vadd.f32 %v220, %v234
  %v244 = vadd.f32 %v221, %v234
  %v245 = vadd.f32 %v222, %v234
  %v246 = vadd.f32 %v223, %v234
  %v247 = vadd.f32 %v224, %v234
  %v248 = vadd.f32 %v225, %v234
  %v249 = vadd.f32 %v226, %v234
  %v250 = vadd.f32 %v227, %v234
  %v251 = vadd.f32 %v228, %v234
  %v252 = vmax.f32 %v236, 0.0
  %v253 = vmax.f32 %v237, 0.0
  %v254 = vmax.f32 %v238, 0.0
  %v255 = vmax.f32 %v239, 0.0
  %v256 = vmax.f32 %v240, 0.0
  %v257 = vmax.f32 %v241, 0.0
  %v258 = vmax.f32 %v242, 0.0
  %v259 = vmax.f32 %v243, 0.0
  %v260 = vmax.f32 %v244, 0.0
  %v261 = vmax.f32 %v245, 0.0
  %v262 = vmax.f32 %v246, 0.0
  %v263 = vmax.f32 %v247, 0.0
  %v264 = vmax.f32 %v248, 0.0
  %v265 = vmax.f32 %v249, 0.0
  %v266 = vmax.f32 %v250, 0.0
  %v267 = vmax.f32 %v251, 0.0
  %v268 = vpack.c.bf16 %v253, %v252
  %v269 = vpack.c.bf16 %v255, %v254
  %v270 = vpack.c.bf16 %v257, %v256
  %v271 = vpack.c.bf16 %v259, %v258
  %v272 = vpack.c.bf16 %v261, %v260
  %v273 = vpack.c.bf16 %v263, %v262
  %v274 = vpack.c.bf16 %v265, %v264
  %v275 = vpack.c.bf16 %v267, %v266
  %v284 = vunpack.c.l.b16 %v268
  %v285 = vunpack.c.h.b16 %v268
  %v286 = vunpack.c.l.b16 %v269
  %v287 = vunpack.c.h.b16 %v269
  %v288 = vunpack.c.l.b16 %v270
  %v289 = vunpack.c.h.b16 %v270
  %v290 = vunpack.c.l.b16 %v271
  %v291 = vunpack.c.h.b16 %v271
  %v292 = vunpack.c.l.b16 %v272
  %v293 = vunpack.c.h.b16 %v272
  %v294 = vunpack.c.l.b16 %v273
  %v295 = vunpack.c.h.b16 %v273
  %v296 = vunpack.c.l.b16 %v274
  %v297 = vunpack.c.h.b16 %v274
  %v298 = vunpack.c.l.b16 %v275
  %v299 = vunpack.c.h.b16 %v275
  %v300 = vpack.c.b16 %v284, %v284
  %v301 = vpack.c.b16 %v285, %v285
  %v302 = vpack.c.b16 %v286, %v286
  %v303 = vpack.c.b16 %v287, %v287
  %v304 = vpack.c.b16 %v288, %v288
  %v305 = vpack.c.b16 %v289, %v289
  %v306 = vpack.c.b16 %v290, %v290
  %v307 = vpack.c.b16 %v291, %v291
  %v308 = vpack.c.b16 %v292, %v292
  %v309 = vpack.c.b16 %v293, %v293
  %v310 = vpack.c.b16 %v294, %v294
  %v311 = vpack.c.b16 %v295, %v295
  %v312 = vpack.c.b16 %v296, %v296
  %v313 = vpack.c.b16 %v297, %v297
  %v314 = vpack.c.b16 %v298, %v298
  %v315 = vpack.c.b16 %v299, %v299
  %vm332 = vcmask 257024
  %333 = vst.msk [vmem:[%s4] sm:$0xf] %vm332, %v300
  %334 = vst.msk [vmem:[%s4 + $0x4] sm:$0xf] %vm332, %v301
  %335 = vst.msk [vmem:[%s4 + $0x8] sm:$0xf] %vm332, %v302
  %336 = vst.msk [vmem:[%s4 + $0xc] sm:$0xf] %vm332, %v303
  %337 = vst.msk [vmem:[%s4 + $0x10] sm:$0xf] %vm332, %v304
  %338 = vst.msk [vmem:[%s4 + $0x14] sm:$0xf] %vm332, %v305
  %339 = vst.msk [vmem:[%s4 + $0x18] sm:$0xf] %vm332, %v306
  %340 = vst.msk [vmem:[%s4 + $0x1c] sm:$0xf] %vm332, %v307
  %341 = vst.msk [vmem:[%s4 + $0x20] sm:$0xf] %vm332, %v308
  %342 = vst.msk [vmem:[%s4 + $0x24] sm:$0xf] %vm332, %v309
  %343 = vst.msk [vmem:[%s4 + $0x28] sm:$0xf] %vm332, %v310
  %344 = vst.msk [vmem:[%s4 + $0x2c] sm:$0xf] %vm332, %v311
  %345 = vst.msk [vmem:[%s4 + $0x30] sm:$0xf] %vm332, %v312
  %346 = vst.msk [vmem:[%s4 + $0x34] sm:$0xf] %vm332, %v313
  %347 = vst.msk [vmem:[%s4 + $0x38] sm:$0xf] %vm332, %v314
  %348 = vst.msk [vmem:[%s4 + $0x3c] sm:$0xf] %vm332, %v315
  %v349 = vpack.c.bf16 %v237, %v236
  %v350 = vpack.c.bf16 %v239, %v238
  %v351 = vpack.c.bf16 %v241, %v240
  %v352 = vpack.c.bf16 %v243, %v242
  %v353 = vpack.c.bf16 %v245, %v244
  %v354 = vpack.c.bf16 %v247, %v246
  %v355 = vpack.c.bf16 %v249, %v248
  %v356 = vpack.c.bf16 %v251, %v250
  %v365 = vunpack.c.l.b16 %v349
  %v366 = vunpack.c.h.b16 %v349
  %v367 = vunpack.c.l.b16 %v350
  %v368 = vunpack.c.h.b16 %v350
  %v369 = vunpack.c.l.b16 %v351
  %v370 = vunpack.c.h.b16 %v351
  %v371 = vunpack.c.l.b16 %v352
  %v372 = vunpack.c.h.b16 %v352
  %v373 = vunpack.c.l.b16 %v353
  %v374 = vunpack.c.h.b16 %v353
  %v375 = vunpack.c.l.b16 %v354
  %v376 = vunpack.c.h.b16 %v354
  %v377 = vunpack.c.l.b16 %v355
  %v378 = vunpack.c.h.b16 %v355
  %v379 = vunpack.c.l.b16 %v356
  %v380 = vunpack.c.h.b16 %v356
  %v381 = vpack.c.b16 %v365, %v365
  %v382 = vpack.c.b16 %v366, %v366
  %v383 = vpack.c.b16 %v367, %v367
  %v384 = vpack.c.b16 %v368, %v368
  %v385 = vpack.c.b16 %v369, %v369
  %v386 = vpack.c.b16 %v370, %v370
  %v387 = vpack.c.b16 %v371, %v371
  %v388 = vpack.c.b16 %v372, %v372
  %v389 = vpack.c.b16 %v373, %v373
  %v390 = vpack.c.b16 %v374, %v374
  %v391 = vpack.c.b16 %v375, %v375
  %v392 = vpack.c.b16 %v376, %v376
  %v393 = vpack.c.b16 %v377, %v377
  %v394 = vpack.c.b16 %v378, %v378
  %v395 = vpack.c.b16 %v379, %v379
  %v396 = vpack.c.b16 %v380, %v380
  %397 = vrot.lane.b32.xlu0 %v381, 96
  %v398 = vpop.permute.xlu0 %397
  %399 = vrot.lane.b32.xlu0 %v382, 96
  %v400 = vpop.permute.xlu0 %399
  %401 = vrot.lane.b32.xlu0 %v383, 96
  %v402 = vpop.permute.xlu0 %401
  %403 = vrot.lane.b32.xlu0 %v384, 96
  %v404 = vpop.permute.xlu0 %403
  %405 = vrot.lane.b32.xlu0 %v385, 96
  %v406 = vpop.permute.xlu0 %405
  %407 = vrot.lane.b32.xlu0 %v386, 96
  %v408 = vpop.permute.xlu0 %407
  %409 = vrot.lane.b32.xlu0 %v387, 96
  %v410 = vpop.permute.xlu0 %409
  %411 = vrot.lane.b32.xlu0 %v388, 96
  %v412 = vpop.permute.xlu0 %411
  %413 = vrot.lane.b32.xlu0 %v389, 96
  %v414 = vpop.permute.xlu0 %413
  %415 = vrot.lane.b32.xlu0 %v390, 96
  %v416 = vpop.permute.xlu0 %415
  %417 = vrot.lane.b32.xlu0 %v391, 96
  %v418 = vpop.permute.xlu0 %417
  %419 = vrot.lane.b32.xlu0 %v392, 96
  %v420 = vpop.permute.xlu0 %419
  %421 = vrot.lane.b32.xlu0 %v393, 96
  %v422 = vpop.permute.xlu0 %421
  %423 = vrot.lane.b32.xlu0 %v394, 96
  %v424 = vpop.permute.xlu0 %423
  %425 = vrot.lane.b32.xlu0 %v395, 96
  %v426 = vpop.permute.xlu0 %425
  %427 = vrot.lane.b32.xlu0 %v396, 96
  %v428 = vpop.permute.xlu0 %427
  %445 = vst.msk [vmem:[%s5] sm:$0xf] %vm332, %v398
  %446 = vst.msk [vmem:[%s5 + $0x4] sm:$0xf] %vm332, %v400
  %447 = vst.msk [vmem:[%s5 + $0x8] sm:$0xf] %vm332, %v402
  %448 = vst.msk [vmem:[%s5 + $0xc] sm:$0xf] %vm332, %v404
  %449 = vst.msk [vmem:[%s5 + $0x10] sm:$0xf] %vm332, %v406
  %450 = vst.msk [vmem:[%s5 + $0x14] sm:$0xf] %vm332, %v408
  %451 = vst.msk [vmem:[%s5 + $0x18] sm:$0xf] %vm332, %v410
  %452 = vst.msk [vmem:[%s5 + $0x1c] sm:$0xf] %vm332, %v412
  %453 = vst.msk [vmem:[%s5 + $0x20] sm:$0xf] %vm332, %v414
  %454 = vst.msk [vmem:[%s5 + $0x24] sm:$0xf] %vm332, %v416
  %455 = vst.msk [vmem:[%s5 + $0x28] sm:$0xf] %vm332, %v418
  %456 = vst.msk [vmem:[%s5 + $0x2c] sm:$0xf] %vm332, %v420
  %457 = vst.msk [vmem:[%s5 + $0x30] sm:$0xf] %vm332, %v422
  %458 = vst.msk [vmem:[%s5 + $0x34] sm:$0xf] %vm332, %v424
  %459 = vst.msk [vmem:[%s5 + $0x38] sm:$0xf] %vm332, %v426
  %460 = vst.msk [vmem:[%s5 + $0x3c] sm:$0xf] %vm332, %v428
  // Predicated region
  $region18: #{sk_unit_forward.4} parent=0 // pred_check
    _
  $region19: #{sk_unit_forward.4} parent=0 // pred_check_branch
    %462 = sbr.rel (0) target = $region21
  $region20: #{sk_unit_forward.4} parent=0 // pred_region
    _
  $region21: #{sk_unit_forward.4} parent=0 // pred_fallthru
    _
  // Predicated region
  $region22: #{sk_unit_forward.4} parent=0 // pred_check
    _
  $region23: #{sk_unit_forward.4} parent=0 // pred_check_branch
    %464 = sbr.rel (0) target = $region25
  $region24: #{sk_unit_forward.4} parent=0 // pred_region
    _
  $region25: #{sk_unit_forward.4} parent=0 // pred_fallthru
    _
  // Predicated region
  $region26: #{sk_unit_forward.4} parent=0 // pred_check
    _
  $region27: #{sk_unit_forward.4} parent=0 // pred_check_branch
    %466 = sbr.rel (0) target = $region29
  $region28: #{sk_unit_forward.4} parent=0 // pred_region
    _
  $region29: #{sk_unit_forward.4} parent=0 // pred_fallthru
    _
  // Predicated region
  $region30: #{sk_unit_forward.4} parent=0 // pred_check
    _
  $region31: #{sk_unit_forward.4} parent=0 // pred_check_branch
    %468 = sbr.rel (0) target = $region33
  $region32: #{sk_unit_forward.4} parent=0 // pred_region
    _
  $region33: #{sk_unit_forward.4} parent=0 // pred_fallthru
    _

// kernel: sk_unit_forward.6
$region0: #{sk_unit_forward.6}
  #allocation0 [shape = 'u32[]', space=smem, size = 0x4, offset = 0x4, fixed_abs, tag = 'smem constant byte address 0x4 - core index']
  #allocation1 [shape = 'u32[144,128]{1,0:T(1,128)}', space=vmem, size = 0x12000, scoped, tag = 'internal scratch']
  %s0 = inlined_call_operand.vmem [shape: bf16[2,2,64,32], index: 0, kind: input, shape index: {}]
  %s1 = inlined_call_operand.vmem [shape: f32[2,2,32], index: 1, kind: input, shape index: {}]
  %s2 = inlined_call_operand.vmem [shape: bf16[2,64,32], index: 2, kind: output, shape index: {}]
  %s3 = sld [smem:[#allocation0]]
  $region82: #{sk_unit_forward.6} parent=0
    _
  %s5 = ssub.s32 1, %s3
  %s6 = scalar_select 0, %s5, %s3
  $region1: #{sk_unit_forward.6} parent=0
    #allocation2 [shape = 'u8[65536]{0}', space=vmem, size = 0x10000, scoped, tag = 'input window, operand 0']
    loop: start=0, step=1, limit=4
    $region2: #{sk_unit_forward.6} parent=1 // loop_pre_header
      _
    $region3: #{sk_unit_forward.6} parent=1 // loop_header
      %s8 = sphi 0, %s12
      %p9 = scmp.ge.s32.totalorder %s8, 4
      %s15 = sphi 0, %s27
      %s16 = sphi 0, %s23
      %s17 = sphi 0, %s15
      %s18 = sphi 0, %s16
      %s19 = sphi 0, %s17
      %s20 = sphi 0, %s18
      %s32 = sphi 0, %s34
      %s35 = sphi 0, %s32
      %s36 = sphi 0, %s35
      %s52 = sphi 0, %s36
      %s58 = sphi 0, %s60
      %s61 = sphi 0, %s58
      %s62 = sphi 0, %s61
      %s78 = sphi 0, %s62
      %s86 = sphi 0, %s88
      %s89 = sphi 0, %s86
      %s90 = sphi 0, %s89
      %s106 = sphi 0, %s90
    $region4: #{sk_unit_forward.6} parent=1 // loop_header_branch
      %11 = sbr.rel (%p9) target = $region8
    $region5: #{sk_unit_forward.6} parent=1 // loop_body
      %s13 = ssub.s32 %s8, 1
      %s14 = ssub.s32 %s8, 2
      %s21 = sadd.s32 1, %s16
      %p22 = scmp.ge.s32.totalorder %s21, 1
      %s23 = scalar_select %p22, 0, %s21
      %s24 = sadd.s32 1, %s15
      %s25 = scalar_select %p22, %s24, %s15
      %p26 = scmp.ge.s32.totalorder %s25, 2
      %s27 = scalar_select %p26, 0, %s25
      %s28 = ssub.s32 %s15, %s27
      %s29 = ssub.s32 %s16, %s23
      %s30 = sor.u32 %s28, %s29
      %p31 = scmp.eq.s32.totalorder %s30, 0
      %s33 = sadd.s32 %s32, 1
      %s34 = scalar_select %p31, %s32, %s33
      %p37 = pneg %p31
      %p38 = scmp.eq.s32.totalorder %s8, 1
      %p39 = por %p37, %p38
      %p40 = scmp.ne.s32.totalorder %s32, %s35
      %p41 = scmp.eq.s32.totalorder %s8, 0
      %p42 = por %p40, %p41
      %p43 = scmp.ne.s32.totalorder %s32, %s35
      %p44 = scmp.eq.s32.totalorder %s13, 1
      %p45 = por %p43, %p44
      %p46 = scmp.ne.s32.totalorder %s35, %s36
      %p47 = scmp.eq.s32.totalorder %s13, 0
      %p48 = por %p46, %p47
      %p49 = scmp.ne.s32.totalorder %s35, %s36
      %p50 = scmp.eq.s32.totalorder %s14, 1
      %p51 = por %p49, %p50
      %p53 = scmp.ne.s32.totalorder %s36, %s52
      %p54 = scmp.eq.s32.totalorder %s14, 0
      %p55 = por %p53, %p54
      %s56 = ssub.s32 %s15, %s27
      %p57 = scmp.eq.s32.totalorder %s56, 0
      %s59 = sadd.s32 %s58, 1
      %s60 = scalar_select %p57, %s58, %s59
      %p63 = pneg %p57
      %p64 = scmp.eq.s32.totalorder %s8, 1
      %p65 = por %p63, %p64
      %p66 = scmp.ne.s32.totalorder %s58, %s61
      %p67 = scmp.eq.s32.totalorder %s8, 0
      %p68 = por %p66, %p67
      %p69 = scmp.ne.s32.totalorder %s58, %s61
      %p70 = scmp.eq.s32.totalorder %s13, 1
      %p71 = por %p69, %p70
      %p72 = scmp.ne.s32.totalorder %s61, %s62
      %p73 = scmp.eq.s32.totalorder %s13, 0
      %p74 = por %p72, %p73
      %p75 = scmp.ne.s32.totalorder %s61, %s62
      %p76 = scmp.eq.s32.totalorder %s14, 1
      %p77 = por %p75, %p76
      %p79 = scmp.ne.s32.totalorder %s62, %s78
      %p80 = scmp.eq.s32.totalorder %s14, 0
      %p81 = por %p79, %p80
      %s82 = ssub.s32 %s15, %s27
      %s83 = ssub.s32 %s16, %s23
      %s84 = sor.u32 %s82, %s83
      %p85 = scmp.eq.s32.totalorder %s84, 0
      %s87 = sadd.s32 %s86, 1
      %s88 = scalar_select %p85, %s86, %s87
      %p91 = pneg %p85
      %p92 = scmp.eq.s32.totalorder %s8, 1
      %p93 = por %p91, %p92
      %p94 = scmp.ne.s32.totalorder %s86, %s89
      %p95 = scmp.eq.s32.totalorder %s8, 0
      %p96 = por %p94, %p95
      %p97 = scmp.ne.s32.totalorder %s86, %s89
      %p98 = scmp.eq.s32.totalorder %s13, 1
      %p99 = por %p97, %p98
      %p100 = scmp.ne.s32.totalorder %s89, %s90
      %p101 = scmp.eq.s32.totalorder %s13, 0
      %p102 = por %p100, %p101
      %p103 = scmp.ne.s32.totalorder %s89, %s90
      %p104 = scmp.eq.s32.totalorder %s14, 1
      %p105 = por %p103, %p104
      %p107 = scmp.ne.s32.totalorder %s90, %s106
      %p108 = scmp.eq.s32.totalorder %s14, 0
      %p109 = por %p107, %p108
      %p110 = scmp.le.s32.totalorder 1, %s8
      %p111 = scmp.lt.s32.totalorder %s8, 3
      %p112 = pnand %p110, %p111
      %p113 = pneg %p112
      // Predicated region
      $region9: #{sk_unit_forward.6} parent=5 // pred_check
        _
      $region10: #{sk_unit_forward.6} parent=5 // pred_check_branch
        %115 = sbr.rel (%p112) target = $region12
      $region11: #{sk_unit_forward.6} parent=5 // pred_region
        %s116 = ssub.s32 %s8, 1
      $region12: #{sk_unit_forward.6} parent=5 // pred_fallthru
        _
      %p117 = scmp.lt.s32.totalorder %s8, 2
      // Predicated region
      $region13: #{sk_unit_forward.6} parent=5 // pred_check
        %p118 = pneg %p117
      $region14: #{sk_unit_forward.6} parent=5 // pred_check_branch
        %120 = sbr.rel (%p118) target = $region16
      $region15: #{sk_unit_forward.6} parent=5 // pred_region
        // Predicated region
        $region17: #{sk_unit_forward.6} parent=15 // pred_check
          %p121 = pneg %p42
        $region18: #{sk_unit_forward.6} parent=15 // pred_check_branch
          %123 = sbr.rel (%p121) target = $region20
        $region19: #{sk_unit_forward.6} parent=15 // pred_region
          %s124 = sand.u32 %s32, 1
          %s125 = sand.u32 %s32, 1
          %s126 = smul.addr %s125, 64
          %s127 = scalar_lea.vmem [#allocation2], %s126
          %s128 = smul.u32 8, %s16
          %s129 = smul.addr %s15, 8
          %s130 = sadd.s32 %s128, %s129
          %s131 = smul.addr %s130, 4
          %s132 = scalar_lea.vmem %s0, %s131
          // Predicated region
          $region21: #{sk_unit_forward.6} parent=19 // pred_check
            _
          $region22: #{sk_unit_forward.6} parent=19 // pred_check_branch
            %134 = sbr.rel (0) target = $region24
          $region23: #{sk_unit_forward.6} parent=19 // pred_region
            // Predicated region
            $region25: #{sk_unit_forward.6} parent=23 // pred_check
              _
            $region26: #{sk_unit_forward.6} parent=23 // pred_check_branch
              %136 = sbr.rel target = $region28
            $region27: #{sk_unit_forward.6} parent=23 // pred_region
              // Predicated region
              $region40: #{sk_unit_forward.6} parent=27 // pred_check
                _
              $region41: #{sk_unit_forward.6} parent=27 // pred_check_branch
                %181 = sbr.rel (0) target = $region43
              $region42: #{sk_unit_forward.6} parent=27 // pred_region
                loop: start=0, step=1, limit=1
                $region44: #{sk_unit_forward.6} parent=42 // loop_pre_header
                  _
                $region45: #{sk_unit_forward.6} parent=42 // loop_header
                  %s183 = sphi 0, %s187
                  %p184 = scmp.ge.s32.totalorder %s183, 1
                  %s188 = sphi %s132, %s132
                  %s189 = sphi %s127, %s127
                $region46: #{sk_unit_forward.6} parent=42 // loop_header_branch
                  %186 = sbr.rel (%p184) target = $region50
                $region47: #{sk_unit_forward.6} parent=42 // loop_body
                  _
                $region48: #{sk_unit_forward.6} parent=42 // loop_footer
                  %s187 = sadd.s32 1, %s183
                $region49: #{sk_unit_forward.6} parent=42 // loop_footer_branch
                  %182 = sbr.rel target = $region45
                $region50: #{sk_unit_forward.6} parent=42 // loop_exit
                  _
                loop: start=0, step=1, limit=1
                $region51: #{sk_unit_forward.6} parent=42 // loop_pre_header
                  _
                $region52: #{sk_unit_forward.6} parent=42 // loop_header
                  %s192 = sphi 0, %s196
                  %p193 = scmp.ge.s32.totalorder %s192, 1
                  %s197 = sphi %s132, %s132
                  %s198 = sphi %s127, %s127
                $region53: #{sk_unit_forward.6} parent=42 // loop_header_branch
                  %195 = sbr.rel (%p193) target = $region57
                $region54: #{sk_unit_forward.6} parent=42 // loop_body
                  %v199 = vld [vmem:[%s197] sm:$0xf]
                  %200 = vst [vmem:[%s198] sm:$0xf] %v199
                  %v201 = vld [vmem:[%s197 + $0x4] sm:$0xf]
                  %202 = vst [vmem:[%s198 + $0x4] sm:$0xf] %v201
                  %v203 = vld [vmem:[%s197 + $0x8] sm:$0xf]
                  %204 = vst [vmem:[%s198 + $0x8] sm:$0xf] %v203
                  %v205 = vld [vmem:[%s197 + $0xc] sm:$0xf]
                  %206 = vst [vmem:[%s198 + $0xc] sm:$0xf] %v205
                  %v207 = vld [vmem:[%s197 + $0x10] sm:$0xf]
                  %208 = vst [vmem:[%s198 + $0x10] sm:$0xf] %v207
                  %v209 = vld [vmem:[%s197 + $0x14] sm:$0xf]
                  %210 = vst [vmem:[%s198 + $0x14] sm:$0xf] %v209
                  %v211 = vld [vmem:[%s197 + $0x18] sm:$0xf]
                  %212 = vst [vmem:[%s198 + $0x18] sm:$0xf] %v211
                  %v213 = vld [vmem:[%s197 + $0x1c] sm:$0xf]
                  %214 = vst [vmem:[%s198 + $0x1c] sm:$0xf] %v213
                  %v215 = vld [vmem:[%s197 + $0x40] sm:$0xf]
                  %216 = vst [vmem:[%s198 + $0x20] sm:$0xf] %v215
                  %v217 = vld [vmem:[%s197 + $0x44] sm:$0xf]
                  %218 = vst [vmem:[%s198 + $0x24] sm:$0xf] %v217
                  %v219 = vld [vmem:[%s197 + $0x48] sm:$0xf]
                  %220 = vst [vmem:[%s198 + $0x28] sm:$0xf] %v219
                  %v221 = vld [vmem:[%s197 + $0x4c] sm:$0xf]
                  %222 = vst [vmem:[%s198 + $0x2c] sm:$0xf] %v221
                  %v223 = vld [vmem:[%s197 + $0x50] sm:$0xf]
                  %224 = vst [vmem:[%s198 + $0x30] sm:$0xf] %v223
                  %v225 = vld [vmem:[%s197 + $0x54] sm:$0xf]
                  %226 = vst [vmem:[%s198 + $0x34] sm:$0xf] %v225
                  %v227 = vld [vmem:[%s197 + $0x58] sm:$0xf]
                  %228 = vst [vmem:[%s198 + $0x38] sm:$0xf] %v227
                  %v229 = vld [vmem:[%s197 + $0x5c] sm:$0xf]
                  %230 = vst [vmem:[%s198 + $0x3c] sm:$0xf] %v229
                $region55: #{sk_unit_forward.6} parent=42 // loop_footer
                  %s196 = sadd.s32 1, %s192
                $region56: #{sk_unit_forward.6} parent=42 // loop_footer_branch
                  %191 = sbr.rel target = $region52
                $region57: #{sk_unit_forward.6} parent=42 // loop_exit
                  _
              $region43: #{sk_unit_forward.6} parent=27 // pred_fallthru
                _
            $region28: #{sk_unit_forward.6} parent=23 // pred_fallthru
              _
            // Predicated region
            $region29: #{sk_unit_forward.6} parent=23 // pred_check
              _
            $region30: #{sk_unit_forward.6} parent=23 // pred_check_branch
              %138 = sbr.rel (0) target = $region32
            $region31: #{sk_unit_forward.6} parent=23 // pred_region
              loop: start=0, step=1, limit=1
              $region33: #{sk_unit_forward.6} parent=31 // loop_pre_header
                _
              $region34: #{sk_unit_forward.6} parent=31 // loop_header
                %s141 = sphi 0, %s145
                %p142 = scmp.ge.s32.totalorder %s141, 1
                %s146 = sphi %s132, %s132
                %s147 = sphi %s127, %s127
              $region35: #{sk_unit_forward.6} parent=31 // loop_header_branch
                %144 = sbr.rel (%p142) target = $region39
              $region36: #{sk_unit_forward.6} parent=31 // loop_body
                %v148 = vld [vmem:[%s146] sm:$0xf]
                %149 = vst [vmem:[%s147] sm:$0xf] %v148
                %v150 = vld [vmem:[%s146 + $0x4] sm:$0xf]
                %151 = vst [vmem:[%s147 + $0x4] sm:$0xf] %v150
                %v152 = vld [vmem:[%s146 + $0x8] sm:$0xf]
                %153 = vst [vmem:[%s147 + $0x8] sm:$0xf] %v152
                %v154 = vld [vmem:[%s146 + $0xc] sm:$0xf]
                %155 = vst [vmem:[%s147 + $0xc] sm:$0xf] %v154
                %v156 = vld [vmem:[%s146 + $0x10] sm:$0xf]
                %157 = vst [vmem:[%s147 + $0x10] sm:$0xf] %v156
                %v158 = vld [vmem:[%s146 + $0x14] sm:$0xf]
                %159 = vst [vmem:[%s147 + $0x14] sm:$0xf] %v158
                %v160 = vld [vmem:[%s146 + $0x18] sm:$0xf]
                %161 = vst [vmem:[%s147 + $0x18] sm:$0xf] %v160
                %v162 = vld [vmem:[%s146 + $0x1c] sm:$0xf]
                %163 = vst [vmem:[%s147 + $0x1c] sm:$0xf] %v162
                %v164 = vld [vmem:[%s146 + $0x40] sm:$0xf]
                %165 = vst [vmem:[%s147 + $0x20] sm:$0xf] %v164
                %v166 = vld [vmem:[%s146 + $0x44] sm:$0xf]
                %167 = vst [vmem:[%s147 + $0x24] sm:$0xf] %v166
                %v168 = vld [vmem:[%s146 + $0x48] sm:$0xf]
                %169 = vst [vmem:[%s147 + $0x28] sm:$0xf] %v168
                %v170 = vld [vmem:[%s146 + $0x4c] sm:$0xf]
                %171 = vst [vmem:[%s147 + $0x2c] sm:$0xf] %v170
                %v172 = vld [vmem:[%s146 + $0x50] sm:$0xf]
                %173 = vst [vmem:[%s147 + $0x30] sm:$0xf] %v172
                %v174 = vld [vmem:[%s146 + $0x54] sm:$0xf]
                %175 = vst [vmem:[%s147 + $0x34] sm:$0xf] %v174
                %v176 = vld [vmem:[%s146 + $0x58] sm:$0xf]
                %177 = vst [vmem:[%s147 + $0x38] sm:$0xf] %v176
                %v178 = vld [vmem:[%s146 + $0x5c] sm:$0xf]
                %179 = vst [vmem:[%s147 + $0x3c] sm:$0xf] %v178
              $region37: #{sk_unit_forward.6} parent=31 // loop_footer
                %s145 = sadd.s32 1, %s141
              $region38: #{sk_unit_forward.6} parent=31 // loop_footer_branch
                %140 = sbr.rel target = $region34
              $region39: #{sk_unit_forward.6} parent=31 // loop_exit
                _
            $region32: #{sk_unit_forward.6} parent=23 // pred_fallthru
              _
          $region24: #{sk_unit_forward.6} parent=19 // pred_fallthru
            _
          %231 = vnop
        $region20: #{sk_unit_forward.6} parent=15 // pred_fallthru
          _
        // Predicated region
        $region58: #{sk_unit_forward.6} parent=15 // pred_check
          %p232 = pneg %p68
        $region59: #{sk_unit_forward.6} parent=15 // pred_check_branch
          %234 = sbr.rel (%p232) target = $region61
        $region60: #{sk_unit_forward.6} parent=15 // pred_region
          %p235 = scmp.lt.s32.totalorder %s15, 1
          %s236 = scalar_select %p235, %s15, 1
          %s237 = smul.addr %s236, 2
          %s238 = scalar_lea.vmem %s1, %s237
        $region61: #{sk_unit_forward.6} parent=15 // pred_fallthru
          _
      $region16: #{sk_unit_forward.6} parent=5 // pred_fallthru
        _
      %p239 = scmp.le.s32.totalorder 1, %s8
      %p240 = scmp.lt.s32.totalorder %s8, 3
      %p241 = pnand %p239, %p240
      %p242 = pneg %p241
      // Predicated region
      $region62: #{sk_unit_forward.6} parent=5 // pred_check
        _
      $region63: #{sk_unit_forward.6} parent=5 // pred_check_branch
        %244 = sbr.rel (%p241) target = $region65
      $region64: #{sk_unit_forward.6} parent=5 // pred_region
        %s245 = ssub.s32 %s8, 1
        %s246 = sand.u32 %s35, 1
        %s247 = sand.u32 %s35, 1
        %s248 = smul.addr %s247, 64
        %s249 = scalar_lea.vmem [#allocation2], %s248
        // Predicated region
        $region66: #{sk_unit_forward.6} parent=64 // pred_check
          %p250 = pneg %p48
        $region67: #{sk_unit_forward.6} parent=64 // pred_check_branch
          %252 = sbr.rel (%p250) target = $region69
        $region68: #{sk_unit_forward.6} parent=64 // pred_region
          _
        $region69: #{sk_unit_forward.6} parent=64 // pred_fallthru
          _
        %s253 = sand.u32 %s35, 1
        %s254 = sand.u32 %s35, 1
        %s255 = smul.addr %s254, 64
        %s256 = scalar_lea.vmem [#allocation2], %s255
        %p257 = pneg %p48
        %p258 = pneg %p45
        %p259 = scmp.lt.s32.totalorder %s17, 1
        %s260 = scalar_select %p259, %s17, 1
        %s261 = smul.addr %s260, 2
        %s262 = scalar_lea.vmem %s1, %s261
        %p263 = pneg %p74
        %p264 = pneg %p71
        %p265 = pneg %p102
        %p266 = pneg %p99
        %s267 = smul.u32 8, %s18
        %p268 = scmp.lt.s32.totalorder %s17, 1
        %s269 = scalar_select %p268, %s17, 1
        %p270 = scmp.lt.s32.totalorder %s267, 7
        %s271 = scalar_select %p270, %s267, 7
        %s272 = smul.addr %s269, 8
        %s273 = sadd.s32 %s271, %s272
        %s274 = smul.addr %s273, 4
        %s275 = scalar_lea.vmem %s2, %s274
        %s276 = smul.u32 8, %s18
        %p277 = scmp.lt.s32.totalorder %s17, 1
        %s278 = scalar_select %p277, %s17, 1
        %s279 = smul.addr %s278, 2
        %s280 = scalar_lea.vmem %s1, %s279
        %s281 = smul.u32 8, %s18
        %p282 = scmp.lt.s32.totalorder %s17, 1
        %s283 = scalar_select %p282, %s17, 1
        %p284 = scmp.lt.s32.totalorder %s281, 7
        %s285 = scalar_select %p284, %s281, 7
        %s286 = smul.addr %s283, 8
        %s287 = sadd.s32 %s285, %s286
        %s288 = smul.addr %s287, 4
        %s289 = scalar_lea.vmem %s2, %s288
        %s290 = smul.u32 8, %s18
        %v291 = vld [vmem:[%s280] sm:$0x3]
        %vm292 = vcmask 254976
        %v293 = vsel %vm292, %v291, -inf
        %v294 = vrot.slane %v293, 4
        %v295 = vmax.f32 %v293, %v294
        %v296 = vrot.slane %v295, 2
        %v297 = vmax.f32 %v295, %v296
        %v298 = vrot.slane %v297, 1
        %v299 = vmax.f32 %v297, %v298
        %v300 = vsub.f32 %v291, %v299
        %v301 = vmul.f32 %v300, 1.442695
        %v302 = vpow.pop %v301
        %v303 = vsel %vm292, %v302, 0.0
        %v304 = vrot.slane %v303, 4
        %v305 = vadd.f32 %v303, %v304
        %v306 = vrot.slane %v305, 2
        %v307 = vadd.f32 %v305, %v306
        %v308 = vrot.slane %v307, 1
        %v309 = vadd.f32 %v307, %v308
        %v310 = vrcp.pop %v309
        %v311 = vmul.f32 %v302, %v310
        %v312 = vld [vmem:[%s249] sm:$0xf]
        %v313 = vld [vmem:[%s249 + $0x4] sm:$0xf]
        %v314 = vld [vmem:[%s249 + $0x8] sm:$0xf]
        %v315 = vld [vmem:[%s249 + $0xc] sm:$0xf]
        %v316 = vld [vmem:[%s249 + $0x10] sm:$0xf]
        %v317 = vld [vmem:[%s249 + $0x14] sm:$0xf]
        %v318 = vld [vmem:[%s249 + $0x18] sm:$0xf]
        %v319 = vld [vmem:[%s249 + $0x1c] sm:$0xf]
        %v320 = vunpack.c.l.bf16 %v312
        %v321 = vunpack.c.l.bf16 %v313
        %v322 = vunpack.c.l.bf16 %v314
        %v323 = vunpack.c.l.bf16 %v315
        %v324 = vunpack.c.l.bf16 %v316
        %v325 = vunpack.c.l.bf16 %v317
        %v326 = vunpack.c.l.bf16 %v318
        %v327 = vunpack.c.l.bf16 %v319
        %v328 = vlaneseq
        %v329 = vshrl.u32 %v328, 7
        %v330 = vsub.s32 0, %v329
        %v331 = vrot.slane %v311, %v330
        %v332 = vmul.f32 %v331, %v320
        %v333 = vmul.f32 %v331, %v321
        %v334 = vmul.f32 %v331, %v322
        %v335 = vmul.f32 %v331, %v323
        %v336 = vmul.f32 %v331, %v324
        %v337 = vmul.f32 %v331, %v325
        %v338 = vmul.f32 %v331, %v326
        %v339 = vmul.f32 %v331, %v327
        %s340 = scalar_lea.vmem %s249, 32 [#allocation2]
        %v341 = vld [vmem:[%s340] sm:$0xf]
        %v342 = vld [vmem:[%s340 + $0x4] sm:$0xf]
        %v343 = vld [vmem:[%s340 + $0x8] sm:$0xf]
        %v344 = vld [vmem:[%s340 + $0xc] sm:$0xf]
        %v345 = vld [vmem:[%s340 + $0x10] sm:$0xf]
        %v346 = vld [vmem:[%s340 + $0x14] sm:$0xf]
        %v347 = vld [vmem:[%s340 + $0x18] sm:$0xf]
        %v348 = vld [vmem:[%s340 + $0x1c] sm:$0xf]
        %v349 = vunpack.c.l.bf16 %v341
        %v350 = vunpack.c.l.bf16 %v342
        %v351 = vunpack.c.l.bf16 %v343
        %v352 = vunpack.c.l.bf16 %v344
        %v353 = vunpack.c.l.bf16 %v345
        %v354 = vunpack.c.l.bf16 %v346
        %v355 = vunpack.c.l.bf16 %v347
        %v356 = vunpack.c.l.bf16 %v348
        %v357 = vlaneseq
        %v358 = vshrl.u32 %v357, 7
        %v359 = vsub.s32 1, %v358
        %v360 = vrot.slane %v311, %v359
        %v361 = vmul.f32 %v360, %v349
        %v362 = vmul.f32 %v360, %v350
        %v363 = vmul.f32 %v360, %v351
        %v364 = vmul.f32 %v360, %v352
        %v365 = vmul.f32 %v360, %v353
        %v366 = vmul.f32 %v360, %v354
        %v367 = vmul.f32 %v360, %v355
        %v368 = vmul.f32 %v360, %v356
        %v369 = vadd.f32 %v332, %v361
        %v370 = vadd.f32 %v333, %v362
        %v371 = vadd.f32 %v334, %v363
        %v372 = vadd.f32 %v335, %v364
        %v373 = vadd.f32 %v336, %v365
        %v374 = vadd.f32 %v337, %v366
        %v375 = vadd.f32 %v338, %v367
        %v376 = vadd.f32 %v339, %v368
        %v377 = vpack.c.bf16 %v370, %v369
        %v378 = vpack.c.bf16 %v372, %v371
        %v379 = vpack.c.bf16 %v374, %v373
        %v380 = vpack.c.bf16 %v376, %v375
        %v385 = vunpack.c.l.b16 %v377
        %v386 = vunpack.c.h.b16 %v377
        %v387 = vunpack.c.l.b16 %v378
        %v388 = vunpack.c.h.b16 %v378
        %v389 = vunpack.c.l.b16 %v379
        %v390 = vunpack.c.h.b16 %v379
        %v391 = vunpack.c.l.b16 %v380
        %v392 = vunpack.c.h.b16 %v380
        %v393 = vpack.c.b16 %v385, %v385
        %v394 = vpack.c.b16 %v386, %v386
        %v395 = vpack.c.b16 %v387, %v387
        %v396 = vpack.c.b16 %v388, %v388
        %v397 = vpack.c.b16 %v389, %v389
        %v398 = vpack.c.b16 %v390, %v390
        %v399 = vpack.c.b16 %v391, %v391
        %v400 = vpack.c.b16 %v392, %v392
        %vm409 = vcmask 257024
        %410 = vst.msk [vmem:[%s289] sm:$0xf] %vm409, %v393
        %411 = vst.msk [vmem:[%s289 + $0x4] sm:$0xf] %vm409, %v394
        %412 = vst.msk [vmem:[%s289 + $0x8] sm:$0xf] %vm409, %v395
        %413 = vst.msk [vmem:[%s289 + $0xc] sm:$0xf] %vm409, %v396
        %414 = vst.msk [vmem:[%s289 + $0x10] sm:$0xf] %vm409, %v397
        %415 = vst.msk [vmem:[%s289 + $0x14] sm:$0xf] %vm409, %v398
        %416 = vst.msk [vmem:[%s289 + $0x18] sm:$0xf] %vm409, %v399
        %417 = vst.msk [vmem:[%s289 + $0x1c] sm:$0xf] %vm409, %v400
        %s418 = smul.u32 8, %s18
        %p419 = scmp.lt.s32.totalorder %s17, 1
        %s420 = scalar_select %p419, %s17, 1
        %p421 = scmp.lt.s32.totalorder %s418, 7
        %s422 = scalar_select %p421, %s418, 7
        %s423 = smul.addr %s420, 8
        %s424 = sadd.s32 %s422, %s423
        %s425 = smul.addr %s424, 4
        %s426 = scalar_lea.vmem %s2, %s425
        // Predicated region
        $region70: #{sk_unit_forward.6} parent=64 // pred_check
          %p427 = pneg %p99
        $region71: #{sk_unit_forward.6} parent=64 // pred_check_branch
          %429 = sbr.rel (%p427) target = $region73
        $region72: #{sk_unit_forward.6} parent=64 // pred_region
          %s430 = smul.u32 8, %s18
        $region73: #{sk_unit_forward.6} parent=64 // pred_fallthru
          _
      $region65: #{sk_unit_forward.6} parent=5 // pred_fallthru
        _
      %p431 = scmp.le.s32.totalorder 2, %s8
      // Predicated region
      $region74: #{sk_unit_forward.6} parent=5 // pred_check
        %p432 = pneg %p431
      $region75: #{sk_unit_forward.6} parent=5 // pred_check_branch
        %434 = sbr.rel (%p432) target = $region77
      $region76: #{sk_unit_forward.6} parent=5 // pred_region
        %s435 = ssub.s32 %s8, 2
        // Predicated region
        $region78: #{sk_unit_forward.6} parent=76 // pred_check
          %p436 = pneg %p105
        $region79: #{sk_unit_forward.6} parent=76 // pred_check_branch
          %438 = sbr.rel (%p436) target = $region81
        $region80: #{sk_unit_forward.6} parent=76 // pred_region
          %s439 = smul.u32 8, %s20
          %p440 = scmp.lt.s32.totalorder %s19, 1
          %s441 = scalar_select %p440, %s19, 1
          %p442 = scmp.lt.s32.totalorder %s439, 7
          %s443 = scalar_select %p442, %s439, 7
          %s444 = smul.addr %s441, 8
          %s445 = sadd.s32 %s443, %s444
          %s446 = smul.addr %s445, 4
          %s447 = scalar_lea.vmem %s2, %s446
        $region81: #{sk_unit_forward.6} parent=76 // pred_fallthru
          _
      $region77: #{sk_unit_forward.6} parent=5 // pred_fallthru
        _
    $region6: #{sk_unit_forward.6} parent=1 // loop_footer
      %s12 = sadd.s32 1, %s8
    $region7: #{sk_unit_forward.6} parent=1 // loop_footer_branch
      %7 = sbr.rel target = $region3
    $region8: #{sk_unit_forward.6} parent=1 // loop_exit
      _

// kernel: sk_unit_forward.7
$region0: #{sk_unit_forward.7}
  #allocation0 [shape = 'u32[]', space=smem, size = 0x4, offset = 0x4, fixed_abs, tag = 'smem constant byte address 0x4 - core index']
  #allocation1 [shape = 'u32[144,128]{1,0:T(1,128)}', space=vmem, size = 0x12000, scoped, tag = 'internal scratch']
  %s0 = inlined_call_operand.vmem [shape: bf16[128,32], index: 0, kind: input, shape index: {}]
  %s1 = inlined_call_operand.vmem [shape: bf16[32,32], index: 1, kind: input, shape index: {}]
  %s2 = inlined_call_operand.vmem [shape: f32[1,32], index: 2, kind: input, shape index: {}]
  %s3 = inlined_call_operand.vmem [shape: f32[1,32], index: 3, kind: input, shape index: {}]
  %s4 = inlined_call_operand.vmem [shape: bf16[128,32], index: 4, kind: input, shape index: {}]
  %s5 = inlined_call_operand.vmem [shape: bf16[128,32], index: 5, kind: output, shape index: {}]
  %s6 = sld [smem:[#allocation0]]
  $region30: #{sk_unit_forward.7} parent=0
    _
  %s8 = ssub.s32 1, %s6
  %s9 = scalar_select 0, %s8, %s6
  // Predicated region
  $region2: #{sk_unit_forward.7} parent=0 // pred_check
    _
  $region3: #{sk_unit_forward.7} parent=0 // pred_check_branch
    %11 = sbr.rel (0) target = $region5
  $region4: #{sk_unit_forward.7} parent=0 // pred_region
    _
  $region5: #{sk_unit_forward.7} parent=0 // pred_fallthru
    _
  // Predicated region
  $region6: #{sk_unit_forward.7} parent=0 // pred_check
    _
  $region7: #{sk_unit_forward.7} parent=0 // pred_check_branch
    %13 = sbr.rel (0) target = $region9
  $region8: #{sk_unit_forward.7} parent=0 // pred_region
    _
  $region9: #{sk_unit_forward.7} parent=0 // pred_fallthru
    _
  // Predicated region
  $region10: #{sk_unit_forward.7} parent=0 // pred_check
    _
  $region11: #{sk_unit_forward.7} parent=0 // pred_check_branch
    %15 = sbr.rel (0) target = $region13
  $region12: #{sk_unit_forward.7} parent=0 // pred_region
    _
  $region13: #{sk_unit_forward.7} parent=0 // pred_fallthru
    _
  // Predicated region
  $region14: #{sk_unit_forward.7} parent=0 // pred_check
    _
  $region15: #{sk_unit_forward.7} parent=0 // pred_check_branch
    %17 = sbr.rel (0) target = $region17
  $region16: #{sk_unit_forward.7} parent=0 // pred_region
    _
  $region17: #{sk_unit_forward.7} parent=0 // pred_fallthru
    _
  // Predicated region
  $region18: #{sk_unit_forward.7} parent=0 // pred_check
    _
  $region19: #{sk_unit_forward.7} parent=0 // pred_check_branch
    %19 = sbr.rel (0) target = $region21
  $region20: #{sk_unit_forward.7} parent=0 // pred_region
    _
  $region21: #{sk_unit_forward.7} parent=0 // pred_fallthru
    _
  %v21 = vld [vmem:[%s0] sm:$0xf]
  %v22 = vld [vmem:[%s0 + $0x4] sm:$0xf]
  %v23 = vld [vmem:[%s0 + $0x8] sm:$0xf]
  %v24 = vld [vmem:[%s0 + $0xc] sm:$0xf]
  %v25 = vld [vmem:[%s0 + $0x10] sm:$0xf]
  %v26 = vld [vmem:[%s0 + $0x14] sm:$0xf]
  %v27 = vld [vmem:[%s0 + $0x18] sm:$0xf]
  %v28 = vld [vmem:[%s0 + $0x1c] sm:$0xf]
  %v29 = vld [vmem:[%s0 + $0x20] sm:$0xf]
  %v30 = vld [vmem:[%s0 + $0x24] sm:$0xf]
  %v31 = vld [vmem:[%s0 + $0x28] sm:$0xf]
  %v32 = vld [vmem:[%s0 + $0x2c] sm:$0xf]
  %v33 = vld [vmem:[%s0 + $0x30] sm:$0xf]
  %v34 = vld [vmem:[%s0 + $0x34] sm:$0xf]
  %v35 = vld [vmem:[%s0 + $0x38] sm:$0xf]
  %v36 = vld [vmem:[%s0 + $0x3c] sm:$0xf]
  %v37 = vld [vmem:[%s1] sm:$0xf]
  %v38 = vld [vmem:[%s1 + $0x4] sm:$0xf]
  %v39 = vld [vmem:[%s1 + $0x8] sm:$0xf]
  %v40 = vld [vmem:[%s1 + $0xc] sm:$0xf]
  %v57 = vunpack.c.l.b16 %v21
  %v58 = vunpack.c.l.b16 %v22
  %v59 = vunpack.c.l.b16 %v23
  %v60 = vunpack.c.l.b16 %v24
  %v61 = vunpack.c.l.b16 %v25
  %v62 = vunpack.c.l.b16 %v26
  %v63 = vunpack.c.l.b16 %v27
  %v64 = vunpack.c.l.b16 %v28
  %v65 = vunpack.c.l.b16 %v29
  %v66 = vunpack.c.l.b16 %v30
  %v67 = vunpack.c.l.b16 %v31
  %v68 = vunpack.c.l.b16 %v32
  %v69 = vunpack.c.l.b16 %v33
  %v70 = vunpack.c.l.b16 %v34
  %v71 = vunpack.c.l.b16 %v35
  %v72 = vunpack.c.l.b16 %v36
  %v73 = vpack.c.b16 %v58, %v57
  %v74 = vpack.c.b16 %v60, %v59
  %v75 = vpack.c.b16 %v62, %v61
  %v76 = vpack.c.b16 %v64, %v63
  %v77 = vpack.c.b16 %v66, %v65
  %v78 = vpack.c.b16 %v68, %v67
  %v79 = vpack.c.b16 %v70, %v69
  %v80 = vpack.c.b16 %v72, %v71
  %v85 = vunpack.c.l.b16 %v37
  %v86 = vunpack.c.l.b16 %v38
  %v87 = vunpack.c.l.b16 %v39
  %v88 = vunpack.c.l.b16 %v40
  %v89 = vpack.c.b16 %v86, %v85
  %v90 = vpack.c.b16 %v88, %v87
  %vm93 = vcmask 261120
  %v95 = vsel %vm93, %v73, 0
  %v98 = vsel %vm93, %v74, 0
  %v101 = vsel %vm93, %v75, 0
  %v104 = vsel %vm93, %v76, 0
  %v107 = vsel %vm93, %v77, 0
  %v110 = vsel %vm93, %v78, 0
  %v113 = vsel %vm93, %v79, 0
  %v116 = vsel %vm93, %v80, 0
  %118 = vmatprep.subr.bf16.mxu0 0
  %119 = vmatpush1.bf16.msra.mxu0 %v89
  %120 = vmatprep.subr.bf16.mxu0 0
  %121 = vmatpush1.bf16.msra.mxu0 %v90
  %122 = vmatprep.subr.bf16.mxu0 0
  %123 = vmatpush1.bf16.msra.mxu0 0
  %124 = vmatprep.subr.bf16.mxu0 0
  %125 = vmatpush1.bf16.msra.mxu0 0
  %126 = vmatprep.subr.bf16.mxu0 0
  %127 = vmatpush1.bf16.msra.mxu0 0
  %128 = vmatprep.subr.bf16.mxu0 0
  %129 = vmatpush1.bf16.msra.mxu0 0
  %130 = vmatprep.subr.bf16.mxu0 0
  %131 = vmatpush1.bf16.msra.mxu0 0
  %132 = vmatprep.subr.bf16.mxu0 0
  %133 = vmatpush1.bf16.msra.mxu0 0
  %134 = vmatprep.subr.bf16.mxu0 0
  %135 = vmatpush1.bf16.msra.mxu0 0
  %136 = vmatprep.subr.bf16.mxu0 0
  %137 = vmatpush1.bf16.msra.mxu0 0
  %138 = vmatprep.subr.bf16.mxu0 0
  %139 = vmatpush1.bf16.msra.mxu0 0
  %140 = vmatprep.subr.bf16.mxu0 0
  %141 = vmatpush1.bf16.msra.mxu0 0
  %142 = vmatprep.subr.bf16.mxu0 0
  %143 = vmatpush1.bf16.msra.mxu0 0
  %144 = vmatprep.subr.bf16.mxu0 0
  %145 = vmatpush1.bf16.msra.mxu0 0
  %146 = vmatprep.subr.bf16.mxu0 0
  %147 = vmatpush1.bf16.msra.mxu0 0
  %148 = vmatprep.subr.bf16.mxu0 0
  %149 = vmatpush1.bf16.msra.mxu0 0
  %150 = vmatprep.mubr.bf16.mxu0 0
  %151 = vmatmul.mubr.bf16.gmra.mrb[0].mxu0 %v95
  %v152 = vpop.f32.mrb[0].mxu0
  %v153 = vadd.f32 0.0, %v152
  %v154 = vpop.f32.mrb[0].mxu0
  %v155 = vpop.f32.mrb[0].mxu0
  %v156 = vadd.f32 0.0, %v155
  %v157 = vpop.f32.mrb[0].mxu0
  %158 = vmatprep.mubr.bf16.mxu0 0
  %159 = vmatmul.mubr.bf16.gmra.mrb[0].mxu0 %v98
  %v160 = vpop.f32.mrb[0].mxu0
  %v161 = vadd.f32 0.0, %v160
  %v162 = vpop.f32.mrb[0].mxu0
  %v163 = vpop.f32.mrb[0].mxu0
  %v164 = vadd.f32 0.0, %v163
  %v165 = vpop.f32.mrb[0].mxu0
  %166 = vmatprep.mubr.bf16.mxu0 0
  %167 = vmatmul.mubr.bf16.gmra.mrb[0].mxu0 %v101
  %v168 = vpop.f32.mrb[0].mxu0
  %v169 = vadd.f32 0.0, %v168
  %v170 = vpop.f32.mrb[0].mxu0
  %v171 = vpop.f32.mrb[0].mxu0
  %v172 = vadd.f32 0.0, %v171
  %v173 = vpop.f32.mrb[0].mxu0
  %174 = vmatprep.mubr.bf16.mxu0 0
  %175 = vmatmul.mubr.bf16.gmra.mrb[0].mxu0 %v104
  %v176 = vpop.f32.mrb[0].mxu0
  %v177 = vadd.f32 0.0, %v176
  %v178 = vpop.f32.mrb[0].mxu0
  %v179 = vpop.f32.mrb[0].mxu0
  %v180 = vadd.f32 0.0, %v179
  %v181 = vpop.f32.mrb[0].mxu0
  %182 = vmatprep.mubr.bf16.mxu0 0
  %183 = vmatmul.mubr.bf16.gmra.mrb[0].mxu0 %v107
  %v184 = vpop.f32.mrb[0].mxu0
  %v185 = vadd.f32 0.0, %v184
  %v186 = vpop.f32.mrb[0].mxu0
  %v187 = vpop.f32.mrb[0].mxu0
  %v188 = vadd.f32 0.0, %v187
  %v189 = vpop.f32.mrb[0].mxu0
  %190 = vmatprep.mubr.bf16.mxu0 0
  %191 = vmatmul.mubr.bf16.gmra.mrb[0].mxu0 %v110
  %v192 = vpop.f32.mrb[0].mxu0
  %v193 = vadd.f32 0.0, %v192
  %v194 = vpop.f32.mrb[0].mxu0
  %v195 = vpop.f32.mrb[0].mxu0
  %v196 = vadd.f32 0.0, %v195
  %v197 = vpop.f32.mrb[0].mxu0
  %198 = vmatprep.mubr.bf16.mxu0 0
  %199 = vmatmul.mubr.bf16.gmra.mrb[0].mxu0 %v113
  %v200 = vpop.f32.mrb[0].mxu0
  %v201 = vadd.f32 0.0, %v200
  %v202 = vpop.f32.mrb[0].mxu0
  %v203 = vpop.f32.mrb[0].mxu0
  %v204 = vadd.f32 0.0, %v203
  %v205 = vpop.f32.mrb[0].mxu0
  %206 = vmatprep.mubr.bf16.mxu0 0
  %207 = vmatmul.mubr.bf16.gmra.mrb[0].mxu0 %v116
  %v208 = vpop.f32.mrb[0].mxu0
  %v209 = vadd.f32 0.0, %v208
  %v210 = vpop.f32.mrb[0].mxu0
  %v211 = vpop.f32.mrb[0].mxu0
  %v212 = vadd.f32 0.0, %v211
  %v213 = vpop.f32.mrb[0].mxu0
  %214 = vdwg.mxu0
  %v215 = vld [vmem:[%s2] sm:$0x1]
  %v217 = vlaneseq
  %v218 = vshrl.u32 %v217, 7
  %v219 = vsub.s32 0, %v218
  %v220 = vrot.slane %v215, %v219
  %v222 = vmul.f32 %v153, %v220
  %v223 = vmul.f32 %v156, %v220
  %v224 = vmul.f32 %v161, %v220
  %v225 = vmul.f32 %v164, %v220
  %v226 = vmul.f32 %v169, %v220
  %v227 = vmul.f32 %v172, %v220
  %v228 = vmul.f32 %v177, %v220
  %v229 = vmul.f32 %v180, %v220
  %v230 = vmul.f32 %v185, %v220
  %v231 = vmul.f32 %v188, %v220
  %v232 = vmul.f32 %v193, %v220
  %v233 = vmul.f32 %v196, %v220
  %v234 = vmul.f32 %v201, %v220
  %v235 = vmul.f32 %v204, %v220
  %v236 = vmul.f32 %v209, %v220
  %v237 = vmul.f32 %v212, %v220
  %v238 = vld [vmem:[%s3] sm:$0x1]
  %v240 = vlaneseq
  %v241 = vshrl.u32 %v240, 7
  %v242 = vsub.s32 0, %v241
  %v243 = vrot.slane %v238, %v242
  %v245 = vadd.f32 %v222, %v243
  %v246 = vadd.f32 %v223, %v243
  %v247 = vadd.f32 %v224, %v243
  %v248 = vadd.f32 %v225, %v243
  %v249 = vadd.f32 %v226, %v243
  %v250 = vadd.f32 %v227, %v243
  %v251 = vadd.f32 %v228, %v243
  %v252 = vadd.f32 %v229, %v243
  %v253 = vadd.f32 %v230, %v243
  %v254 = vadd.f32 %v231, %v243
  %v255 = vadd.f32 %v232, %v243
  %v256 = vadd.f32 %v233, %v243
  %v257 = vadd.f32 %v234, %v243
  %v258 = vadd.f32 %v235, %v243
  %v259 = vadd.f32 %v236, %v243
  %v260 = vadd.f32 %v237, %v243
  %v261 = vld [vmem:[%s4] sm:$0xf]
  %v262 = vld [vmem:[%s4 + $0x4] sm:$0xf]
  %v263 = vld [vmem:[%s4 + $0x8] sm:$0xf]
  %v264 = vld [vmem:[%s4 + $0xc] sm:$0xf]
  %v265 = vld [vmem:[%s4 + $0x10] sm:$0xf]
  %v266 = vld [vmem:[%s4 + $0x14] sm:$0xf]
  %v267 = vld [vmem:[%s4 + $0x18] sm:$0xf]
  %v268 = vld [vmem:[%s4 + $0x1c] sm:$0xf]
  %v269 = vld [vmem:[%s4 + $0x20] sm:$0xf]
  %v270 = vld [vmem:[%s4 + $0x24] sm:$0xf]
  %v271 = vld [vmem:[%s4 + $0x28] sm:$0xf]
  %v272 = vld [vmem:[%s4 + $0x2c] sm:$0xf]
  %v273 = vld [vmem:[%s4 + $0x30] sm:$0xf]
  %v274 = vld [vmem:[%s4 + $0x34] sm:$0xf]
  %v275 = vld [vmem:[%s4 + $0x38] sm:$0xf]
  %v276 = vld [vmem:[%s4 + $0x3c] sm:$0xf]
  %v277 = vunpack.c.l.bf16 %v261
  %v278 = vunpack.c.l.bf16 %v262
  %v279 = vunpack.c.l.bf16 %v263
  %v280 = vunpack.c.l.bf16 %v264
  %v281 = vunpack.c.l.bf16 %v265
  %v282 = vunpack.c.l.bf16 %v266
  %v283 = vunpack.c.l.bf16 %v267
  %v284 = vunpack.c.l.bf16 %v268
  %v285 = vunpack.c.l.bf16 %v269
  %v286 = vunpack.c.l.bf16 %v270
  %v287 = vunpack.c.l.bf16 %v271
  %v288 = vunpack.c.l.bf16 %v272
  %v289 = vunpack.c.l.bf16 %v273
  %v290 = vunpack.c.l.bf16 %v274
  %v291 = vunpack.c.l.bf16 %v275
  %v292 = vunpack.c.l.bf16 %v276
  %v293 = vadd.f32 %v245, %v277
  %v294 = vadd.f32 %v246, %v278
  %v295 = vadd.f32 %v247, %v279
  %v296 = vadd.f32 %v248, %v280
  %v297 = vadd.f32 %v249, %v281
  %v298 = vadd.f32 %v250, %v282
  %v299 = vadd.f32 %v251, %v283
  %v300 = vadd.f32 %v252, %v284
  %v301 = vadd.f32 %v253, %v285
  %v302 = vadd.f32 %v254, %v286
  %v303 = vadd.f32 %v255, %v287
  %v304 = vadd.f32 %v256, %v288
  %v305 = vadd.f32 %v257, %v289
  %v306 = vadd.f32 %v258, %v290
  %v307 = vadd.f32 %v259, %v291
  %v308 = vadd.f32 %v260, %v292
  %v309 = vmax.f32 %v293, 0.0
  %v310 = vmax.f32 %v294, 0.0
  %v311 = vmax.f32 %v295, 0.0
  %v312 = vmax.f32 %v296, 0.0
  %v313 = vmax.f32 %v297, 0.0
  %v314 = vmax.f32 %v298, 0.0
  %v315 = vmax.f32 %v299, 0.0
  %v316 = vmax.f32 %v300, 0.0
  %v317 = vmax.f32 %v301, 0.0
  %v318 = vmax.f32 %v302, 0.0
  %v319 = vmax.f32 %v303, 0.0
  %v320 = vmax.f32 %v304, 0.0
  %v321 = vmax.f32 %v305, 0.0
  %v322 = vmax.f32 %v306, 0.0
  %v323 = vmax.f32 %v307, 0.0
  %v324 = vmax.f32 %v308, 0.0
  %v325 = vpack.c.bf16 %v310, %v309
  %v326 = vpack.c.bf16 %v312, %v311
  %v327 = vpack.c.bf16 %v314, %v313
  %v328 = vpack.c.bf16 %v316, %v315
  %v329 = vpack.c.bf16 %v318, %v317
  %v330 = vpack.c.bf16 %v320, %v319
  %v331 = vpack.c.bf16 %v322, %v321
  %v332 = vpack.c.bf16 %v324, %v323
  %v341 = vunpack.c.l.b16 %v325
  %v342 = vunpack.c.h.b16 %v325
  %v343 = vunpack.c.l.b16 %v326
  %v344 = vunpack.c.h.b16 %v326
  %v345 = vunpack.c.l.b16 %v327
  %v346 = vunpack.c.h.b16 %v327
  %v347 = vunpack.c.l.b16 %v328
  %v348 = vunpack.c.h.b16 %v328
  %v349 = vunpack.c.l.b16 %v329
  %v350 = vunpack.c.h.b16 %v329
  %v351 = vunpack.c.l.b16 %v330
  %v352 = vunpack.c.h.b16 %v330
  %v353 = vunpack.c.l.b16 %v331
  %v354 = vunpack.c.h.b16 %v331
  %v355 = vunpack.c.l.b16 %v332
  %v356 = vunpack.c.h.b16 %v332
  %v357 = vpack.c.b16 %v341, %v341
  %v358 = vpack.c.b16 %v342, %v342
  %v359 = vpack.c.b16 %v343, %v343
  %v360 = vpack.c.b16 %v344, %v344
  %v361 = vpack.c.b16 %v345, %v345
  %v362 = vpack.c.b16 %v346, %v346
  %v363 = vpack.c.b16 %v347, %v347
  %v364 = vpack.c.b16 %v348, %v348
  %v365 = vpack.c.b16 %v349, %v349
  %v366 = vpack.c.b16 %v350, %v350
  %v367 = vpack.c.b16 %v351, %v351
  %v368 = vpack.c.b16 %v352, %v352
  %v369 = vpack.c.b16 %v353, %v353
  %v370 = vpack.c.b16 %v354, %v354
  %v371 = vpack.c.b16 %v355, %v355
  %v372 = vpack.c.b16 %v356, %v356
  %vm389 = vcmask 257024
  %390 = vst.msk [vmem:[%s5] sm:$0xf] %vm389, %v357
  %391 = vst.msk [vmem:[%s5 + $0x4] sm:$0xf] %vm389, %v358
  %392 = vst.msk [vmem:[%s5 + $0x8] sm:$0xf] %vm389, %v359
  %393 = vst.msk [vmem:[%s5 + $0xc] sm:$0xf] %vm389, %v360
  %394 = vst.msk [vmem:[%s5 + $0x10] sm:$0xf] %vm389, %v361
  %395 = vst.msk [vmem:[%s5 + $0x14] sm:$0xf] %vm389, %v362
  %396 = vst.msk [vmem:[%s5 + $0x18] sm:$0xf] %vm389, %v363
  %397 = vst.msk [vmem:[%s5 + $0x1c] sm:$0xf] %vm389, %v364
  %398 = vst.msk [vmem:[%s5 + $0x20] sm:$0xf] %vm389, %v365
  %399 = vst.msk [vmem:[%s5 + $0x24] sm:$0xf] %vm389, %v366
  %400 = vst.msk [vmem:[%s5 + $0x28] sm:$0xf] %vm389, %v367
  %401 = vst.msk [vmem:[%s5 + $0x2c] sm:$0xf] %vm389, %v368
  %402 = vst.msk [vmem:[%s5 + $0x30] sm:$0xf] %vm389, %v369
  %403 = vst.msk [vmem:[%s5 + $0x34] sm:$0xf] %vm389, %v370
  %404 = vst.msk [vmem:[%s5 + $0x38] sm:$0xf] %vm389, %v371
  %405 = vst.msk [vmem:[%s5 + $0x3c] sm:$0xf] %vm389, %v372
  // Predicated region
  $region22: #{sk_unit_forward.7} parent=0 // pred_check
    _
  $region23: #{sk_unit_forward.7} parent=0 // pred_check_branch
    %407 = sbr.rel (0) target = $region25
  $region24: #{sk_unit_forward.7} parent=0 // pred_region
    _
  $region25: #{sk_unit_forward.7} parent=0 // pred_fallthru
    _
  // Predicated region
  $region26: #{sk_unit_forward.7} parent=0 // pred_check
    _
  $region27: #{sk_unit_forward.7} parent=0 // pred_check_branch
    %409 = sbr.rel (0) target = $region29
  $region28: #{sk_unit_forward.7} parent=0 // pred_region
    _
  $region29: #{sk_unit_forward.7} parent=0 // pred_fallthru
    _

// kernel: sk_unit_forward.5
$region0: #{sk_unit_forward.5}
  #allocation0 [shape = 'u32[]', space=smem, size = 0x4, offset = 0x4, fixed_abs, tag = 'smem constant byte address 0x4 - core index']
  #allocation1 [shape = 'u32[144,128]{1,0:T(1,128)}', space=vmem, size = 0x12000, scoped, tag = 'internal scratch']
  %s0 = inlined_call_operand.vmem [shape: bf16[2,8,8,32], index: 0, kind: input, shape index: {}]
  %s1 = inlined_call_operand.vmem [shape: bf16[2,9,32,32], index: 1, kind: input, shape index: {}]
  %s2 = inlined_call_operand.vmem [shape: f32[2,32], index: 2, kind: input, shape index: {}]
  %s3 = inlined_call_operand.vmem [shape: f32[2,32], index: 3, kind: input, shape index: {}]
  %s4 = inlined_call_operand.vmem [shape: bf16[2,2,64,32], index: 4, kind: output, shape index: {0}]
  %s5 = inlined_call_operand.vmem [shape: f32[2,2,1,32], index: 5, kind: output, shape index: {1}]
  %6 = xla_tuple %s4, %s5
  %s7 = sld [smem:[#allocation0]]
  $region124: #{sk_unit_forward.5} parent=0
    _
  %s9 = ssub.s32 1, %s7
  %s10 = scalar_select 0, %s9, %s7
  $region1: #{sk_unit_forward.5} parent=0
    #allocation2 [shape = 'u8[65536]{0}', space=vmem, size = 0x10000, scoped, tag = 'output window, operand 0']
    #allocation3 [shape = 'u8[2048]{0}', space=vmem, size = 0x800, scoped, tag = 'output window, operand 1']
    loop: start=0, step=1, limit=4
    $region2: #{sk_unit_forward.5} parent=1 // loop_pre_header
      _
    $region3: #{sk_unit_forward.5} parent=1 // loop_header
      %s12 = sphi 0, %s16
      %p13 = scmp.ge.s32.totalorder %s12, 4
      %s22 = sphi 0, %s24
      %s25 = sphi 0, %s22
      %s26 = sphi 0, %s25
      %s42 = sphi 0, %s26
      %s46 = sphi 0, %s46
      %s48 = sphi 0, %s46
      %s49 = sphi 0, %s48
      %s63 = sphi 0, %s49
      %s67 = sphi 0, %s67
      %s69 = sphi 0, %s67
      %s70 = sphi 0, %s69
      %s84 = sphi 0, %s70
      %s88 = sphi 0, %s88
      %s90 = sphi 0, %s88
      %s91 = sphi 0, %s90
      %s105 = sphi 0, %s91
      %s111 = sphi 0, %s113
      %s114 = sphi 0, %s111
      %s115 = sphi 0, %s114
      %s131 = sphi 0, %s115
      %s137 = sphi 0, %s139
      %s140 = sphi 0, %s137
      %s141 = sphi 0, %s140
      %s157 = sphi 0, %s141
    $region4: #{sk_unit_forward.5} parent=1 // loop_header_branch
      %15 = sbr.rel (%p13) target = $region8
    $region5: #{sk_unit_forward.5} parent=1 // loop_body
      %s17 = ssub.s32 %s12, 1
      %s18 = ssub.s32 %s12, 2
      %s19 = sadd.s32 %s12, 1
      %s20 = ssub.s32 %s12, %s19
      %p21 = scmp.eq.s32.totalorder %s20, 0
      %s23 = sadd.s32 %s22, 1
      %s24 = scalar_select %p21, %s22, %s23
      %p27 = pneg %p21
      %p28 = scmp.eq.s32.totalorder %s12, 1
      %p29 = por %p27, %p28
      %p30 = scmp.ne.s32.totalorder %s22, %s25
      %p31 = scmp.eq.s32.totalorder %s12, 0
      %p32 = por %p30, %p31
      %p33 = scmp.ne.s32.totalorder %s22, %s25
      %p34 = scmp.eq.s32.totalorder %s17, 1
      %p35 = por %p33, %p34
      %p36 = scmp.ne.s32.totalorder %s25, %s26
      %p37 = scmp.eq.s32.totalorder %s17, 0
      %p38 = por %p36, %p37
      %p39 = scmp.ne.s32.totalorder %s25, %s26
      %p40 = scmp.eq.s32.totalorder %s18, 1
      %p41 = por %p39, %p40
      %p43 = scmp.ne.s32.totalorder %s26, %s42
      %p44 = scmp.eq.s32.totalorder %s18, 0
      %p45 = por %p43, %p44
      %s47 = sadd.s32 %s46, 1
      %p50 = scmp.eq.s32.totalorder %s12, 1
      %p51 = scmp.ne.s32.totalorder %s46, %s48
      %p52 = scmp.eq.s32.totalorder %s12, 0
      %p53 = por %p51, %p52
      %p54 = scmp.ne.s32.totalorder %s46, %s48
      %p55 = scmp.eq.s32.totalorder %s17, 1
      %p56 = por %p54, %p55
      %p57 = scmp.ne.s32.totalorder %s48, %s49
      %p58 = scmp.eq.s32.totalorder %s17, 0
      %p59 = por %p57, %p58
      %p60 = scmp.ne.s32.totalorder %s48, %s49
      %p61 = scmp.eq.s32.totalorder %s18, 1
      %p62 = por %p60, %p61
      %p64 = scmp.ne.s32.totalorder %s49, %s63
      %p65 = scmp.eq.s32.totalorder %s18, 0
      %p66 = por %p64, %p65
      %s68 = sadd.s32 %s67, 1
      %p71 = scmp.eq.s32.totalorder %s12, 1
      %p72 = scmp.ne.s32.totalorder %s67, %s69
      %p73 = scmp.eq.s32.totalorder %s12, 0
      %p74 = por %p72, %p73
      %p75 = scmp.ne.s32.totalorder %s67, %s69
      %p76 = scmp.eq.s32.totalorder %s17, 1
      %p77 = por %p75, %p76
      %p78 = scmp.ne.s32.totalorder %s69, %s70
      %p79 = scmp.eq.s32.totalorder %s17, 0
      %p80 = por %p78, %p79
      %p81 = scmp.ne.s32.totalorder %s69, %s70
      %p82 = scmp.eq.s32.totalorder %s18, 1
      %p83 = por %p81, %p82
      %p85 = scmp.ne.s32.totalorder %s70, %s84
      %p86 = scmp.eq.s32.totalorder %s18, 0
      %p87 = por %p85, %p86
      %s89 = sadd.s32 %s88, 1
      %p92 = scmp.eq.s32.totalorder %s12, 1
      %p93 = scmp.ne.s32.totalorder %s88, %s90
      %p94 = scmp.eq.s32.totalorder %s12, 0
      %p95 = por %p93, %p94
      %p96 = scmp.ne.s32.totalorder %s88, %s90
      %p97 = scmp.eq.s32.totalorder %s17, 1
      %p98 = por %p96, %p97
      %p99 = scmp.ne.s32.totalorder %s90, %s91
      %p100 = scmp.eq.s32.totalorder %s17, 0
      %p101 = por %p99, %p100
      %p102 = scmp.ne.s32.totalorder %s90, %s91
      %p103 = scmp.eq.s32.totalorder %s18, 1
      %p104 = por %p102, %p103
      %p106 = scmp.ne.s32.totalorder %s91, %s105
      %p107 = scmp.eq.s32.totalorder %s18, 0
      %p108 = por %p106, %p107
      %s109 = ssub.s32 %s12, %s19
      %p110 = scmp.eq.s32.totalorder %s109, 0
      %s112 = sadd.s32 %s111, 1
      %s113 = scalar_select %p110, %s111, %s112
      %p116 = pneg %p110
      %p117 = scmp.eq.s32.totalorder %s12, 1
      %p118 = por %p116, %p117
      %p119 = scmp.ne.s32.totalorder %s111, %s114
      %p120 = scmp.eq.s32.totalorder %s12, 0
      %p121 = por %p119, %p120
      %p122 = scmp.ne.s32.totalorder %s111, %s114
      %p123 = scmp.eq.s32.totalorder %s17, 1
      %p124 = por %p122, %p123
      %p125 = scmp.ne.s32.totalorder %s114, %s115
      %p126 = scmp.eq.s32.totalorder %s17, 0
      %p127 = por %p125, %p126
      %p128 = scmp.ne.s32.totalorder %s114, %s115
      %p129 = scmp.eq.s32.totalorder %s18, 1
      %p130 = por %p128, %p129
      %p132 = scmp.ne.s32.totalorder %s115, %s131
      %p133 = scmp.eq.s32.totalorder %s18, 0
      %p134 = por %p132, %p133
      %s135 = ssub.s32 %s12, %s19
      %p136 = scmp.eq.s32.totalorder %s135, 0
      %s138 = sadd.s32 %s137, 1
      %s139 = scalar_select %p136, %s137, %s138
      %p142 = pneg %p136
      %p143 = scmp.eq.s32.totalorder %s12, 1
      %p144 = por %p142, %p143
      %p145 = scmp.ne.s32.totalorder %s137, %s140
      %p146 = scmp.eq.s32.totalorder %s12, 0
      %p147 = por %p145, %p146
      %p148 = scmp.ne.s32.totalorder %s137, %s140
      %p149 = scmp.eq.s32.totalorder %s17, 1
      %p150 = por %p148, %p149
      %p151 = scmp.ne.s32.totalorder %s140, %s141
      %p152 = scmp.eq.s32.totalorder %s17, 0
      %p153 = por %p151, %p152
      %p154 = scmp.ne.s32.totalorder %s140, %s141
      %p155 = scmp.eq.s32.totalorder %s18, 1
      %p156 = por %p154, %p155
      %p158 = scmp.ne.s32.totalorder %s141, %s157
      %p159 = scmp.eq.s32.totalorder %s18, 0
      %p160 = por %p158, %p159
      %p161 = scmp.le.s32.totalorder 1, %s12
      %p162 = scmp.lt.s32.totalorder %s12, 3
      %p163 = pnand %p161, %p162
      %p164 = pneg %p163
      // Predicated region
      $region9: #{sk_unit_forward.5} parent=5 // pred_check
        _
      $region10: #{sk_unit_forward.5} parent=5 // pred_check_branch
        %166 = sbr.rel (%p163) target = $region12
      $region11: #{sk_unit_forward.5} parent=5 // pred_region
        %s167 = ssub.s32 %s12, 1
        // Predicated region
        $region13: #{sk_unit_forward.5} parent=11 // pred_check
          %p168 = pneg %p59
        $region14: #{sk_unit_forward.5} parent=11 // pred_check_branch
          %170 = sbr.rel (%p168) target = $region16
        $region15: #{sk_unit_forward.5} parent=11 // pred_region
          _
        $region16: #{sk_unit_forward.5} parent=11 // pred_fallthru
          _
        // Predicated region
        $region17: #{sk_unit_forward.5} parent=11 // pred_check
          %p171 = pneg %p80
        $region18: #{sk_unit_forward.5} parent=11 // pred_check_branch
          %173 = sbr.rel (%p171) target = $region20
        $region19: #{sk_unit_forward.5} parent=11 // pred_region
          _
        $region20: #{sk_unit_forward.5} parent=11 // pred_fallthru
          _
        // Predicated region
        $region21: #{sk_unit_forward.5} parent=11 // pred_check
          %p174 = pneg %p101
        $region22: #{sk_unit_forward.5} parent=11 // pred_check_branch
          %176 = sbr.rel (%p174) target = $region24
        $region23: #{sk_unit_forward.5} parent=11 // pred_region
          _
        $region24: #{sk_unit_forward.5} parent=11 // pred_fallthru
          _
      $region12: #{sk_unit_forward.5} parent=5 // pred_fallthru
        _
      %p177 = scmp.lt.s32.totalorder %s12, 2
      // Predicated region
      $region25: #{sk_unit_forward.5} parent=5 // pred_check
        %p178 = pneg %p177
      $region26: #{sk_unit_forward.5} parent=5 // pred_check_branch
        %180 = sbr.rel (%p178) target = $region28
      $region27: #{sk_unit_forward.5} parent=5 // pred_region
        // Predicated region
        $region29: #{sk_unit_forward.5} parent=27 // pred_check
          %p181 = pneg %p32
        $region30: #{sk_unit_forward.5} parent=27 // pred_check_branch
          %183 = sbr.rel (%p181) target = $region32
        $region31: #{sk_unit_forward.5} parent=27 // pred_region
          %p184 = scmp.lt.s32.totalorder %s12, 1
          %s185 = scalar_select %p184, %s12, 1
          %s186 = smul.addr %s185, 8
          %s187 = smul.addr %s186, 4
          %s188 = scalar_lea.vmem %s0, %s187
        $region32: #{sk_unit_forward.5} parent=27 // pred_fallthru
          _
      $region28: #{sk_unit_forward.5} parent=5 // pred_fallthru
        _
      %p189 = scmp.le.s32.totalorder 1, %s12
      %p190 = scmp.lt.s32.totalorder %s12, 3
      %p191 = pnand %p189, %p190
      %p192 = pneg %p191
      // Predicated region
      $region33: #{sk_unit_forward.5} parent=5 // pred_check
        _
      $region34: #{sk_unit_forward.5} parent=5 // pred_check_branch
        %194 = sbr.rel (%p191) target = $region36
      $region35: #{sk_unit_forward.5} parent=5 // pred_region
        %s195 = ssub.s32 %s12, 1
        %p196 = scmp.lt.s32.totalorder %s17, 1
        %s197 = scalar_select %p196, %s17, 1
        %s198 = smul.addr %s197, 8
        %s199 = smul.addr %s198, 4
        %s200 = scalar_lea.vmem %s0, %s199
        %p201 = pneg %p38
        %p202 = pneg %p35
        %p203 = pneg %p59
        %p204 = pneg %p56
        %p205 = pneg %p80
        %p206 = pneg %p77
        %p207 = pneg %p101
        %p208 = pneg %p98
        %p209 = pneg %p127
        %p210 = pneg %p124
        %s211 = sand.u32 %s114, 1
        %s212 = sand.u32 %s114, 1
        %s213 = smul.addr %s212, 64
        %s214 = scalar_lea.vmem [#allocation2], %s213
        %p215 = pneg %p153
        %p216 = pneg %p150
        %s217 = sand.u32 %s140, 1
        %s218 = sand.u32 %s140, 1
        %s219 = smul.addr %s218, 2
        %s220 = scalar_lea.vmem [#allocation3], %s219
        %p221 = scmp.lt.s32.totalorder %s17, 1
        %s222 = scalar_select %p221, %s17, 1
        %s223 = smul.addr %s222, 8
        %s224 = smul.addr %s223, 4
        %s225 = scalar_lea.vmem %s0, %s224
        %v227 = vld [vmem:[%s225] sm:$0xf]
        %v228 = vld [vmem:[%s225 + $0x4] sm:$0xf]
        %v229 = vld [vmem:[%s225 + $0x8] sm:$0xf]
        %v230 = vld [vmem:[%s225 + $0xc] sm:$0xf]
        %v231 = vld [vmem:[%s225 + $0x10] sm:$0xf]
        %v232 = vld [vmem:[%s225 + $0x14] sm:$0xf]
        %v233 = vld [vmem:[%s225 + $0x18] sm:$0xf]
        %v234 = vld [vmem:[%s225 + $0x1c] sm:$0xf]
        %v243 = vunpack.c.l.b16 %v227
        %v244 = vunpack.c.l.b16 %v228
        %v245 = vunpack.c.l.b16 %v229
        %v246 = vunpack.c.l.b16 %v230
        %v247 = vunpack.c.l.b16 %v231
        %v248 = vunpack.c.l.b16 %v232
        %v249 = vunpack.c.l.b16 %v233
        %v250 = vunpack.c.l.b16 %v234
        %v251 = vpack.c.b16 %v243, %v243
        %v252 = vpack.c.b16 %v244, %v244
        %v253 = vpack.c.b16 %v245, %v245
        %v254 = vpack.c.b16 %v246, %v246
        %v255 = vpack.c.b16 %v247, %v247
        %v256 = vpack.c.b16 %v248, %v248
        %v257 = vpack.c.b16 %v249, %v249
        %v258 = vpack.c.b16 %v250, %v250
        %v259 = vrot.slane %v251, 7
        %v260 = vrot.slane %v252, 7
        %v261 = vrot.slane %v253, 7
        %v262 = vrot.slane %v254, 7
        %v263 = vrot.slane %v255, 7
        %v264 = vrot.slane %v256, 7
        %v265 = vrot.slane %v257, 7
        %v266 = vrot.slane %v258, 7
        %vm267 = vcmask 1040384
        %v270 = vsel %vm267, 0, %v259
        %v272 = vsel %vm267, 0, %v260
        %v274 = vsel %vm267, 0, %v261
        %v276 = vsel %vm267, 0, %v262
        %v278 = vsel %vm267, 0, %v263
        %v280 = vsel %vm267, 0, %v264
        %v282 = vsel %vm267, 0, %v265
        %v284 = vsel %vm267, 0, %v266
        %vm285 = vcmask 1044480
        %v286 = vsel %vm285, %v270, 0
        %v287 = vsel %vm285, %v272, 0
        %v288 = vsel %vm285, %v274, 0
        %v289 = vsel %vm285, %v276, 0
        %v290 = vsel %vm285, %v278, 0
        %v291 = vsel %vm285, %v280, 0
        %v292 = vsel %vm285, %v282, 0
        %v293 = vsel %vm285, %v284, 0
        %v302 = vunpack.c.l.b16 0
        %v303 = vunpack.c.h.b16 0
        %v304 = vunpack.c.l.b16 %v286
        %v305 = vunpack.c.h.b16 %v286
        %v306 = vunpack.c.l.b16 %v287
        %v307 = vunpack.c.h.b16 %v287
        %v308 = vunpack.c.l.b16 %v288
        %v309 = vunpack.c.h.b16 %v288
        %v310 = vunpack.c.l.b16 %v289
        %v311 = vunpack.c.h.b16 %v289
        %v312 = vunpack.c.l.b16 %v290
        %v313 = vunpack.c.h.b16 %v290
        %v314 = vunpack.c.l.b16 %v291
        %v315 = vunpack.c.h.b16 %v291
        %v316 = vunpack.c.l.b16 %v292
        %v317 = vunpack.c.h.b16 %v292
        %v318 = vpack.c.b16 %v302, %v302
        %v319 = vpack.c.b16 %v303, %v303
        %v320 = vpack.c.b16 %v304, %v304
        %v321 = vpack.c.b16 %v305, %v305
        %v322 = vpack.c.b16 %v306, %v306
        %v323 = vpack.c.b16 %v307, %v307
        %v324 = vpack.c.b16 %v308, %v308
        %v325 = vpack.c.b16 %v309, %v309
        %v326 = vpack.c.b16 %v310, %v310
        %v327 = vpack.c.b16 %v311, %v311
        %v328 = vpack.c.b16 %v312, %v312
        %v329 = vpack.c.b16 %v313, %v313
        %v330 = vpack.c.b16 %v314, %v314
        %v331 = vpack.c.b16 %v315, %v315
        %v332 = vpack.c.b16 %v316, %v316
        %v333 = vpack.c.b16 %v317, %v317
        %vm334 = vsmask.f32 3328
        %vm335 = vsmask.f32 7440
        %vm336 = vmor %vm334, %vm335
        %v338 = vshrl.u32 %v318, 16
        %v340 = vrot.slane %v338, 4
        %v341 = vshll.u32 %v318, 16
        %v343 = vrot.slane %v341, 5
        %v344 = vor.u32 %v340, %v343
        %v345 = vrot.slane %v344, 4
        %v347 = vshll.u32 %v319, 16
        %v349 = vrot.slane %v347, 5
        %v350 = vsel %vm336, %v345, %v349
        %v352 = vshrl.u32 %v320, 16
        %v354 = vrot.slane %v352, 4
        %v355 = vshll.u32 %v320, 16
        %v357 = vrot.slane %v355, 5
        %v358 = vor.u32 %v354, %v357
        %v359 = vrot.slane %v358, 4
        %v361 = vshll.u32 %v321, 16
        %v363 = vrot.slane %v361, 5
        %v364 = vsel %vm336, %v359, %v363
        %v366 = vshrl.u32 %v322, 16
        %v368 = vrot.slane %v366, 4
        %v369 = vshll.u32 %v322, 16
        %v371 = vrot.slane %v369, 5
        %v372 = vor.u32 %v368, %v371
        %v373 = vrot.slane %v372, 4
        %v375 = vshll.u32 %v323, 16
        %v377 = vrot.slane %v375, 5
        %v378 = vsel %vm336, %v373, %v377
        %v380 = vshrl.u32 %v324, 16
        %v382 = vrot.slane %v380, 4
        %v383 = vshll.u32 %v324, 16
        %v385 = vrot.slane %v383, 5
        %v386 = vor.u32 %v382, %v385
        %v387 = vrot.slane %v386, 4
        %v389 = vshll.u32 %v325, 16
        %v391 = vrot.slane %v389, 5
        %v392 = vsel %vm336, %v387, %v391
        %v394 = vshrl.u32 %v326, 16
        %v396 = vrot.slane %v394, 4
        %v397 = vshll.u32 %v326, 16
        %v399 = vrot.slane %v397, 5
        %v400 = vor.u32 %v396, %v399
        %v401 = vrot.slane %v400, 4
        %v403 = vshll.u32 %v327, 16
        %v405 = vrot.slane %v403, 5
        %v406 = vsel %vm336, %v401, %v405
        %v408 = vshrl.u32 %v328, 16
        %v410 = vrot.slane %v408, 4
        %v411 = vshll.u32 %v328, 16
        %v413 = vrot.slane %v411, 5
        %v414 = vor.u32 %v410, %v413
        %v415 = vrot.slane %v414, 4
        %v417 = vshll.u32 %v329, 16
        %v419 = vrot.slane %v417, 5
        %v420 = vsel %vm336, %v415, %v419
        %v422 = vshrl.u32 %v330, 16
        %v424 = vrot.slane %v422, 4
        %v425 = vshll.u32 %v330, 16
        %v427 = vrot.slane %v425, 5
        %v428 = vor.u32 %v424, %v427
        %v429 = vrot.slane %v428, 4
        %v431 = vshll.u32 %v331, 16
        %v433 = vrot.slane %v431, 5
        %v434 = vsel %vm336, %v429, %v433
        %v436 = vshrl.u32 %v332, 16
        %v438 = vrot.slane %v436, 4
        %v439 = vshll.u32 %v332, 16
        %v441 = vrot.slane %v439, 5
        %v442 = vor.u32 %v438, %v441
        %v443 = vrot.slane %v442, 4
        %v445 = vshll.u32 %v333, 16
        %v447 = vrot.slane %v445, 5
        %v448 = vsel %vm336, %v443, %v447
        %v449 = vld [vmem:[%s1] sm:$0xf]
        %v450 = vld [vmem:[%s1 + $0x4] sm:$0xf]
        %v451 = vld [vmem:[%s1 + $0x8] sm:$0xf]
        %v452 = vld [vmem:[%s1 + $0xc] sm:$0xf]
        %vm453 = vcmask 1042432
        %vm454 = vcmask 1046532
        %vm455 = vmor %vm453, %vm454
        %v456 = vrot.slane %v318, 5
        %v457 = vrot.slane %v456, 4
        %v458 = vrot.slane %v319, 5
        %v459 = vsel %vm455, %v457, %v458
        %v460 = vrot.slane %v320, 5
        %v461 = vrot.slane %v460, 4
        %v462 = vrot.slane %v321, 5
        %v463 = vsel %vm455, %v461, %v462
        %v464 = vrot.slane %v322, 5
        %v465 = vrot.slane %v464, 4
        %v466 = vrot.slane %v323, 5
        %v467 = vsel %vm455, %v465, %v466
        %v468 = vrot.slane %v324, 5
        %v469 = vrot.slane %v468, 4
        %v470 = vrot.slane %v325, 5
        %v471 = vsel %vm455, %v469, %v470
        %v472 = vrot.slane %v326, 5
        %v473 = vrot.slane %v472, 4
        %v474 = vrot.slane %v327, 5
        %v475 = vsel %vm455, %v473, %v474
        %v476 = vrot.slane %v328, 5
        %v477 = vrot.slane %v476, 4
        %v478 = vrot.slane %v329, 5
        %v479 = vsel %vm455, %v477, %v478
        %v480 = vrot.slane %v330, 5
        %v481 = vrot.slane %v480, 4
        %v482 = vrot.slane %v331, 5
        %v483 = vsel %vm455, %v481, %v482
        %v484 = vrot.slane %v332, 5
        %v485 = vrot.slane %v484, 4
        %v486 = vrot.slane %v333, 5
        %v487 = vsel %vm455, %v485, %v486
        %s488 = scalar_lea.vmem %s1, 16
        %v489 = vld [vmem:[%s488] sm:$0xf]
        %v490 = vld [vmem:[%s488 + $0x4] sm:$0xf]
        %v491 = vld [vmem:[%s488 + $0x8] sm:$0xf]
        %v492 = vld [vmem:[%s488 + $0xc] sm:$0xf]
        %v493 = vunpack.c.l.b16 %v459
        %v494 = vunpack.c.l.b16 %v463
        %v495 = vunpack.c.l.b16 %v467
        %v496 = vunpack.c.l.b16 %v471
        %v497 = vunpack.c.l.b16 %v475
        %v498 = vunpack.c.l.b16 %v479
        %v499 = vunpack.c.l.b16 %v483
        %v500 = vunpack.c.l.b16 %v487
        %v501 = vpack.c.b16 %v494, %v493
        %v502 = vpack.c.b16 %v496, %v495
        %v503 = vpack.c.b16 %v498, %v497
        %v504 = vpack.c.b16 %v500, %v499
        %v509 = vunpack.c.l.b16 %v489
        %v510 = vunpack.c.l.b16 %v490
        %v511 = vunpack.c.l.b16 %v491
        %v512 = vunpack.c.l.b16 %v492
        %v513 = vpack.c.b16 %v510, %v509
        %v514 = vpack.c.b16 %v512, %v511
        %vm517 = vcmask 261120
        %v519 = vsel %vm517, %v501, 0
        %v522 = vsel %vm517, %v502, 0
        %v525 = vsel %vm517, %v503, 0
        %v528 = vsel %vm517, %v504, 0
        %530 = vmatprep.subr.bf16.mxu0 0
        %531 = vmatpush1.bf16.msra.mxu0 %v513
        %532 = vmatprep.subr.bf16.mxu0 0
        %533 = vmatpush1.bf16.msra.mxu0 %v514
        %534 = vmatprep.subr.bf16.mxu0 0
        %535 = vmatpush1.bf16.msra.mxu0 0
        %536 = vmatprep.subr.bf16.mxu0 0
        %537 = vmatpush1.bf16.msra.mxu0 0
        %538 = vmatprep.subr.bf16.mxu0 0
        %539 = vmatpush1.bf16.msra.mxu0 0
        %540 = vmatprep.subr.bf16.mxu0 0
        %541 = vmatpush1.bf16.msra.mxu0 0
        %542 = vmatprep.subr.bf16.mxu0 0
        %543 = vmatpush1.bf16.msra.mxu0 0
        %544 = vmatprep.subr.bf16.mxu0 0
        %545 = vmatpush1.bf16.msra.mxu0 0
        %546 = vmatprep.subr.bf16.mxu0 0
        %547 = vmatpush1.bf16.msra.mxu0 0
        %548 = vmatprep.subr.bf16.mxu0 0
        %549 = vmatpush1.bf16.msra.mxu0 0
        %550 = vmatprep.subr.bf16.mxu0 0
        %551 = vmatpush1.bf16.msra.mxu0 0
        %552 = vmatprep.subr.bf16.mxu0 0
        %553 = vmatpush1.bf16.msra.mxu0 0
        %554 = vmatprep.subr.bf16.mxu0 0
        %555 = vmatpush1.bf16.msra.mxu0 0
        %556 = vmatprep.subr.bf16.mxu0 0
        %557 = vmatpush1.bf16.msra.mxu0 0
        %558 = vmatprep.subr.bf16.mxu0 0
        %559 = vmatpush1.bf16.msra.mxu0 0
        %560 = vmatprep.subr.bf16.mxu0 0
        %561 = vmatpush1.bf16.msra.mxu0 0
        %562 = vmatprep.mubr.bf16.mxu0 0
        %563 = vmatmul.mubr.bf16.gmra.mrb[0].mxu0 %v519
        %v564 = vpop.f32.mrb[0].mxu0
        %v565 = vadd.f32 0.0, %v564
        %v566 = vpop.f32.mrb[0].mxu0
        %v567 = vpop.f32.mrb[0].mxu0
        %v568 = vadd.f32 0.0, %v567
        %v569 = vpop.f32.mrb[0].mxu0
        %570 = vmatprep.mubr.bf16.mxu0 0
        %571 = vmatmul.mubr.bf16.gmra.mrb[0].mxu0 %v522
        %v572 = vpop.f32.mrb[0].mxu0
        %v573 = vadd.f32 0.0, %v572
        %v574 = vpop.f32.mrb[0].mxu0
        %v575 = vpop.f32.mrb[0].mxu0
        %v576 = vadd.f32 0.0, %v575
        %v577 = vpop.f32.mrb[0].mxu0
        %578 = vmatprep.mubr.bf16.mxu0 0
        %579 = vmatmul.mubr.bf16.gmra.mrb[0].mxu0 %v525
        %v580 = vpop.f32.mrb[0].mxu0
        %v581 = vadd.f32 0.0, %v580
        %v582 = vpop.f32.mrb[0].mxu0
        %v583 = vpop.f32.mrb[0].mxu0
        %v584 = vadd.f32 0.0, %v583
        %v585 = vpop.f32.mrb[0].mxu0
        %586 = vmatprep.mubr.bf16.mxu0 0
        %587 = vmatmul.mubr.bf16.gmra.mrb[0].mxu0 %v528
        %v588 = vpop.f32.mrb[0].mxu0
        %v589 = vadd.f32 0.0, %v588
        %v590 = vpop.f32.mrb[0].mxu0
        %v591 = vpop.f32.mrb[0].mxu0
        %v592 = vadd.f32 0.0, %v591
        %v593 = vpop.f32.mrb[0].mxu0
        %594 = vdwg.mxu0
        %v595 = vunpack.c.l.b16 %v350
        %v596 = vunpack.c.l.b16 %v364
        %v597 = vunpack.c.l.b16 %v378
        %v598 = vunpack.c.l.b16 %v392
        %v599 = vunpack.c.l.b16 %v406
        %v600 = vunpack.c.l.b16 %v420
        %v601 = vunpack.c.l.b16 %v434
        %v602 = vunpack.c.l.b16 %v448
        %v603 = vpack.c.b16 %v596, %v595
        %v604 = vpack.c.b16 %v598, %v597
        %v605 = vpack.c.b16 %v600, %v599
        %v606 = vpack.c.b16 %v602, %v601
        %v611 = vunpack.c.l.b16 %v449
        %v612 = vunpack.c.l.b16 %v450
        %v613 = vunpack.c.l.b16 %v451
        %v614 = vunpack.c.l.b16 %v452
        %v615 = vpack.c.b16 %v612, %v611
        %v616 = vpack.c.b16 %v614, %v613
        %v620 = vsel %vm517, %v603, 0
        %v623 = vsel %vm517, %v604, 0
        %v626 = vsel %vm517, %v605, 0
        %v629 = vsel %vm517, %v606, 0
        %631 = vmatprep.subr.bf16.mxu0 0
        %632 = vmatpush1.bf16.msra.mxu0 %v615
        %633 = vmatprep.subr.bf16.mxu0 0
        %634 = vmatpush1.bf16.msra.mxu0 %v616
        %635 = vmatprep.subr.bf16.mxu0 0
        %636 = vmatpush1.bf16.msra.mxu0 0
        %637 = vmatprep.subr.bf16.mxu0 0
        %638 = vmatpush1.bf16.msra.mxu0 0
        %639 = vmatprep.subr.bf16.mxu0 0
        %640 = vmatpush1.bf16.msra.mxu0 0
        %641 = vmatprep.subr.bf16.mxu0 0
        %642 = vmatpush1.bf16.msra.mxu0 0
        %643 = vmatprep.subr.bf16.mxu0 0
        %644 = vmatpush1.bf16.msra.mxu0 0
        %645 = vmatprep.subr.bf16.mxu0 0
        %646 = vmatpush1.bf16.msra.mxu0 0
        %647 = vmatprep.subr.bf16.mxu0 0
        %648 = vmatpush1.bf16.msra.mxu0 0
        %649 = vmatprep.subr.bf16.mxu0 0
        %650 = vmatpush1.bf16.msra.mxu0 0
        %651 = vmatprep.subr.bf16.mxu0 0
        %652 = vmatpush1.bf16.msra.mxu0 0
        %653 = vmatprep.subr.bf16.mxu0 0
        %654 = vmatpush1.bf16.msra.mxu0 0
        %655 = vmatprep.subr.bf16.mxu0 0
        %656 = vmatpush1.bf16.msra.mxu0 0
        %657 = vmatprep.subr.bf16.mxu0 0
        %658 = vmatpush1.bf16.msra.mxu0 0
        %659 = vmatprep.subr.bf16.mxu0 0
        %660 = vmatpush1.bf16.msra.mxu0 0
        %661 = vmatprep.subr.bf16.mxu0 0
        %662 = vmatpush1.bf16.msra.mxu0 0
        %663 = vmatprep.mubr.bf16.mxu0 0
        %664 = vmatmul.mubr.bf16.gmra.mrb[0].mxu0 %v620
        %v665 = vpop.f32.mrb[0].mxu0
        %v666 = vadd.f32 %v565, %v665
        %v667 = vpop.f32.mrb[0].mxu0
        %v668 = vpop.f32.mrb[0].mxu0
        %v669 = vadd.f32 %v568, %v668
        %v670 = vpop.f32.mrb[0].mxu0
        %671 = vmatprep.mubr.bf16.mxu0 0
        %672 = vmatmul.mubr.bf16.gmra.mrb[0].mxu0 %v623
        %v673 = vpop.f32.mrb[0].mxu0
        %v674 = vadd.f32 %v573, %v673
        %v675 = vpop.f32.mrb[0].mxu0
        %v676 = vpop.f32.mrb[0].mxu0
        %v677 = vadd.f32 %v576, %v676
        %v678 = vpop.f32.mrb[0].mxu0
        %679 = vmatprep.mubr.bf16.mxu0 0
        %680 = vmatmul.mubr.bf16.gmra.mrb[0].mxu0 %v626
        %v681 = vpop.f32.mrb[0].mxu0
        %v682 = vadd.f32 %v581, %v681
        %v683 = vpop.f32.mrb[0].mxu0
        %v684 = vpop.f32.mrb[0].mxu0
        %v685 = vadd.f32 %v584, %v684
        %v686 = vpop.f32.mrb[0].mxu0
        %687 = vmatprep.mubr.bf16.mxu0 0
        %688 = vmatmul.mubr.bf16.gmra.mrb[0].mxu0 %v629
        %v689 = vpop.f32.mrb[0].mxu0
        %v690 = vadd.f32 %v589, %v689
        %v691 = vpop.f32.mrb[0].mxu0
        %v692 = vpop.f32.mrb[0].mxu0
        %v693 = vadd.f32 %v592, %v692
        %v694 = vpop.f32.mrb[0].mxu0
        %695 = vdwg.mxu0
        %vm696 = vsmask.f32 2304
        %vm697 = vsmask.f32 6416
        %vm698 = vmor %vm696, %vm697
        %v699 = vrot.slane %v338, 5
        %v700 = vrot.slane %v341, 6
        %v701 = vor.u32 %v699, %v700
        %v702 = vrot.slane %v701, 4
        %v703 = vshrl.u32 %v319, 16
        %v705 = vrot.slane %v703, 5
        %v706 = vrot.slane %v347, 6
        %v707 = vor.u32 %v705, %v706
        %v708 = vsel %vm698, %v702, %v707
        %v709 = vrot.slane %v352, 5
        %v710 = vrot.slane %v355, 6
        %v711 = vor.u32 %v709, %v710
        %v712 = vrot.slane %v711, 4
        %v713 = vshrl.u32 %v321, 16
        %v715 = vrot.slane %v713, 5
        %v716 = vrot.slane %v361, 6
        %v717 = vor.u32 %v715, %v716
        %v718 = vsel %vm698, %v712, %v717
        %v719 = vrot.slane %v366, 5
        %v720 = vrot.slane %v369, 6
        %v721 = vor.u32 %v719, %v720
        %v722 = vrot.slane %v721, 4
        %v723 = vshrl.u32 %v323, 16
        %v725 = vrot.slane %v723, 5
        %v726 = vrot.slane %v375, 6
        %v727 = vor.u32 %v725, %v726
        %v728 = vsel %vm698, %v722, %v727
        %v729 = vrot.slane %v380, 5
        %v730 = vrot.slane %v383, 6
        %v731 = vor.u32 %v729, %v730
        %v732 = vrot.slane %v731, 4
        %v733 = vshrl.u32 %v325, 16
        %v735 = vrot.slane %v733, 5
        %v736 = vrot.slane %v389, 6
        %v737 = vor.u32 %v735, %v736
        %v738 = vsel %vm698, %v732, %v737
        %v739 = vrot.slane %v394, 5
        %v740 = vrot.slane %v397, 6
        %v741 = vor.u32 %v739, %v740
        %v742 = vrot.slane %v741, 4
        %v743 = vshrl.u32 %v327, 16
        %v745 = vrot.slane %v743, 5
        %v746 = vrot.slane %v403, 6
        %v747 = vor.u32 %v745, %v746
        %v748 = vsel %vm698, %v742, %v747
        %v749 = vrot.slane %v408, 5
        %v750 = vrot.slane %v411, 6
        %v751 = vor.u32 %v749, %v750
        %v752 = vrot.slane %v751, 4
        %v753 = vshrl.u32 %v329, 16
        %v755 = vrot.slane %v753, 5
        %v756 = vrot.slane %v417, 6
        %v757 = vor.u32 %v755, %v756
        %v758 = vsel %vm698, %v752, %v757
        %v759 = vrot.slane %v422, 5
        %v760 = vrot.slane %v425, 6
        %v761 = vor.u32 %v759, %v760
        %v762 = vrot.slane %v761, 4
        %v763 = vshrl.u32 %v331, 16
        %v765 = vrot.slane %v763, 5
        %v766 = vrot.slane %v431, 6
        %v767 = vor.u32 %v765, %v766
        %v768 = vsel %vm698, %v762, %v767
        %v769 = vrot.slane %v436, 5
        %v770 = vrot.slane %v439, 6
        %v771 = vor.u32 %v769, %v770
        %v772 = vrot.slane %v771, 4
        %v773 = vshrl.u32 %v333, 16
        %v775 = vrot.slane %v773, 5
        %v776 = vrot.slane %v445, 6
        %v777 = vor.u32 %v775, %v776
        %v778 = vsel %vm698, %v772, %v777
        %s779 = scalar_lea.vmem %s1, 32
        %v780 = vld [vmem:[%s779] sm:$0xf]
        %v781 = vld [vmem:[%s779 + $0x4] sm:$0xf]
        %v782 = vld [vmem:[%s779 + $0x8] sm:$0xf]
        %v783 = vld [vmem:[%s779 + $0xc] sm:$0xf]
        %v784 = vunpack.c.l.b16 %v708
        %v785 = vunpack.c.l.b16 %v718
        %v786 = vunpack.c.l.b16 %v728
        %v787 = vunpack.c.l.b16 %v738
        %v788 = vunpack.c.l.b16 %v748
        %v789 = vunpack.c.l.b16 %v758
        %v790 = vunpack.c.l.b16 %v768
        %v791 = vunpack.c.l.b16 %v778
        %v792 = vpack.c.b16 %v785, %v784
        %v793 = vpack.c.b16 %v787, %v786
        %v794 = vpack.c.b16 %v789, %v788
        %v795 = vpack.c.b16 %v791, %v790
        %v800 = vunpack.c.l.b16 %v780
        %v801 = vunpack.c.l.b16 %v781
        %v802 = vunpack.c.l.b16 %v782
        %v803 = vunpack.c.l.b16 %v783
        %v804 = vpack.c.b16 %v801, %v800
        %v805 = vpack.c.b16 %v803, %v802
        %v809 = vsel %vm517, %v792, 0
        %v812 = vsel %vm517, %v793, 0
        %v815 = vsel %vm517, %v794, 0
        %v818 = vsel %vm517, %v795, 0
        %820 = vmatprep.subr.bf16.mxu0 0
        %821 = vmatpush1.bf16.msra.mxu0 %v804
        %822 = vmatprep.subr.bf16.mxu0 0
        %823 = vmatpush1.bf16.msra.mxu0 %v805
        %824 = vmatprep.subr.bf16.mxu0 0
        %825 = vmatpush1.bf16.msra.mxu0 0
        %826 = vmatprep.subr.bf16.mxu0 0
        %827 = vmatpush1.bf16.msra.mxu0 0
        %828 = vmatprep.subr.bf16.mxu0 0
        %829 = vmatpush1.bf16.msra.mxu0 0
        %830 = vmatprep.subr.bf16.mxu0 0
        %831 = vmatpush1.bf16.msra.mxu0 0
        %832 = vmatprep.subr.bf16.mxu0 0
        %833 = vmatpush1.bf16.msra.mxu0 0
        %834 = vmatprep.subr.bf16.mxu0 0
        %835 = vmatpush1.bf16.msra.mxu0 0
        %836 = vmatprep.subr.bf16.mxu0 0
        %837 = vmatpush1.bf16.msra.mxu0 0
        %838 = vmatprep.subr.bf16.mxu0 0
        %839 = vmatpush1.bf16.msra.mxu0 0
        %840 = vmatprep.subr.bf16.mxu0 0
        %841 = vmatpush1.bf16.msra.mxu0 0
        %842 = vmatprep.subr.bf16.mxu0 0
        %843 = vmatpush1.bf16.msra.mxu0 0
        %844 = vmatprep.subr.bf16.mxu0 0
        %845 = vmatpush1.bf16.msra.mxu0 0
        %846 = vmatprep.subr.bf16.mxu0 0
        %847 = vmatpush1.bf16.msra.mxu0 0
        %848 = vmatprep.subr.bf16.mxu0 0
        %849 = vmatpush1.bf16.msra.mxu0 0
        %850 = vmatprep.subr.bf16.mxu0 0
        %851 = vmatpush1.bf16.msra.mxu0 0
        %852 = vmatprep.mubr.bf16.mxu0 0
        %853 = vmatmul.mubr.bf16.gmra.mrb[0].mxu0 %v809
        %v854 = vpop.f32.mrb[0].mxu0
        %v855 = vadd.f32 0.0, %v854
        %v856 = vpop.f32.mrb[0].mxu0
        %v857 = vpop.f32.mrb[0].mxu0
        %v858 = vadd.f32 0.0, %v857
        %v859 = vpop.f32.mrb[0].mxu0
        %860 = vmatprep.mubr.bf16.mxu0 0
        %861 = vmatmul.mubr.bf16.gmra.mrb[0].mxu0 %v812
        %v862 = vpop.f32.mrb[0].mxu0
        %v863 = vadd.f32 0.0, %v862
        %v864 = vpop.f32.mrb[0].mxu0
        %v865 = vpop.f32.mrb[0].mxu0
        %v866 = vadd.f32 0.0, %v865
        %v867 = vpop.f32.mrb[0].mxu0
        %868 = vmatprep.mubr.bf16.mxu0 0
        %869 = vmatmul.mubr.bf16.gmra.mrb[0].mxu0 %v815
        %v870 = vpop.f32.mrb[0].mxu0
        %v871 = vadd.f32 0.0, %v870
        %v872 = vpop.f32.mrb[0].mxu0
        %v873 = vpop.f32.mrb[0].mxu0
        %v874 = vadd.f32 0.0, %v873
        %v875 = vpop.f32.mrb[0].mxu0
        %876 = vmatprep.mubr.bf16.mxu0 0
        %877 = vmatmul.mubr.bf16.gmra.mrb[0].mxu0 %v818
        %v878 = vpop.f32.mrb[0].mxu0
        %v879 = vadd.f32 0.0, %v878
        %v880 = vpop.f32.mrb[0].mxu0
        %v881 = vpop.f32.mrb[0].mxu0
        %v882 = vadd.f32 0.0, %v881
        %v883 = vpop.f32.mrb[0].mxu0
        %884 = vdwg.mxu0
        %v885 = vadd.f32 %v666, %v855
        %v886 = vadd.f32 %v669, %v858
        %v887 = vadd.f32 %v674, %v863
        %v888 = vadd.f32 %v677, %v866
        %v889 = vadd.f32 %v682, %v871
        %v890 = vadd.f32 %v685, %v874
        %v891 = vadd.f32 %v690, %v879
        %v892 = vadd.f32 %v693, %v882
        %v894 = vunpack.c.l.b16 %v293
        %v895 = vunpack.c.h.b16 %v293
        %v896 = vpack.c.b16 %v894, %v894
        %v897 = vpack.c.b16 %v895, %v895
        %v899 = vshrl.u32 %v896, 16
        %v901 = vrot.slane %v899, 4
        %v902 = vshll.u32 %v896, 16
        %v904 = vrot.slane %v902, 5
        %v905 = vor.u32 %v901, %v904
        %v906 = vrot.slane %v905, 4
        %v908 = vshll.u32 %v897, 16
        %v910 = vrot.slane %v908, 5
        %v911 = vsel %vm336, %v906, %v910
        %s912 = scalar_lea.vmem %s1, 48
        %v913 = vld [vmem:[%s912] sm:$0xf]
        %v914 = vld [vmem:[%s912 + $0x4] sm:$0xf]
        %v915 = vld [vmem:[%s912 + $0x8] sm:$0xf]
        %v916 = vld [vmem:[%s912 + $0xc] sm:$0xf]
        %v917 = vunpack.c.l.b16 %v911
        %v918 = vpack.c.b16 %v597, %v596
        %v919 = vpack.c.b16 %v599, %v598
        %v920 = vpack.c.b16 %v601, %v600
        %v921 = vpack.c.b16 %v917, %v602
        %v926 = vunpack.c.l.b16 %v913
        %v927 = vunpack.c.l.b16 %v914
        %v928 = vunpack.c.l.b16 %v915
        %v929 = vunpack.c.l.b16 %v916
        %v930 = vpack.c.b16 %v927, %v926
        %v931 = vpack.c.b16 %v929, %v928
        %v935 = vsel %vm517, %v918, 0
        %v938 = vsel %vm517, %v919, 0
        %v941 = vsel %vm517, %v920, 0
        %v944 = vsel %vm517, %v921, 0
        %946 = vmatprep.subr.bf16.mxu0 0
        %947 = vmatpush1.bf16.msra.mxu0 %v930
        %948 = vmatprep.subr.bf16.mxu0 0
        %949 = vmatpush1.bf16.msra.mxu0 %v931
        %950 = vmatprep.subr.bf16.mxu0 0
        %951 = vmatpush1.bf16.msra.mxu0 0
        %952 = vmatprep.subr.bf16.mxu0 0
        %953 = vmatpush1.bf16.msra.mxu0 0
        %954 = vmatprep.subr.bf16.mxu0 0
        %955 = vmatpush1.bf16.msra.mxu0 0
        %956 = vmatprep.subr.bf16.mxu0 0
        %957 = vmatpush1.bf16.msra.mxu0 0
        %958 = vmatprep.subr.bf16.mxu0 0
        %959 = vmatpush1.bf16.msra.mxu0 0
        %960 = vmatprep.subr.bf16.mxu0 0
        %961 = vmatpush1.bf16.msra.mxu0 0
        %962 = vmatprep.subr.bf16.mxu0 0
        %963 = vmatpush1.bf16.msra.mxu0 0
        %964 = vmatprep.subr.bf16.mxu0 0
        %965 = vmatpush1.bf16.msra.mxu0 0
        %966 = vmatprep.subr.bf16.mxu0 0
        %967 = vmatpush1.bf16.msra.mxu0 0
        %968 = vmatprep.subr.bf16.mxu0 0
        %969 = vmatpush1.bf16.msra.mxu0 0
        %970 = vmatprep.subr.bf16.mxu0 0
        %971 = vmatpush1.bf16.msra.mxu0 0
        %972 = vmatprep.subr.bf16.mxu0 0
        %973 = vmatpush1.bf16.msra.mxu0 0
        %974 = vmatprep.subr.bf16.mxu0 0
        %975 = vmatpush1.bf16.msra.mxu0 0
        %976 = vmatprep.subr.bf16.mxu0 0
        %977 = vmatpush1.bf16.msra.mxu0 0
        %978 = vmatprep.mubr.bf16.mxu0 0
        %979 = vmatmul.mubr.bf16.gmra.mrb[0].mxu0 %v935
        %v980 = vpop.f32.mrb[0].mxu0
        %v981 = vadd.f32 0.0, %v980
        %v982 = vpop.f32.mrb[0].mxu0
        %v983 = vpop.f32.mrb[0].mxu0
        %v984 = vadd.f32 0.0, %v983
        %v985 = vpop.f32.mrb[0].mxu0
        %986 = vmatprep.mubr.bf16.mxu0 0
        %987 = vmatmul.mubr.bf16.gmra.mrb[0].mxu0 %v938
        %v988 = vpop.f32.mrb[0].mxu0
        %v989 = vadd.f32 0.0, %v988
        %v990 = vpop.f32.mrb[0].mxu0
        %v991 = vpop.f32.mrb[0].mxu0
        %v992 = vadd.f32 0.0, %v991
        %v993 = vpop.f32.mrb[0].mxu0
        %994 = vmatprep.mubr.bf16.mxu0 0
        %995 = vmatmul.mubr.bf16.gmra.mrb[0].mxu0 %v941
        %v996 = vpop.f32.mrb[0].mxu0
        %v997 = vadd.f32 0.0, %v996
        %v998 = vpop.f32.mrb[0].mxu0
        %v999 = vpop.f32.mrb[0].mxu0
        %v1000 = vadd.f32 0.0, %v999
        %v1001 = vpop.f32.mrb[0].mxu0
        %1002 = vmatprep.mubr.bf16.mxu0 0
        %1003 = vmatmul.mubr.bf16.gmra.mrb[0].mxu0 %v944
        %v1004 = vpop.f32.mrb[0].mxu0
        %v1005 = vadd.f32 0.0, %v1004
        %v1006 = vpop.f32.mrb[0].mxu0
        %v1007 = vpop.f32.mrb[0].mxu0
        %v1008 = vadd.f32 0.0, %v1007
        %v1009 = vpop.f32.mrb[0].mxu0
        %1010 = vdwg.mxu0
        %v1011 = vadd.f32 %v885, %v981
        %v1012 = vadd.f32 %v886, %v984
        %v1013 = vadd.f32 %v887, %v989
        %v1014 = vadd.f32 %v888, %v992
        %v1015 = vadd.f32 %v889, %v997
        %v1016 = vadd.f32 %v890, %v1000
        %v1017 = vadd.f32 %v891, %v1005
        %v1018 = vadd.f32 %v892, %v1008
        %v1019 = vrot.slane %v896, 5
        %v1020 = vrot.slane %v1019, 4
        %v1021 = vrot.slane %v897, 5
        %v1022 = vsel %vm455, %v1020, %v1021
        %s1023 = scalar_lea.vmem %s1, 64
        %v1024 = vld [vmem:[%s1023] sm:$0xf]
        %v1025 = vld [vmem:[%s1023 + $0x4] sm:$0xf]
        %v1026 = vld [vmem:[%s1023 + $0x8] sm:$0xf]
        %v1027 = vld [vmem:[%s1023 + $0xc] sm:$0xf]
        %v1028 = vunpack.c.l.b16 %v1022
        %v1029 = vpack.c.b16 %v495, %v494
        %v1030 = vpack.c.b16 %v497, %v496
        %v1031 = vpack.c.b16 %v499, %v498
        %v1032 = vpack.c.b16 %v1028, %v500
        %v1037 = vunpack.c.l.b16 %v1024
        %v1038 = vunpack.c.l.b16 %v1025
        %v1039 = vunpack.c.l.b16 %v1026
        %v1040 = vunpack.c.l.b16 %v1027
        %v1041 = vpack.c.b16 %v1038, %v1037
        %v1042 = vpack.c.b16 %v1040, %v1039
        %v1046 = vsel %vm517, %v1029, 0
        %v1049 = vsel %vm517, %v1030, 0
        %v1052 = vsel %vm517, %v1031, 0
        %v1055 = vsel %vm517, %v1032, 0
        %1057 = vmatprep.subr.bf16.mxu0 0
        %1058 = vmatpush1.bf16.msra.mxu0 %v1041
        %1059 = vmatprep.subr.bf16.mxu0 0
        %1060 = vmatpush1.bf16.msra.mxu0 %v1042
        %1061 = vmatprep.subr.bf16.mxu0 0
        %1062 = vmatpush1.bf16.msra.mxu0 0
        %1063 = vmatprep.subr.bf16.mxu0 0
        %1064 = vmatpush1.bf16.msra.mxu0 0
        %1065 = vmatprep.subr.bf16.mxu0 0
        %1066 = vmatpush1.bf16.msra.mxu0 0
        %1067 = vmatprep.subr.bf16.mxu0 0
        %1068 = vmatpush1.bf16.msra.mxu0 0
        %1069 = vmatprep.subr.bf16.mxu0 0
        %1070 = vmatpush1.bf16.msra.mxu0 0
        %1071 = vmatprep.subr.bf16.mxu0 0
        %1072 = vmatpush1.bf16.msra.mxu0 0
        %1073 = vmatprep.subr.bf16.mxu0 0
        %1074 = vmatpush1.bf16.msra.mxu0 0
        %1075 = vmatprep.subr.bf16.mxu0 0
        %1076 = vmatpush1.bf16.msra.mxu0 0
        %1077 = vmatprep.subr.bf16.mxu0 0
        %1078 = vmatpush1.bf16.msra.mxu0 0
        %1079 = vmatprep.subr.bf16.mxu0 0
        %1080 = vmatpush1.bf16.msra.mxu0 0
        %1081 = vmatprep.subr.bf16.mxu0 0
        %1082 = vmatpush1.bf16.msra.mxu0 0
        %1083 = vmatprep.subr.bf16.mxu0 0
        %1084 = vmatpush1.bf16.msra.mxu0 0
        %1085 = vmatprep.subr.bf16.mxu0 0
        %1086 = vmatpush1.bf16.msra.mxu0 0
        %1087 = vmatprep.subr.bf16.mxu0 0
        %1088 = vmatpush1.bf16.msra.mxu0 0
        %1089 = vmatprep.mubr.bf16.mxu0 0
        %1090 = vmatmul.mubr.bf16.gmra.mrb[0].mxu0 %v1046
        %v1091 = vpop.f32.mrb[0].mxu0
        %v1092 = vadd.f32 0.0, %v1091
        %v1093 = vpop.f32.mrb[0].mxu0
        %v1094 = vpop.f32.mrb[0].mxu0
        %v1095 = vadd.f32 0.0, %v1094
        %v1096 = vpop.f32.mrb[0].mxu0
        %1097 = vmatprep.mubr.bf16.mxu0 0
        %1098 = vmatmul.mubr.bf16.gmra.mrb[0].mxu0 %v1049
        %v1099 = vpop.f32.mrb[0].mxu0
        %v1100 = vadd.f32 0.0, %v1099
        %v1101 = vpop.f32.mrb[0].mxu0
        %v1102 = vpop.f32.mrb[0].mxu0
        %v1103 = vadd.f32 0.0, %v1102
        %v1104 = vpop.f32.mrb[0].mxu0
        %1105 = vmatprep.mubr.bf16.mxu0 0
        %1106 = vmatmul.mubr.bf16.gmra.mrb[0].mxu0 %v1052
        %v1107 = vpop.f32.mrb[0].mxu0
        %v1108 = vadd.f32 0.0, %v1107
        %v1109 = vpop.f32.mrb[0].mxu0
        %v1110 = vpop.f32.mrb[0].mxu0
        %v1111 = vadd.f32 0.0, %v1110
        %v1112 = vpop.f32.mrb[0].mxu0
        %1113 = vmatprep.mubr.bf16.mxu0 0
        %1114 = vmatmul.mubr.bf16.gmra.mrb[0].mxu0 %v1055
        %v1115 = vpop.f32.mrb[0].mxu0
        %v1116 = vadd.f32 0.0, %v1115
        %v1117 = vpop.f32.mrb[0].mxu0
        %v1118 = vpop.f32.mrb[0].mxu0
        %v1119 = vadd.f32 0.0, %v1118
        %v1120 = vpop.f32.mrb[0].mxu0
        %1121 = vdwg.mxu0
        %v1122 = vadd.f32 %v1011, %v1092
        %v1123 = vadd.f32 %v1012, %v1095
        %v1124 = vadd.f32 %v1013, %v1100
        %v1125 = vadd.f32 %v1014, %v1103
        %v1126 = vadd.f32 %v1015, %v1108
        %v1127 = vadd.f32 %v1016, %v1111
        %v1128 = vadd.f32 %v1017, %v1116
        %v1129 = vadd.f32 %v1018, %v1119
        %v1130 = vrot.slane %v899, 5
        %v1131 = vrot.slane %v902, 6
        %v1132 = vor.u32 %v1130, %v1131
        %v1133 = vrot.slane %v1132, 4
        %v1134 = vshrl.u32 %v897, 16
        %v1136 = vrot.slane %v1134, 5
        %v1137 = vrot.slane %v908, 6
        %v1138 = vor.u32 %v1136, %v1137
        %v1139 = vsel %vm698, %v1133, %v1138
        %s1140 = scalar_lea.vmem %s1, 80
        %v1141 = vld [vmem:[%s1140] sm:$0xf]
        %v1142 = vld [vmem:[%s1140 + $0x4] sm:$0xf]
        %v1143 = vld [vmem:[%s1140 + $0x8] sm:$0xf]
        %v1144 = vld [vmem:[%s1140 + $0xc] sm:$0xf]
        %v1145 = vunpack.c.l.b16 %v1139
        %v1146 = vpack.c.b16 %v786, %v785
        %v1147 = vpack.c.b16 %v788, %v787
        %v1148 = vpack.c.b16 %v790, %v789
        %v1149 = vpack.c.b16 %v1145, %v791
        %v1154 = vunpack.c.l.b16 %v1141
        %v1155 = vunpack.c.l.b16 %v1142
        %v1156 = vunpack.c.l.b16 %v1143
        %v1157 = vunpack.c.l.b16 %v1144
        %v1158 = vpack.c.b16 %v1155, %v1154
        %v1159 = vpack.c.b16 %v1157, %v1156
        %v1163 = vsel %vm517, %v1146, 0
        %v1166 = vsel %vm517, %v1147, 0
        %v1169 = vsel %vm517, %v1148, 0
        %v1172 = vsel %vm517, %v1149, 0
        %1174 = vmatprep.subr.bf16.mxu0 0
        %1175 = vmatpush1.bf16.msra.mxu0 %v1158
        %1176 = vmatprep.subr.bf16.mxu0 0
        %1177 = vmatpush1.bf16.msra.mxu0 %v1159
        %1178 = vmatprep.subr.bf16.mxu0 0
        %1179 = vmatpush1.bf16.msra.mxu0 0
        %1180 = vmatprep.subr.bf16.mxu0 0
        %1181 = vmatpush1.bf16.msra.mxu0 0
        %1182 = vmatprep.subr.bf16.mxu0 0
        %1183 = vmatpush1.bf16.msra.mxu0 0
        %1184 = vmatprep.subr.bf16.mxu0 0
        %1185 = vmatpush1.bf16.msra.mxu0 0
        %1186 = vmatprep.subr.bf16.mxu0 0
        %1187 = vmatpush1.bf16.msra.mxu0 0
        %1188 = vmatprep.subr.bf16.mxu0 0
        %1189 = vmatpush1.bf16.msra.mxu0 0
        %1190 = vmatprep.subr.bf16.mxu0 0
        %1191 = vmatpush1.bf16.msra.mxu0 0
        %1192 = vmatprep.subr.bf16.mxu0 0
        %1193 = vmatpush1.bf16.msra.mxu0 0
        %1194 = vmatprep.subr.bf16.mxu0 0
        %1195 = vmatpush1.bf16.msra.mxu0 0
        %1196 = vmatprep.subr.bf16.mxu0 0
        %1197 = vmatpush1.bf16.msra.mxu0 0
        %1198 = vmatprep.subr.bf16.mxu0 0
        %1199 = vmatpush1.bf16.msra.mxu0 0
        %1200 = vmatprep.subr.bf16.mxu0 0
        %1201 = vmatpush1.bf16.msra.mxu0 0
        %1202 = vmatprep.subr.bf16.mxu0 0
        %1203 = vmatpush1.bf16.msra.mxu0 0
        %1204 = vmatprep.subr.bf16.mxu0 0
        %1205 = vmatpush1.bf16.msra.mxu0 0
        %1206 = vmatprep.mubr.bf16.mxu0 0
        %1207 = vmatmul.mubr.bf16.gmra.mrb[0].mxu0 %v1163
        %v1208 = vpop.f32.mrb[0].mxu0
        %v1209 = vadd.f32 0.0, %v1208
        %v1210 = vpop.f32.mrb[0].mxu0
        %v1211 = vpop.f32.mrb[0].mxu0
        %v1212 = vadd.f32 0.0, %v1211
        %v1213 = vpop.f32.mrb[0].mxu0
        %1214 = vmatprep.mubr.bf16.mxu0 0
        %1215 = vmatmul.mubr.bf16.gmra.mrb[0].mxu0 %v1166
        %v1216 = vpop.f32.mrb[0].mxu0
        %v1217 = vadd.f32 0.0, %v1216
        %v1218 = vpop.f32.mrb[0].mxu0
        %v1219 = vpop.f32.mrb[0].mxu0
        %v1220 = vadd.f32 0.0, %v1219
        %v1221 = vpop.f32.mrb[0].mxu0
        %1222 = vmatprep.mubr.bf16.mxu0 0
        %1223 = vmatmul.mubr.bf16.gmra.mrb[0].mxu0 %v1169
        %v1224 = vpop.f32.mrb[0].mxu0
        %v1225 = vadd.f32 0.0, %v1224
        %v1226 = vpop.f32.mrb[0].mxu0
        %v1227 = vpop.f32.mrb[0].mxu0
        %v1228 = vadd.f32 0.0, %v1227
        %v1229 = vpop.f32.mrb[0].mxu0
        %1230 = vmatprep.mubr.bf16.mxu0 0
        %1231 = vmatmul.mubr.bf16.gmra.mrb[0].mxu0 %v1172
        %v1232 = vpop.f32.mrb[0].mxu0
        %v1233 = vadd.f32 0.0, %v1232
        %v1234 = vpop.f32.mrb[0].mxu0
        %v1235 = vpop.f32.mrb[0].mxu0
        %v1236 = vadd.f32 0.0, %v1235
        %v1237 = vpop.f32.mrb[0].mxu0
        %1238 = vdwg.mxu0
        %v1239 = vadd.f32 %v1122, %v1209
        %v1240 = vadd.f32 %v1123, %v1212
        %v1241 = vadd.f32 %v1124, %v1217
        %v1242 = vadd.f32 %v1125, %v1220
        %v1243 = vadd.f32 %v1126, %v1225
        %v1244 = vadd.f32 %v1127, %v1228
        %v1245 = vadd.f32 %v1128, %v1233
        %v1246 = vadd.f32 %v1129, %v1236
        %s1247 = scalar_lea.vmem %s1, 96
        %v1248 = vld [vmem:[%s1247] sm:$0xf]
        %v1249 = vld [vmem:[%s1247 + $0x4] sm:$0xf]
        %v1250 = vld [vmem:[%s1247 + $0x8] sm:$0xf]
        %v1251 = vld [vmem:[%s1247 + $0xc] sm:$0xf]
        %v1252 = vpack.c.b16 %v595, %v917
        %v1257 = vunpack.c.l.b16 %v1248
        %v1258 = vunpack.c.l.b16 %v1249
        %v1259 = vunpack.c.l.b16 %v1250
        %v1260 = vunpack.c.l.b16 %v1251
        %v1261 = vpack.c.b16 %v1258, %v1257
        %v1262 = vpack.c.b16 %v1260, %v1259
        %v1266 = vsel %vm517, %v1252, 0
        %1268 = vmatprep.subr.bf16.mxu0 0
        %1269 = vmatpush1.bf16.msra.mxu0 %v1261
        %1270 = vmatprep.subr.bf16.mxu0 0
        %1271 = vmatpush1.bf16.msra.mxu0 %v1262
        %1272 = vmatprep.subr.bf16.mxu0 0
        %1273 = vmatpush1.bf16.msra.mxu0 0
        %1274 = vmatprep.subr.bf16.mxu0 0
        %1275 = vmatpush1.bf16.msra.mxu0 0
        %1276 = vmatprep.subr.bf16.mxu0 0
        %1277 = vmatpush1.bf16.msra.mxu0 0
        %1278 = vmatprep.subr.bf16.mxu0 0
        %1279 = vmatpush1.bf16.msra.mxu0 0
        %1280 = vmatprep.subr.bf16.mxu0 0
        %1281 = vmatpush1.bf16.msra.mxu0 0
        %1282 = vmatprep.subr.bf16.mxu0 0
        %1283 = vmatpush1.bf16.msra.mxu0 0
        %1284 = vmatprep.subr.bf16.mxu0 0
        %1285 = vmatpush1.bf16.msra.mxu0 0
        %1286 = vmatprep.subr.bf16.mxu0 0
        %1287 = vmatpush1.bf16.msra.mxu0 0
        %1288 = vmatprep.subr.bf16.mxu0 0
        %1289 = vmatpush1.bf16.msra.mxu0 0
        %1290 = vmatprep.subr.bf16.mxu0 0
        %1291 = vmatpush1.bf16.msra.mxu0 0
        %1292 = vmatprep.subr.bf16.mxu0 0
        %1293 = vmatpush1.bf16.msra.mxu0 0
        %1294 = vmatprep.subr.bf16.mxu0 0
        %1295 = vmatpush1.bf16.msra.mxu0 0
        %1296 = vmatprep.subr.bf16.mxu0 0
        %1297 = vmatpush1.bf16.msra.mxu0 0
        %1298 = vmatprep.subr.bf16.mxu0 0
        %1299 = vmatpush1.bf16.msra.mxu0 0
        %1300 = vmatprep.mubr.bf16.mxu0 0
        %1301 = vmatmul.mubr.bf16.gmra.mrb[0].mxu0 %v623
        %v1302 = vpop.f32.mrb[0].mxu0
        %v1303 = vadd.f32 0.0, %v1302
        %v1304 = vpop.f32.mrb[0].mxu0
        %v1305 = vpop.f32.mrb[0].mxu0
        %v1306 = vadd.f32 0.0, %v1305
        %v1307 = vpop.f32.mrb[0].mxu0
        %1308 = vmatprep.mubr.bf16.mxu0 0
        %1309 = vmatmul.mubr.bf16.gmra.mrb[0].mxu0 %v626
        %v1310 = vpop.f32.mrb[0].mxu0
        %v1311 = vadd.f32 0.0, %v1310
        %v1312 = vpop.f32.mrb[0].mxu0
        %v1313 = vpop.f32.mrb[0].mxu0
        %v1314 = vadd.f32 0.0, %v1313
        %v1315 = vpop.f32.mrb[0].mxu0
        %1316 = vmatprep.mubr.bf16.mxu0 0
        %1317 = vmatmul.mubr.bf16.gmra.mrb[0].mxu0 %v629
        %v1318 = vpop.f32.mrb[0].mxu0
        %v1319 = vadd.f32 0.0, %v1318
        %v1320 = vpop.f32.mrb[0].mxu0
        %v1321 = vpop.f32.mrb[0].mxu0
        %v1322 = vadd.f32 0.0, %v1321
        %v1323 = vpop.f32.mrb[0].mxu0
        %1324 = vmatprep.mubr.bf16.mxu0 0
        %1325 = vmatmul.mubr.bf16.gmra.mrb[0].mxu0 %v1266
        %v1326 = vpop.f32.mrb[0].mxu0
        %v1327 = vadd.f32 0.0, %v1326
        %v1328 = vpop.f32.mrb[0].mxu0
        %v1329 = vpop.f32.mrb[0].mxu0
        %v1330 = vadd.f32 0.0, %v1329
        %v1331 = vpop.f32.mrb[0].mxu0
        %1332 = vdwg.mxu0
        %v1333 = vadd.f32 %v1239, %v1303
        %v1334 = vadd.f32 %v1240, %v1306
        %v1335 = vadd.f32 %v1241, %v1311
        %v1336 = vadd.f32 %v1242, %v1314
        %v1337 = vadd.f32 %v1243, %v1319
        %v1338 = vadd.f32 %v1244, %v1322
        %v1339 = vadd.f32 %v1245, %v1327
        %v1340 = vadd.f32 %v1246, %v1330
        %s1341 = scalar_lea.vmem %s1, 112
        %v1342 = vld [vmem:[%s1341] sm:$0xf]
        %v1343 = vld [vmem:[%s1341 + $0x4] sm:$0xf]
        %v1344 = vld [vmem:[%s1341 + $0x8] sm:$0xf]
        %v1345 = vld [vmem:[%s1341 + $0xc] sm:$0xf]
        %v1346 = vpack.c.b16 %v493, %v1028
        %v1351 = vunpack.c.l.b16 %v1342
        %v1352 = vunpack.c.l.b16 %v1343
        %v1353 = vunpack.c.l.b16 %v1344
        %v1354 = vunpack.c.l.b16 %v1345
        %v1355 = vpack.c.b16 %v1352, %v1351
        %v1356 = vpack.c.b16 %v1354, %v1353
        %v1360 = vsel %vm517, %v1346, 0
        %1362 = vmatprep.subr.bf16.mxu0 0
        %1363 = vmatpush1.bf16.msra.mxu0 %v1355
        %1364 = vmatprep.subr.bf16.mxu0 0
        %1365 = vmatpush1.bf16.msra.mxu0 %v1356
        %1366 = vmatprep.subr.bf16.mxu0 0
        %1367 = vmatpush1.bf16.msra.mxu0 0
        %1368 = vmatprep.subr.bf16.mxu0 0
        %1369 = vmatpush1.bf16.msra.mxu0 0
        %1370 = vmatprep.subr.bf16.mxu0 0
        %1371 = vmatpush1.bf16.msra.mxu0 0
        %1372 = vmatprep.subr.bf16.mxu0 0
        %1373 = vmatpush1.bf16.msra.mxu0 0
        %1374 = vmatprep.subr.bf16.mxu0 0
        %1375 = vmatpush1.bf16.msra.mxu0 0
        %1376 = vmatprep.subr.bf16.mxu0 0
        %1377 = vmatpush1.bf16.msra.mxu0 0
        %1378 = vmatprep.subr.bf16.mxu0 0
        %1379 = vmatpush1.bf16.msra.mxu0 0
        %1380 = vmatprep.subr.bf16.mxu0 0
        %1381 = vmatpush1.bf16.msra.mxu0 0
        %1382 = vmatprep.subr.bf16.mxu0 0
        %1383 = vmatpush1.bf16.msra.mxu0 0
        %1384 = vmatprep.subr.bf16.mxu0 0
        %1385 = vmatpush1.bf16.msra.mxu0 0
        %1386 = vmatprep.subr.bf16.mxu0 0
        %1387 = vmatpush1.bf16.msra.mxu0 0
        %1388 = vmatprep.subr.bf16.mxu0 0
        %1389 = vmatpush1.bf16.msra.mxu0 0
        %1390 = vmatprep.subr.bf16.mxu0 0
        %1391 = vmatpush1.bf16.msra.mxu0 0
        %1392 = vmatprep.subr.bf16.mxu0 0
        %1393 = vmatpush1.bf16.msra.mxu0 0
        %1394 = vmatprep.mubr.bf16.mxu0 0
        %1395 = vmatmul.mubr.bf16.gmra.mrb[0].mxu0 %v522
        %v1396 = vpop.f32.mrb[0].mxu0
        %v1397 = vadd.f32 0.0, %v1396
        %v1398 = vpop.f32.mrb[0].mxu0
        %v1399 = vpop.f32.mrb[0].mxu0
        %v1400 = vadd.f32 0.0, %v1399
        %v1401 = vpop.f32.mrb[0].mxu0
        %1402 = vmatprep.mubr.bf16.mxu0 0
        %1403 = vmatmul.mubr.bf16.gmra.mrb[0].mxu0 %v525
        %v1404 = vpop.f32.mrb[0].mxu0
        %v1405 = vadd.f32 0.0, %v1404
        %v1406 = vpop.f32.mrb[0].mxu0
        %v1407 = vpop.f32.mrb[0].mxu0
        %v1408 = vadd.f32 0.0, %v1407
        %v1409 = vpop.f32.mrb[0].mxu0
        %1410 = vmatprep.mubr.bf16.mxu0 0
        %1411 = vmatmul.mubr.bf16.gmra.mrb[0].mxu0 %v528
        %v1412 = vpop.f32.mrb[0].mxu0
        %v1413 = vadd.f32 0.0, %v1412
        %v1414 = vpop.f32.mrb[0].mxu0
        %v1415 = vpop.f32.mrb[0].mxu0
        %v1416 = vadd.f32 0.0, %v1415
        %v1417 = vpop.f32.mrb[0].mxu0
        %1418 = vmatprep.mubr.bf16.mxu0 0
        %1419 = vmatmul.mubr.bf16.gmra.mrb[0].mxu0 %v1360
        %v1420 = vpop.f32.mrb[0].mxu0
        %v1421 = vadd.f32 0.0, %v1420
        %v1422 = vpop.f32.mrb[0].mxu0
        %v1423 = vpop.f32.mrb[0].mxu0
        %v1424 = vadd.f32 0.0, %v1423
        %v1425 = vpop.f32.mrb[0].mxu0
        %1426 = vdwg.mxu0
        %v1427 = vadd.f32 %v1333, %v1397
        %v1428 = vadd.f32 %v1334, %v1400
        %v1429 = vadd.f32 %v1335, %v1405
        %v1430 = vadd.f32 %v1336, %v1408
        %v1431 = vadd.f32 %v1337, %v1413
        %v1432 = vadd.f32 %v1338, %v1416
        %v1433 = vadd.f32 %v1339, %v1421
        %v1434 = vadd.f32 %v1340, %v1424
        %s1435 = scalar_lea.vmem %s1, 128
        %v1436 = vld [vmem:[%s1435] sm:$0xf]
        %v1437 = vld [vmem:[%s1435 + $0x4] sm:$0xf]
        %v1438 = vld [vmem:[%s1435 + $0x8] sm:$0xf]
        %v1439 = vld [vmem:[%s1435 + $0xc] sm:$0xf]
        %v1440 = vpack.c.b16 %v784, %v1145
        %v1445 = vunpack.c.l.b16 %v1436
        %v1446 = vunpack.c.l.b16 %v1437
        %v1447 = vunpack.c.l.b16 %v1438
        %v1448 = vunpack.c.l.b16 %v1439
        %v1449 = vpack.c.b16 %v1446, %v1445
        %v1450 = vpack.c.b16 %v1448, %v1447
        %v1454 = vsel %vm517, %v1440, 0
        %1456 = vmatprep.subr.bf16.mxu0 0
        %1457 = vmatpush1.bf16.msra.mxu0 %v1449
        %1458 = vmatprep.subr.bf16.mxu0 0
        %1459 = vmatpush1.bf16.msra.mxu0 %v1450
        %1460 = vmatprep.subr.bf16.mxu0 0
        %1461 = vmatpush1.bf16.msra.mxu0 0
        %1462 = vmatprep.subr.bf16.mxu0 0
        %1463 = vmatpush1.bf16.msra.mxu0 0
        %1464 = vmatprep.subr.bf16.mxu0 0
        %1465 = vmatpush1.bf16.msra.mxu0 0
        %1466 = vmatprep.subr.bf16.mxu0 0
        %1467 = vmatpush1.bf16.msra.mxu0 0
        %1468 = vmatprep.subr.bf16.mxu0 0
        %1469 = vmatpush1.bf16.msra.mxu0 0
        %1470 = vmatprep.subr.bf16.mxu0 0
        %1471 = vmatpush1.bf16.msra.mxu0 0
        %1472 = vmatprep.subr.bf16.mxu0 0
        %1473 = vmatpush1.bf16.msra.mxu0 0
        %1474 = vmatprep.subr.bf16.mxu0 0
        %1475 = vmatpush1.bf16.msra.mxu0 0
        %1476 = vmatprep.subr.bf16.mxu0 0
        %1477 = vmatpush1.bf16.msra.mxu0 0
        %1478 = vmatprep.subr.bf16.mxu0 0
        %1479 = vmatpush1.bf16.msra.mxu0 0
        %1480 = vmatprep.subr.bf16.mxu0 0
        %1481 = vmatpush1.bf16.msra.mxu0 0
        %1482 = vmatprep.subr.bf16.mxu0 0
        %1483 = vmatpush1.bf16.msra.mxu0 0
        %1484 = vmatprep.subr.bf16.mxu0 0
        %1485 = vmatpush1.bf16.msra.mxu0 0
        %1486 = vmatprep.subr.bf16.mxu0 0
        %1487 = vmatpush1.bf16.msra.mxu0 0
        %1488 = vmatprep.mubr.bf16.mxu0 0
        %1489 = vmatmul.mubr.bf16.gmra.mrb[0].mxu0 %v812
        %v1490 = vpop.f32.mrb[0].mxu0
        %v1491 = vadd.f32 0.0, %v1490
        %v1492 = vpop.f32.mrb[0].mxu0
        %v1493 = vpop.f32.mrb[0].mxu0
        %v1494 = vadd.f32 0.0, %v1493
        %v1495 = vpop.f32.mrb[0].mxu0
        %1496 = vmatprep.mubr.bf16.mxu0 0
        %1497 = vmatmul.mubr.bf16.gmra.mrb[0].mxu0 %v815
        %v1498 = vpop.f32.mrb[0].mxu0
        %v1499 = vadd.f32 0.0, %v1498
        %v1500 = vpop.f32.mrb[0].mxu0
        %v1501 = vpop.f32.mrb[0].mxu0
        %v1502 = vadd.f32 0.0, %v1501
        %v1503 = vpop.f32.mrb[0].mxu0
        %1504 = vmatprep.mubr.bf16.mxu0 0
        %1505 = vmatmul.mubr.bf16.gmra.mrb[0].mxu0 %v818
        %v1506 = vpop.f32.mrb[0].mxu0
        %v1507 = vadd.f32 0.0, %v1506
        %v1508 = vpop.f32.mrb[0].mxu0
        %v1509 = vpop.f32.mrb[0].mxu0
        %v1510 = vadd.f32 0.0, %v1509
        %v1511 = vpop.f32.mrb[0].mxu0
        %1512 = vmatprep.mubr.bf16.mxu0 0
        %1513 = vmatmul.mubr.bf16.gmra.mrb[0].mxu0 %v1454
        %v1514 = vpop.f32.mrb[0].mxu0
        %v1515 = vadd.f32 0.0, %v1514
        %v1516 = vpop.f32.mrb[0].mxu0
        %v1517 = vpop.f32.mrb[0].mxu0
        %v1518 = vadd.f32 0.0, %v1517
        %v1519 = vpop.f32.mrb[0].mxu0
        %1520 = vdwg.mxu0
        %v1521 = vadd.f32 %v1427, %v1491
        %v1522 = vadd.f32 %v1428, %v1494
        %v1523 = vadd.f32 %v1429, %v1499
        %v1524 = vadd.f32 %v1430, %v1502
        %v1525 = vadd.f32 %v1431, %v1507
        %v1526 = vadd.f32 %v1432, %v1510
        %v1527 = vadd.f32 %v1433, %v1515
        %v1528 = vadd.f32 %v1434, %v1518
        %v1529 = vld [vmem:[%s2] sm:$0x1]
        %v1530 = vlaneseq
        %v1531 = vshrl.u32 %v1530, 7
        %v1532 = vsub.s32 0, %v1531
        %v1533 = vrot.slane %v1529, %v1532
        %v1534 = vmul.f32 %v1521, %v1533
        %v1535 = vmul.f32 %v1522, %v1533
        %v1536 = vmul.f32 %v1523, %v1533
        %v1537 = vmul.f32 %v1524, %v1533
        %v1538 = vmul.f32 %v1525, %v1533
        %v1539 = vmul.f32 %v1526, %v1533
        %v1540 = vmul.f32 %v1527, %v1533
        %v1541 = vmul.f32 %v1528, %v1533
        %v1542 = vld [vmem:[%s3] sm:$0x1]
        %v1543 = vlaneseq
        %v1544 = vshrl.u32 %v1543, 7
        %v1545 = vsub.s32 0, %v1544
        %v1546 = vrot.slane %v1542, %v1545
        %v1547 = vadd.f32 %v1534, %v1546
        %v1548 = vadd.f32 %v1535, %v1546
        %v1549 = vadd.f32 %v1536, %v1546
        %v1550 = vadd.f32 %v1537, %v1546
        %v1551 = vadd.f32 %v1538, %v1546
        %v1552 = vadd.f32 %v1539, %v1546
        %v1553 = vadd.f32 %v1540, %v1546
        %v1554 = vadd.f32 %v1541, %v1546
        %v1555 = vmax.f32 %v1547, 0.0
        %v1556 = vmax.f32 %v1548, 0.0
        %v1557 = vmax.f32 %v1549, 0.0
        %v1558 = vmax.f32 %v1550, 0.0
        %v1559 = vmax.f32 %v1551, 0.0
        %v1560 = vmax.f32 %v1552, 0.0
        %v1561 = vmax.f32 %v1553, 0.0
        %v1562 = vmax.f32 %v1554, 0.0
        %v1563 = vpack.c.bf16 %v1556, %v1555
        %v1564 = vpack.c.bf16 %v1558, %v1557
        %v1565 = vpack.c.bf16 %v1560, %v1559
        %v1566 = vpack.c.bf16 %v1562, %v1561
        %v1571 = vunpack.c.l.b16 %v1563
        %v1572 = vunpack.c.h.b16 %v1563
        %v1573 = vunpack.c.l.b16 %v1564
        %v1574 = vunpack.c.h.b16 %v1564
        %v1575 = vunpack.c.l.b16 %v1565
        %v1576 = vunpack.c.h.b16 %v1565
        %v1577 = vunpack.c.l.b16 %v1566
        %v1578 = vunpack.c.h.b16 %v1566
        %v1579 = vpack.c.b16 %v1571, %v1571
        %v1580 = vpack.c.b16 %v1572, %v1572
        %v1581 = vpack.c.b16 %v1573, %v1573
        %v1582 = vpack.c.b16 %v1574, %v1574
        %v1583 = vpack.c.b16 %v1575, %v1575
        %v1584 = vpack.c.b16 %v1576, %v1576
        %v1585 = vpack.c.b16 %v1577, %v1577
        %v1586 = vpack.c.b16 %v1578, %v1578
        %vm1595 = vcmask 257024
        %1596 = vst.msk [vmem:[%s214] sm:$0xf] %vm1595, %v1579
        %1597 = vst.msk [vmem:[%s214 + $0x4] sm:$0xf] %vm1595, %v1580
        %1598 = vst.msk [vmem:[%s214 + $0x8] sm:$0xf] %vm1595, %v1581
        %1599 = vst.msk [vmem:[%s214 + $0xc] sm:$0xf] %vm1595, %v1582
        %1600 = vst.msk [vmem:[%s214 + $0x10] sm:$0xf] %vm1595, %v1583
        %1601 = vst.msk [vmem:[%s214 + $0x14] sm:$0xf] %vm1595, %v1584
        %1602 = vst.msk [vmem:[%s214 + $0x18] sm:$0xf] %vm1595, %v1585
        %1603 = vst.msk [vmem:[%s214 + $0x1c] sm:$0xf] %vm1595, %v1586
        %v1604 = vsel %vm517, %v1555, 0.0
        %v1605 = vsel %vm517, %v1556, 0.0
        %v1606 = vadd.f32 %v1604, %v1605
        %v1607 = vsel %vm517, %v1557, 0.0
        %v1608 = vadd.f32 %v1606, %v1607
        %v1609 = vsel %vm517, %v1558, 0.0
        %v1610 = vadd.f32 %v1608, %v1609
        %v1611 = vsel %vm517, %v1559, 0.0
        %v1612 = vadd.f32 %v1610, %v1611
        %v1613 = vsel %vm517, %v1560, 0.0
        %v1614 = vadd.f32 %v1612, %v1613
        %v1615 = vsel %vm517, %v1561, 0.0
        %v1616 = vadd.f32 %v1614, %v1615
        %v1617 = vsel %vm517, %v1562, 0.0
        %v1618 = vadd.f32 %v1616, %v1617
        %v1619 = vrot.slane %v1618, 4
        %v1620 = vadd.f32 %v1618, %v1619
        %v1621 = vrot.slane %v1620, 2
        %v1622 = vadd.f32 %v1620, %v1621
        %v1623 = vrot.slane %v1622, 1
        %v1624 = vadd.f32 %v1622, %v1623
        %vm1625 = vcmask 253952
        %1626 = vst.msk [vmem:[%s220] sm:$0x1] %vm1625, %v1624
        %s1627 = scalar_lea.vmem %s1, 144
        %v1628 = vld [vmem:[%s1627] sm:$0xf]
        %v1629 = vld [vmem:[%s1627 + $0x4] sm:$0xf]
        %v1630 = vld [vmem:[%s1627 + $0x8] sm:$0xf]
        %v1631 = vld [vmem:[%s1627 + $0xc] sm:$0xf]
        %s1632 = scalar_lea.vmem %s1, 160
        %v1633 = vld [vmem:[%s1632] sm:$0xf]
        %v1634 = vld [vmem:[%s1632 + $0x4] sm:$0xf]
        %v1635 = vld [vmem:[%s1632 + $0x8] sm:$0xf]
        %v1636 = vld [vmem:[%s1632 + $0xc] sm:$0xf]
        %v1637 = vpack.c.b16 %v493, %v493
        %v1642 = vunpack.c.l.b16 %v1633
        %v1643 = vunpack.c.l.b16 %v1634
        %v1644 = vunpack.c.l.b16 %v1635
        %v1645 = vunpack.c.l.b16 %v1636
        %v1646 = vpack.c.b16 %v1643, %v1642
        %v1647 = vpack.c.b16 %v1645, %v1644
        %v1651 = vsel %vm517, %v1637, 0
        %1653 = vmatprep.subr.bf16.mxu0 0
        %1654 = vmatpush1.bf16.msra.mxu0 %v1646
        %1655 = vmatprep.subr.bf16.mxu0 0
        %1656 = vmatpush1.bf16.msra.mxu0 %v1647
        %1657 = vmatprep.subr.bf16.mxu0 0
        %1658 = vmatpush1.bf16.msra.mxu0 0
        %1659 = vmatprep.subr.bf16.mxu0 0
        %1660 = vmatpush1.bf16.msra.mxu0 0
        %1661 = vmatprep.subr.bf16.mxu0 0
        %1662 = vmatpush1.bf16.msra.mxu0 0
        %1663 = vmatprep.subr.bf16.mxu0 0
        %1664 = vmatpush1.bf16.msra.mxu0 0
        %1665 = vmatprep.subr.bf16.mxu0 0
        %1666 = vmatpush1.bf16.msra.mxu0 0
        %1667 = vmatprep.subr.bf16.mxu0 0
        %1668 = vmatpush1.bf16.msra.mxu0 0
        %1669 = vmatprep.subr.bf16.mxu0 0
        %1670 = vmatpush1.bf16.msra.mxu0 0
        %1671 = vmatprep.subr.bf16.mxu0 0
        %1672 = vmatpush1.bf16.msra.mxu0 0
        %1673 = vmatprep.subr.bf16.mxu0 0
        %1674 = vmatpush1.bf16.msra.mxu0 0
        %1675 = vmatprep.subr.bf16.mxu0 0
        %1676 = vmatpush1.bf16.msra.mxu0 0
        %1677 = vmatprep.subr.bf16.mxu0 0
        %1678 = vmatpush1.bf16.msra.mxu0 0
        %1679 = vmatprep.subr.bf16.mxu0 0
        %1680 = vmatpush1.bf16.msra.mxu0 0
        %1681 = vmatprep.subr.bf16.mxu0 0
        %1682 = vmatpush1.bf16.msra.mxu0 0
        %1683 = vmatprep.subr.bf16.mxu0 0
        %1684 = vmatpush1.bf16.msra.mxu0 0
        %1685 = vmatprep.mubr.bf16.mxu0 0
        %1686 = vmatmul.mubr.bf16.gmra.mrb[0].mxu0 %v1651
        %v1687 = vpop.f32.mrb[0].mxu0
        %v1688 = vadd.f32 0.0, %v1687
        %v1689 = vpop.f32.mrb[0].mxu0
        %v1690 = vpop.f32.mrb[0].mxu0
        %v1691 = vadd.f32 0.0, %v1690
        %v1692 = vpop.f32.mrb[0].mxu0
        %1693 = vmatprep.mubr.bf16.mxu0 0
        %1694 = vmatmul.mubr.bf16.gmra.mrb[0].mxu0 %v1046
        %v1695 = vpop.f32.mrb[0].mxu0
        %v1696 = vadd.f32 0.0, %v1695
        %v1697 = vpop.f32.mrb[0].mxu0
        %v1698 = vpop.f32.mrb[0].mxu0
        %v1699 = vadd.f32 0.0, %v1698
        %v1700 = vpop.f32.mrb[0].mxu0
        %1701 = vmatprep.mubr.bf16.mxu0 0
        %1702 = vmatmul.mubr.bf16.gmra.mrb[0].mxu0 %v1049
        %v1703 = vpop.f32.mrb[0].mxu0
        %v1704 = vadd.f32 0.0, %v1703
        %v1705 = vpop.f32.mrb[0].mxu0
        %v1706 = vpop.f32.mrb[0].mxu0
        %v1707 = vadd.f32 0.0, %v1706
        %v1708 = vpop.f32.mrb[0].mxu0
        %1709 = vmatprep.mubr.bf16.mxu0 0
        %1710 = vmatmul.mubr.bf16.gmra.mrb[0].mxu0 %v1052
        %v1711 = vpop.f32.mrb[0].mxu0
        %v1712 = vadd.f32 0.0, %v1711
        %v1713 = vpop.f32.mrb[0].mxu0
        %v1714 = vpop.f32.mrb[0].mxu0
        %v1715 = vadd.f32 0.0, %v1714
        %v1716 = vpop.f32.mrb[0].mxu0
        %1717 = vdwg.mxu0
        %v1718 = vpack.c.b16 %v306, %v304
        %v1719 = vpack.c.b16 %v310, %v308
        %v1720 = vpack.c.b16 %v314, %v312
        %v1725 = vunpack.c.l.b16 %v1628
        %v1726 = vunpack.c.l.b16 %v1629
        %v1727 = vunpack.c.l.b16 %v1630
        %v1728 = vunpack.c.l.b16 %v1631
        %v1729 = vpack.c.b16 %v1726, %v1725
        %v1730 = vpack.c.b16 %v1728, %v1727
        %v1733 = vsel %vm517, %v318, 0
        %v1736 = vsel %vm517, %v1718, 0
        %v1739 = vsel %vm517, %v1719, 0
        %v1742 = vsel %vm517, %v1720, 0
        %1744 = vmatprep.subr.bf16.mxu0 0
        %1745 = vmatpush1.bf16.msra.mxu0 %v1729
        %1746 = vmatprep.subr.bf16.mxu0 0
        %1747 = vmatpush1.bf16.msra.mxu0 %v1730
        %1748 = vmatprep.subr.bf16.mxu0 0
        %1749 = vmatpush1.bf16.msra.mxu0 0
        %1750 = vmatprep.subr.bf16.mxu0 0
        %1751 = vmatpush1.bf16.msra.mxu0 0
        %1752 = vmatprep.subr.bf16.mxu0 0
        %1753 = vmatpush1.bf16.msra.mxu0 0
        %1754 = vmatprep.subr.bf16.mxu0 0
        %1755 = vmatpush1.bf16.msra.mxu0 0
        %1756 = vmatprep.subr.bf16.mxu0 0
        %1757 = vmatpush1.bf16.msra.mxu0 0
        %1758 = vmatprep.subr.bf16.mxu0 0
        %1759 = vmatpush1.bf16.msra.mxu0 0
        %1760 = vmatprep.subr.bf16.mxu0 0
        %1761 = vmatpush1.bf16.msra.mxu0 0
        %1762 = vmatprep.subr.bf16.mxu0 0
        %1763 = vmatpush1.bf16.msra.mxu0 0
        %1764 = vmatprep.subr.bf16.mxu0 0
        %1765 = vmatpush1.bf16.msra.mxu0 0
        %1766 = vmatprep.subr.bf16.mxu0 0
        %1767 = vmatpush1.bf16.msra.mxu0 0
        %1768 = vmatprep.subr.bf16.mxu0 0
        %1769 = vmatpush1.bf16.msra.mxu0 0
        %1770 = vmatprep.subr.bf16.mxu0 0
        %1771 = vmatpush1.bf16.msra.mxu0 0
        %1772 = vmatprep.subr.bf16.mxu0 0
        %1773 = vmatpush1.bf16.msra.mxu0 0
        %1774 = vmatprep.subr.bf16.mxu0 0
        %1775 = vmatpush1.bf16.msra.mxu0 0
        %1776 = vmatprep.mubr.bf16.mxu0 0
        %1777 = vmatmul.mubr.bf16.gmra.mrb[0].mxu0 %v1733
        %v1778 = vpop.f32.mrb[0].mxu0
        %v1779 = vadd.f32 %v1688, %v1778
        %v1780 = vpop.f32.mrb[0].mxu0
        %v1781 = vpop.f32.mrb[0].mxu0
        %v1782 = vadd.f32 %v1691, %v1781
        %v1783 = vpop.f32.mrb[0].mxu0
        %1784 = vmatprep.mubr.bf16.mxu0 0
        %1785 = vmatmul.mubr.bf16.gmra.mrb[0].mxu0 %v1736
        %v1786 = vpop.f32.mrb[0].mxu0
        %v1787 = vadd.f32 %v1696, %v1786
        %v1788 = vpop.f32.mrb[0].mxu0
        %v1789 = vpop.f32.mrb[0].mxu0
        %v1790 = vadd.f32 %v1699, %v1789
        %v1791 = vpop.f32.mrb[0].mxu0
        %1792 = vmatprep.mubr.bf16.mxu0 0
        %1793 = vmatmul.mubr.bf16.gmra.mrb[0].mxu0 %v1739
        %v1794 = vpop.f32.mrb[0].mxu0
        %v1795 = vadd.f32 %v1704, %v1794
        %v1796 = vpop.f32.mrb[0].mxu0
        %v1797 = vpop.f32.mrb[0].mxu0
        %v1798 = vadd.f32 %v1707, %v1797
        %v1799 = vpop.f32.mrb[0].mxu0
        %1800 = vmatprep.mubr.bf16.mxu0 0
        %1801 = vmatmul.mubr.bf16.gmra.mrb[0].mxu0 %v1742
        %v1802 = vpop.f32.mrb[0].mxu0
        %v1803 = vadd.f32 %v1712, %v1802
        %v1804 = vpop.f32.mrb[0].mxu0
        %v1805 = vpop.f32.mrb[0].mxu0
        %v1806 = vadd.f32 %v1715, %v1805
        %v1807 = vpop.f32.mrb[0].mxu0
        %1808 = vdwg.mxu0
        %vm1809 = vcmask 1041408
        %vm1810 = vcmask 1045508
        %vm1811 = vmor %vm1809, %vm1810
        %v1812 = vrot.slane %v318, 6
        %v1813 = vrot.slane %v1812, 4
        %v1814 = vrot.slane %v319, 6
        %v1815 = vsel %vm1811, %v1813, %v1814
        %v1816 = vrot.slane %v320, 6
        %v1817 = vrot.slane %v1816, 4
        %v1818 = vrot.slane %v321, 6
        %v1819 = vsel %vm1811, %v1817, %v1818
        %v1820 = vrot.slane %v322, 6
        %v1821 = vrot.slane %v1820, 4
        %v1822 = vrot.slane %v323, 6
        %v1823 = vsel %vm1811, %v1821, %v1822
        %v1824 = vrot.slane %v324, 6
        %v1825 = vrot.slane %v1824, 4
        %v1826 = vrot.slane %v325, 6
        %v1827 = vsel %vm1811, %v1825, %v1826
        %v1828 = vrot.slane %v326, 6
        %v1829 = vrot.slane %v1828, 4
        %v1830 = vrot.slane %v327, 6
        %v1831 = vsel %vm1811, %v1829, %v1830
        %v1832 = vrot.slane %v328, 6
        %v1833 = vrot.slane %v1832, 4
        %v1834 = vrot.slane %v329, 6
        %v1835 = vsel %vm1811, %v1833, %v1834
        %v1836 = vrot.slane %v330, 6
        %v1837 = vrot.slane %v1836, 4
        %v1838 = vrot.slane %v331, 6
        %v1839 = vsel %vm1811, %v1837, %v1838
        %s1840 = scalar_lea.vmem %s1, 176
        %v1841 = vld [vmem:[%s1840] sm:$0xf]
        %v1842 = vld [vmem:[%s1840 + $0x4] sm:$0xf]
        %v1843 = vld [vmem:[%s1840 + $0x8] sm:$0xf]
        %v1844 = vld [vmem:[%s1840 + $0xc] sm:$0xf]
        %v1845 = vunpack.c.l.b16 %v1815
        %v1846 = vunpack.c.l.b16 %v1819
        %v1847 = vunpack.c.l.b16 %v1823
        %v1848 = vunpack.c.l.b16 %v1827
        %v1849 = vunpack.c.l.b16 %v1831
        %v1850 = vunpack.c.l.b16 %v1835
        %v1851 = vunpack.c.l.b16 %v1839
        %v1852 = vpack.c.b16 %v1845, %v1845
        %v1853 = vpack.c.b16 %v1847, %v1846
        %v1854 = vpack.c.b16 %v1849, %v1848
        %v1855 = vpack.c.b16 %v1851, %v1850
        %v1860 = vunpack.c.l.b16 %v1841
        %v1861 = vunpack.c.l.b16 %v1842
        %v1862 = vunpack.c.l.b16 %v1843
        %v1863 = vunpack.c.l.b16 %v1844
        %v1864 = vpack.c.b16 %v1861, %v1860
        %v1865 = vpack.c.b16 %v1863, %v1862
        %v1869 = vsel %vm517, %v1852, 0
        %v1872 = vsel %vm517, %v1853, 0
        %v1875 = vsel %vm517, %v1854, 0
        %v1878 = vsel %vm517, %v1855, 0
        %1880 = vmatprep.subr.bf16.mxu0 0
        %1881 = vmatpush1.bf16.msra.mxu0 %v1864
        %1882 = vmatprep.subr.bf16.mxu0 0
        %1883 = vmatpush1.bf16.msra.mxu0 %v1865
        %1884 = vmatprep.subr.bf16.mxu0 0
        %1885 = vmatpush1.bf16.msra.mxu0 0
        %1886 = vmatprep.subr.bf16.mxu0 0
        %1887 = vmatpush1.bf16.msra.mxu0 0
        %1888 = vmatprep.subr.bf16.mxu0 0
        %1889 = vmatpush1.bf16.msra.mxu0 0
        %1890 = vmatprep.subr.bf16.mxu0 0
        %1891 = vmatpush1.bf16.msra.mxu0 0
        %1892 = vmatprep.subr.bf16.mxu0 0
        %1893 = vmatpush1.bf16.msra.mxu0 0
        %1894 = vmatprep.subr.bf16.mxu0 0
        %1895 = vmatpush1.bf16.msra.mxu0 0
        %1896 = vmatprep.subr.bf16.mxu0 0
        %1897 = vmatpush1.bf16.msra.mxu0 0
        %1898 = vmatprep.subr.bf16.mxu0 0
        %1899 = vmatpush1.bf16.msra.mxu0 0
        %1900 = vmatprep.subr.bf16.mxu0 0
        %1901 = vmatpush1.bf16.msra.mxu0 0
        %1902 = vmatprep.subr.bf16.mxu0 0
        %1903 = vmatpush1.bf16.msra.mxu0 0
        %1904 = vmatprep.subr.bf16.mxu0 0
        %1905 = vmatpush1.bf16.msra.mxu0 0
        %1906 = vmatprep.subr.bf16.mxu0 0
        %1907 = vmatpush1.bf16.msra.mxu0 0
        %1908 = vmatprep.subr.bf16.mxu0 0
        %1909 = vmatpush1.bf16.msra.mxu0 0
        %1910 = vmatprep.subr.bf16.mxu0 0
        %1911 = vmatpush1.bf16.msra.mxu0 0
        %1912 = vmatprep.mubr.bf16.mxu0 0
        %1913 = vmatmul.mubr.bf16.gmra.mrb[0].mxu0 %v1869
        %v1914 = vpop.f32.mrb[0].mxu0
        %v1915 = vadd.f32 0.0, %v1914
        %v1916 = vpop.f32.mrb[0].mxu0
        %v1917 = vpop.f32.mrb[0].mxu0
        %v1918 = vadd.f32 0.0, %v1917
        %v1919 = vpop.f32.mrb[0].mxu0
        %1920 = vmatprep.mubr.bf16.mxu0 0
        %1921 = vmatmul.mubr.bf16.gmra.mrb[0].mxu0 %v1872
        %v1922 = vpop.f32.mrb[0].mxu0
        %v1923 = vadd.f32 0.0, %v1922
        %v1924 = vpop.f32.mrb[0].mxu0
        %v1925 = vpop.f32.mrb[0].mxu0
        %v1926 = vadd.f32 0.0, %v1925
        %v1927 = vpop.f32.mrb[0].mxu0
        %1928 = vmatprep.mubr.bf16.mxu0 0
        %1929 = vmatmul.mubr.bf16.gmra.mrb[0].mxu0 %v1875
        %v1930 = vpop.f32.mrb[0].mxu0
        %v1931 = vadd.f32 0.0, %v1930
        %v1932 = vpop.f32.mrb[0].mxu0
        %v1933 = vpop.f32.mrb[0].mxu0
        %v1934 = vadd.f32 0.0, %v1933
        %v1935 = vpop.f32.mrb[0].mxu0
        %1936 = vmatprep.mubr.bf16.mxu0 0
        %1937 = vmatmul.mubr.bf16.gmra.mrb[0].mxu0 %v1878
        %v1938 = vpop.f32.mrb[0].mxu0
        %v1939 = vadd.f32 0.0, %v1938
        %v1940 = vpop.f32.mrb[0].mxu0
        %v1941 = vpop.f32.mrb[0].mxu0
        %v1942 = vadd.f32 0.0, %v1941
        %v1943 = vpop.f32.mrb[0].mxu0
        %1944 = vdwg.mxu0
        %v1945 = vadd.f32 %v1779, %v1915
        %v1946 = vadd.f32 %v1782, %v1918
        %v1947 = vadd.f32 %v1787, %v1923
        %v1948 = vadd.f32 %v1790, %v1926
        %v1949 = vadd.f32 %v1795, %v1931
        %v1950 = vadd.f32 %v1798, %v1934
        %v1951 = vadd.f32 %v1803, %v1939
        %v1952 = vadd.f32 %v1806, %v1942
        %s1953 = scalar_lea.vmem %s1, 192
        %v1954 = vld [vmem:[%s1953] sm:$0xf]
        %v1955 = vld [vmem:[%s1953 + $0x4] sm:$0xf]
        %v1956 = vld [vmem:[%s1953 + $0x8] sm:$0xf]
        %v1957 = vld [vmem:[%s1953 + $0xc] sm:$0xf]
        %v1958 = vpack.c.b16 %v894, %v316
        %v1963 = vunpack.c.l.b16 %v1954
        %v1964 = vunpack.c.l.b16 %v1955
        %v1965 = vunpack.c.l.b16 %v1956
        %v1966 = vunpack.c.l.b16 %v1957
        %v1967 = vpack.c.b16 %v1964, %v1963
        %v1968 = vpack.c.b16 %v1966, %v1965
        %v1972 = vsel %vm517, %v1958, 0
        %1974 = vmatprep.subr.bf16.mxu0 0
        %1975 = vmatpush1.bf16.msra.mxu0 %v1967
        %1976 = vmatprep.subr.bf16.mxu0 0
        %1977 = vmatpush1.bf16.msra.mxu0 %v1968
        %1978 = vmatprep.subr.bf16.mxu0 0
        %1979 = vmatpush1.bf16.msra.mxu0 0
        %1980 = vmatprep.subr.bf16.mxu0 0
        %1981 = vmatpush1.bf16.msra.mxu0 0
        %1982 = vmatprep.subr.bf16.mxu0 0
        %1983 = vmatpush1.bf16.msra.mxu0 0
        %1984 = vmatprep.subr.bf16.mxu0 0
        %1985 = vmatpush1.bf16.msra.mxu0 0
        %1986 = vmatprep.subr.bf16.mxu0 0
        %1987 = vmatpush1.bf16.msra.mxu0 0
        %1988 = vmatprep.subr.bf16.mxu0 0
        %1989 = vmatpush1.bf16.msra.mxu0 0
        %1990 = vmatprep.subr.bf16.mxu0 0
        %1991 = vmatpush1.bf16.msra.mxu0 0
        %1992 = vmatprep.subr.bf16.mxu0 0
        %1993 = vmatpush1.bf16.msra.mxu0 0
        %1994 = vmatprep.subr.bf16.mxu0 0
        %1995 = vmatpush1.bf16.msra.mxu0 0
        %1996 = vmatprep.subr.bf16.mxu0 0
        %1997 = vmatpush1.bf16.msra.mxu0 0
        %1998 = vmatprep.subr.bf16.mxu0 0
        %1999 = vmatpush1.bf16.msra.mxu0 0
        %2000 = vmatprep.subr.bf16.mxu0 0
        %2001 = vmatpush1.bf16.msra.mxu0 0
        %2002 = vmatprep.subr.bf16.mxu0 0
        %2003 = vmatpush1.bf16.msra.mxu0 0
        %2004 = vmatprep.subr.bf16.mxu0 0
        %2005 = vmatpush1.bf16.msra.mxu0 0
        %2006 = vmatprep.mubr.bf16.mxu0 0
        %2007 = vmatmul.mubr.bf16.gmra.mrb[0].mxu0 %v1736
        %v2008 = vpop.f32.mrb[0].mxu0
        %v2009 = vadd.f32 0.0, %v2008
        %v2010 = vpop.f32.mrb[0].mxu0
        %v2011 = vpop.f32.mrb[0].mxu0
        %v2012 = vadd.f32 0.0, %v2011
        %v2013 = vpop.f32.mrb[0].mxu0
        %2014 = vmatprep.mubr.bf16.mxu0 0
        %2015 = vmatmul.mubr.bf16.gmra.mrb[0].mxu0 %v1739
        %v2016 = vpop.f32.mrb[0].mxu0
        %v2017 = vadd.f32 0.0, %v2016
        %v2018 = vpop.f32.mrb[0].mxu0
        %v2019 = vpop.f32.mrb[0].mxu0
        %v2020 = vadd.f32 0.0, %v2019
        %v2021 = vpop.f32.mrb[0].mxu0
        %2022 = vmatprep.mubr.bf16.mxu0 0
        %2023 = vmatmul.mubr.bf16.gmra.mrb[0].mxu0 %v1742
        %v2024 = vpop.f32.mrb[0].mxu0
        %v2025 = vadd.f32 0.0, %v2024
        %v2026 = vpop.f32.mrb[0].mxu0
        %v2027 = vpop.f32.mrb[0].mxu0
        %v2028 = vadd.f32 0.0, %v2027
        %v2029 = vpop.f32.mrb[0].mxu0
        %2030 = vmatprep.mubr.bf16.mxu0 0
        %2031 = vmatmul.mubr.bf16.gmra.mrb[0].mxu0 %v1972
        %v2032 = vpop.f32.mrb[0].mxu0
        %v2033 = vadd.f32 0.0, %v2032
        %v2034 = vpop.f32.mrb[0].mxu0
        %v2035 = vpop.f32.mrb[0].mxu0
        %v2036 = vadd.f32 0.0, %v2035
        %v2037 = vpop.f32.mrb[0].mxu0
        %2038 = vdwg.mxu0
        %v2039 = vadd.f32 %v1945, %v2009
        %v2040 = vadd.f32 %v1946, %v2012
        %v2041 = vadd.f32 %v1947, %v2017
        %v2042 = vadd.f32 %v1948, %v2020
        %v2043 = vadd.f32 %v1949, %v2025
        %v2044 = vadd.f32 %v1950, %v2028
        %v2045 = vadd.f32 %v1951, %v2033
        %v2046 = vadd.f32 %v1952, %v2036
        %s2047 = scalar_lea.vmem %s1, 208
        %v2048 = vld [vmem:[%s2047] sm:$0xf]
        %v2049 = vld [vmem:[%s2047 + $0x4] sm:$0xf]
        %v2050 = vld [vmem:[%s2047 + $0x8] sm:$0xf]
        %v2051 = vld [vmem:[%s2047 + $0xc] sm:$0xf]
        %v2056 = vunpack.c.l.b16 %v2048
        %v2057 = vunpack.c.l.b16 %v2049
        %v2058 = vunpack.c.l.b16 %v2050
        %v2059 = vunpack.c.l.b16 %v2051
        %v2060 = vpack.c.b16 %v2057, %v2056
        %v2061 = vpack.c.b16 %v2059, %v2058
        %2064 = vmatprep.subr.bf16.mxu0 0
        %2065 = vmatpush1.bf16.msra.mxu0 %v2060
        %2066 = vmatprep.subr.bf16.mxu0 0
        %2067 = vmatpush1.bf16.msra.mxu0 %v2061
        %2068 = vmatprep.subr.bf16.mxu0 0
        %2069 = vmatpush1.bf16.msra.mxu0 0
        %2070 = vmatprep.subr.bf16.mxu0 0
        %2071 = vmatpush1.bf16.msra.mxu0 0
        %2072 = vmatprep.subr.bf16.mxu0 0
        %2073 = vmatpush1.bf16.msra.mxu0 0
        %2074 = vmatprep.subr.bf16.mxu0 0
        %2075 = vmatpush1.bf16.msra.mxu0 0
        %2076 = vmatprep.subr.bf16.mxu0 0
        %2077 = vmatpush1.bf16.msra.mxu0 0
        %2078 = vmatprep.subr.bf16.mxu0 0
        %2079 = vmatpush1.bf16.msra.mxu0 0
        %2080 = vmatprep.subr.bf16.mxu0 0
        %2081 = vmatpush1.bf16.msra.mxu0 0
        %2082 = vmatprep.subr.bf16.mxu0 0
        %2083 = vmatpush1.bf16.msra.mxu0 0
        %2084 = vmatprep.subr.bf16.mxu0 0
        %2085 = vmatpush1.bf16.msra.mxu0 0
        %2086 = vmatprep.subr.bf16.mxu0 0
        %2087 = vmatpush1.bf16.msra.mxu0 0
        %2088 = vmatprep.subr.bf16.mxu0 0
        %2089 = vmatpush1.bf16.msra.mxu0 0
        %2090 = vmatprep.subr.bf16.mxu0 0
        %2091 = vmatpush1.bf16.msra.mxu0 0
        %2092 = vmatprep.subr.bf16.mxu0 0
        %2093 = vmatpush1.bf16.msra.mxu0 0
        %2094 = vmatprep.subr.bf16.mxu0 0
        %2095 = vmatpush1.bf16.msra.mxu0 0
        %2096 = vmatprep.mubr.bf16.mxu0 0
        %2097 = vmatmul.mubr.bf16.gmra.mrb[0].mxu0 %v1046
        %v2098 = vpop.f32.mrb[0].mxu0
        %v2099 = vadd.f32 0.0, %v2098
        %v2100 = vpop.f32.mrb[0].mxu0
        %v2101 = vpop.f32.mrb[0].mxu0
        %v2102 = vadd.f32 0.0, %v2101
        %v2103 = vpop.f32.mrb[0].mxu0
        %2104 = vmatprep.mubr.bf16.mxu0 0
        %2105 = vmatmul.mubr.bf16.gmra.mrb[0].mxu0 %v1049
        %v2106 = vpop.f32.mrb[0].mxu0
        %v2107 = vadd.f32 0.0, %v2106
        %v2108 = vpop.f32.mrb[0].mxu0
        %v2109 = vpop.f32.mrb[0].mxu0
        %v2110 = vadd.f32 0.0, %v2109
        %v2111 = vpop.f32.mrb[0].mxu0
        %2112 = vmatprep.mubr.bf16.mxu0 0
        %2113 = vmatmul.mubr.bf16.gmra.mrb[0].mxu0 %v1052
        %v2114 = vpop.f32.mrb[0].mxu0
        %v2115 = vadd.f32 0.0, %v2114
        %v2116 = vpop.f32.mrb[0].mxu0
        %v2117 = vpop.f32.mrb[0].mxu0
        %v2118 = vadd.f32 0.0, %v2117
        %v2119 = vpop.f32.mrb[0].mxu0
        %2120 = vmatprep.mubr.bf16.mxu0 0
        %2121 = vmatmul.mubr.bf16.gmra.mrb[0].mxu0 %v1055
        %v2122 = vpop.f32.mrb[0].mxu0
        %v2123 = vadd.f32 0.0, %v2122
        %v2124 = vpop.f32.mrb[0].mxu0
        %v2125 = vpop.f32.mrb[0].mxu0
        %v2126 = vadd.f32 0.0, %v2125
        %v2127 = vpop.f32.mrb[0].mxu0
        %2128 = vdwg.mxu0
        %v2129 = vadd.f32 %v2039, %v2099
        %v2130 = vadd.f32 %v2040, %v2102
        %v2131 = vadd.f32 %v2041, %v2107
        %v2132 = vadd.f32 %v2042, %v2110
        %v2133 = vadd.f32 %v2043, %v2115
        %v2134 = vadd.f32 %v2044, %v2118
        %v2135 = vadd.f32 %v2045, %v2123
        %v2136 = vadd.f32 %v2046, %v2126
        %v2137 = vrot.slane %v332, 6
        %v2138 = vrot.slane %v2137, 4
        %v2139 = vrot.slane %v333, 6
        %v2140 = vsel %vm1811, %v2138, %v2139
        %v2141 = vrot.slane %v896, 6
        %v2142 = vrot.slane %v2141, 4
        %v2143 = vrot.slane %v897, 6
        %v2144 = vsel %vm1811, %v2142, %v2143
        %s2145 = scalar_lea.vmem %s1, 224
        %v2146 = vld [vmem:[%s2145] sm:$0xf]
        %v2147 = vld [vmem:[%s2145 + $0x4] sm:$0xf]
        %v2148 = vld [vmem:[%s2145 + $0x8] sm:$0xf]
        %v2149 = vld [vmem:[%s2145 + $0xc] sm:$0xf]
        %v2150 = vunpack.c.l.b16 %v2140
        %v2151 = vunpack.c.l.b16 %v2144
        %v2152 = vpack.c.b16 %v2151, %v2150
        %v2157 = vunpack.c.l.b16 %v2146
        %v2158 = vunpack.c.l.b16 %v2147
        %v2159 = vunpack.c.l.b16 %v2148
        %v2160 = vunpack.c.l.b16 %v2149
        %v2161 = vpack.c.b16 %v2158, %v2157
        %v2162 = vpack.c.b16 %v2160, %v2159
        %v2166 = vsel %vm517, %v2152, 0
        %2168 = vmatprep.subr.bf16.mxu0 0
        %2169 = vmatpush1.bf16.msra.mxu0 %v2161
        %2170 = vmatprep.subr.bf16.mxu0 0
        %2171 = vmatpush1.bf16.msra.mxu0 %v2162
        %2172 = vmatprep.subr.bf16.mxu0 0
        %2173 = vmatpush1.bf16.msra.mxu0 0
        %2174 = vmatprep.subr.bf16.mxu0 0
        %2175 = vmatpush1.bf16.msra.mxu0 0
        %2176 = vmatprep.subr.bf16.mxu0 0
        %2177 = vmatpush1.bf16.msra.mxu0 0
        %2178 = vmatprep.subr.bf16.mxu0 0
        %2179 = vmatpush1.bf16.msra.mxu0 0
        %2180 = vmatprep.subr.bf16.mxu0 0
        %2181 = vmatpush1.bf16.msra.mxu0 0
        %2182 = vmatprep.subr.bf16.mxu0 0
        %2183 = vmatpush1.bf16.msra.mxu0 0
        %2184 = vmatprep.subr.bf16.mxu0 0
        %2185 = vmatpush1.bf16.msra.mxu0 0
        %2186 = vmatprep.subr.bf16.mxu0 0
        %2187 = vmatpush1.bf16.msra.mxu0 0
        %2188 = vmatprep.subr.bf16.mxu0 0
        %2189 = vmatpush1.bf16.msra.mxu0 0
        %2190 = vmatprep.subr.bf16.mxu0 0
        %2191 = vmatpush1.bf16.msra.mxu0 0
        %2192 = vmatprep.subr.bf16.mxu0 0
        %2193 = vmatpush1.bf16.msra.mxu0 0
        %2194 = vmatprep.subr.bf16.mxu0 0
        %2195 = vmatpush1.bf16.msra.mxu0 0
        %2196 = vmatprep.subr.bf16.mxu0 0
        %2197 = vmatpush1.bf16.msra.mxu0 0
        %2198 = vmatprep.subr.bf16.mxu0 0
        %2199 = vmatpush1.bf16.msra.mxu0 0
        %2200 = vmatprep.mubr.bf16.mxu0 0
        %2201 = vmatmul.mubr.bf16.gmra.mrb[0].mxu0 %v1872
        %v2202 = vpop.f32.mrb[0].mxu0
        %v2203 = vadd.f32 0.0, %v2202
        %v2204 = vpop.f32.mrb[0].mxu0
        %v2205 = vpop.f32.mrb[0].mxu0
        %v2206 = vadd.f32 0.0, %v2205
        %v2207 = vpop.f32.mrb[0].mxu0
        %2208 = vmatprep.mubr.bf16.mxu0 0
        %2209 = vmatmul.mubr.bf16.gmra.mrb[0].mxu0 %v1875
        %v2210 = vpop.f32.mrb[0].mxu0
        %v2211 = vadd.f32 0.0, %v2210
        %v2212 = vpop.f32.mrb[0].mxu0
        %v2213 = vpop.f32.mrb[0].mxu0
        %v2214 = vadd.f32 0.0, %v2213
        %v2215 = vpop.f32.mrb[0].mxu0
        %2216 = vmatprep.mubr.bf16.mxu0 0
        %2217 = vmatmul.mubr.bf16.gmra.mrb[0].mxu0 %v1878
        %v2218 = vpop.f32.mrb[0].mxu0
        %v2219 = vadd.f32 0.0, %v2218
        %v2220 = vpop.f32.mrb[0].mxu0
        %v2221 = vpop.f32.mrb[0].mxu0
        %v2222 = vadd.f32 0.0, %v2221
        %v2223 = vpop.f32.mrb[0].mxu0
        %2224 = vmatprep.mubr.bf16.mxu0 0
        %2225 = vmatmul.mubr.bf16.gmra.mrb[0].mxu0 %v2166
        %v2226 = vpop.f32.mrb[0].mxu0
        %v2227 = vadd.f32 0.0, %v2226
        %v2228 = vpop.f32.mrb[0].mxu0
        %v2229 = vpop.f32.mrb[0].mxu0
        %v2230 = vadd.f32 0.0, %v2229
        %v2231 = vpop.f32.mrb[0].mxu0
        %2232 = vdwg.mxu0
        %v2233 = vadd.f32 %v2129, %v2203
        %v2234 = vadd.f32 %v2130, %v2206
        %v2235 = vadd.f32 %v2131, %v2211
        %v2236 = vadd.f32 %v2132, %v2214
        %v2237 = vadd.f32 %v2133, %v2219
        %v2238 = vadd.f32 %v2134, %v2222
        %v2239 = vadd.f32 %v2135, %v2227
        %v2240 = vadd.f32 %v2136, %v2230
        %s2241 = scalar_lea.vmem %s1, 240
        %v2242 = vld [vmem:[%s2241] sm:$0xf]
        %v2243 = vld [vmem:[%s2241 + $0x4] sm:$0xf]
        %v2244 = vld [vmem:[%s2241 + $0x8] sm:$0xf]
        %v2245 = vld [vmem:[%s2241 + $0xc] sm:$0xf]
        %v2250 = vunpack.c.l.b16 %v2242
        %v2251 = vunpack.c.l.b16 %v2243
        %v2252 = vunpack.c.l.b16 %v2244
        %v2253 = vunpack.c.l.b16 %v2245
        %v2254 = vpack.c.b16 %v2251, %v2250
        %v2255 = vpack.c.b16 %v2253, %v2252
        %2258 = vmatprep.subr.bf16.mxu0 0
        %2259 = vmatpush1.bf16.msra.mxu0 %v2254
        %2260 = vmatprep.subr.bf16.mxu0 0
        %2261 = vmatpush1.bf16.msra.mxu0 %v2255
        %2262 = vmatprep.subr.bf16.mxu0 0
        %2263 = vmatpush1.bf16.msra.mxu0 0
        %2264 = vmatprep.subr.bf16.mxu0 0
        %2265 = vmatpush1.bf16.msra.mxu0 0
        %2266 = vmatprep.subr.bf16.mxu0 0
        %2267 = vmatpush1.bf16.msra.mxu0 0
        %2268 = vmatprep.subr.bf16.mxu0 0
        %2269 = vmatpush1.bf16.msra.mxu0 0
        %2270 = vmatprep.subr.bf16.mxu0 0
        %2271 = vmatpush1.bf16.msra.mxu0 0
        %2272 = vmatprep.subr.bf16.mxu0 0
        %2273 = vmatpush1.bf16.msra.mxu0 0
        %2274 = vmatprep.subr.bf16.mxu0 0
        %2275 = vmatpush1.bf16.msra.mxu0 0
        %2276 = vmatprep.subr.bf16.mxu0 0
        %2277 = vmatpush1.bf16.msra.mxu0 0
        %2278 = vmatprep.subr.bf16.mxu0 0
        %2279 = vmatpush1.bf16.msra.mxu0 0
        %2280 = vmatprep.subr.bf16.mxu0 0
        %2281 = vmatpush1.bf16.msra.mxu0 0
        %2282 = vmatprep.subr.bf16.mxu0 0
        %2283 = vmatpush1.bf16.msra.mxu0 0
        %2284 = vmatprep.subr.bf16.mxu0 0
        %2285 = vmatpush1.bf16.msra.mxu0 0
        %2286 = vmatprep.subr.bf16.mxu0 0
        %2287 = vmatpush1.bf16.msra.mxu0 0
        %2288 = vmatprep.subr.bf16.mxu0 0
        %2289 = vmatpush1.bf16.msra.mxu0 0
        %2290 = vmatprep.mubr.bf16.mxu0 0
        %2291 = vmatmul.mubr.bf16.gmra.mrb[0].mxu0 %v1739
        %v2292 = vpop.f32.mrb[0].mxu0
        %v2293 = vadd.f32 0.0, %v2292
        %v2294 = vpop.f32.mrb[0].mxu0
        %v2295 = vpop.f32.mrb[0].mxu0
        %v2296 = vadd.f32 0.0, %v2295
        %v2297 = vpop.f32.mrb[0].mxu0
        %2298 = vmatprep.mubr.bf16.mxu0 0
        %2299 = vmatmul.mubr.bf16.gmra.mrb[0].mxu0 %v1742
        %v2300 = vpop.f32.mrb[0].mxu0
        %v2301 = vadd.f32 0.0, %v2300
        %v2302 = vpop.f32.mrb[0].mxu0
        %v2303 = vpop.f32.mrb[0].mxu0
        %v2304 = vadd.f32 0.0, %v2303
        %v2305 = vpop.f32.mrb[0].mxu0
        %2306 = vmatprep.mubr.bf16.mxu0 0
        %2307 = vmatmul.mubr.bf16.gmra.mrb[0].mxu0 %v1972
        %v2308 = vpop.f32.mrb[0].mxu0
        %v2309 = vadd.f32 0.0, %v2308
        %v2310 = vpop.f32.mrb[0].mxu0
        %v2311 = vpop.f32.mrb[0].mxu0
        %v2312 = vadd.f32 0.0, %v2311
        %v2313 = vpop.f32.mrb[0].mxu0
        %2314 = vmatprep.mubr.bf16.mxu0 0
        %2315 = vmatmul.mubr.bf16.gmra.mrb[0].mxu0 %v1733
        %v2316 = vpop.f32.mrb[0].mxu0
        %v2317 = vadd.f32 0.0, %v2316
        %v2318 = vpop.f32.mrb[0].mxu0
        %v2319 = vpop.f32.mrb[0].mxu0
        %v2320 = vadd.f32 0.0, %v2319
        %v2321 = vpop.f32.mrb[0].mxu0
        %2322 = vdwg.mxu0
        %v2323 = vadd.f32 %v2233, %v2293
        %v2324 = vadd.f32 %v2234, %v2296
        %v2325 = vadd.f32 %v2235, %v2301
        %v2326 = vadd.f32 %v2236, %v2304
        %v2327 = vadd.f32 %v2237, %v2309
        %v2328 = vadd.f32 %v2238, %v2312
        %v2329 = vadd.f32 %v2239, %v2317
        %v2330 = vadd.f32 %v2240, %v2320
        %s2331 = scalar_lea.vmem %s1, 256
        %v2332 = vld [vmem:[%s2331] sm:$0xf]
        %v2333 = vld [vmem:[%s2331 + $0x4] sm:$0xf]
        %v2334 = vld [vmem:[%s2331 + $0x8] sm:$0xf]
        %v2335 = vld [vmem:[%s2331 + $0xc] sm:$0xf]
        %v2340 = vunpack.c.l.b16 %v2332
        %v2341 = vunpack.c.l.b16 %v2333
        %v2342 = vunpack.c.l.b16 %v2334
        %v2343 = vunpack.c.l.b16 %v2335
        %v2344 = vpack.c.b16 %v2341, %v2340
        %v2345 = vpack.c.b16 %v2343, %v2342
        %2348 = vmatprep.subr.bf16.mxu0 0
        %2349 = vmatpush1.bf16.msra.mxu0 %v2344
        %2350 = vmatprep.subr.bf16.mxu0 0
        %2351 = vmatpush1.bf16.msra.mxu0 %v2345
        %2352 = vmatprep.subr.bf16.mxu0 0
        %2353 = vmatpush1.bf16.msra.mxu0 0
        %2354 = vmatprep.subr.bf16.mxu0 0
        %2355 = vmatpush1.bf16.msra.mxu0 0
        %2356 = vmatprep.subr.bf16.mxu0 0
        %2357 = vmatpush1.bf16.msra.mxu0 0
        %2358 = vmatprep.subr.bf16.mxu0 0
        %2359 = vmatpush1.bf16.msra.mxu0 0
        %2360 = vmatprep.subr.bf16.mxu0 0
        %2361 = vmatpush1.bf16.msra.mxu0 0
        %2362 = vmatprep.subr.bf16.mxu0 0
        %2363 = vmatpush1.bf16.msra.mxu0 0
        %2364 = vmatprep.subr.bf16.mxu0 0
        %2365 = vmatpush1.bf16.msra.mxu0 0
        %2366 = vmatprep.subr.bf16.mxu0 0
        %2367 = vmatpush1.bf16.msra.mxu0 0
        %2368 = vmatprep.subr.bf16.mxu0 0
        %2369 = vmatpush1.bf16.msra.mxu0 0
        %2370 = vmatprep.subr.bf16.mxu0 0
        %2371 = vmatpush1.bf16.msra.mxu0 0
        %2372 = vmatprep.subr.bf16.mxu0 0
        %2373 = vmatpush1.bf16.msra.mxu0 0
        %2374 = vmatprep.subr.bf16.mxu0 0
        %2375 = vmatpush1.bf16.msra.mxu0 0
        %2376 = vmatprep.subr.bf16.mxu0 0
        %2377 = vmatpush1.bf16.msra.mxu0 0
        %2378 = vmatprep.subr.bf16.mxu0 0
        %2379 = vmatpush1.bf16.msra.mxu0 0
        %2380 = vmatprep.mubr.bf16.mxu0 0
        %2381 = vmatmul.mubr.bf16.gmra.mrb[0].mxu0 %v1049
        %v2382 = vpop.f32.mrb[0].mxu0
        %v2383 = vadd.f32 0.0, %v2382
        %v2384 = vpop.f32.mrb[0].mxu0
        %v2385 = vpop.f32.mrb[0].mxu0
        %v2386 = vadd.f32 0.0, %v2385
        %v2387 = vpop.f32.mrb[0].mxu0
        %2388 = vmatprep.mubr.bf16.mxu0 0
        %2389 = vmatmul.mubr.bf16.gmra.mrb[0].mxu0 %v1052
        %v2390 = vpop.f32.mrb[0].mxu0
        %v2391 = vadd.f32 0.0, %v2390
        %v2392 = vpop.f32.mrb[0].mxu0
        %v2393 = vpop.f32.mrb[0].mxu0
        %v2394 = vadd.f32 0.0, %v2393
        %v2395 = vpop.f32.mrb[0].mxu0
        %2396 = vmatprep.mubr.bf16.mxu0 0
        %2397 = vmatmul.mubr.bf16.gmra.mrb[0].mxu0 %v1055
        %v2398 = vpop.f32.mrb[0].mxu0
        %v2399 = vadd.f32 0.0, %v2398
        %v2400 = vpop.f32.mrb[0].mxu0
        %v2401 = vpop.f32.mrb[0].mxu0
        %v2402 = vadd.f32 0.0, %v2401
        %v2403 = vpop.f32.mrb[0].mxu0
        %2404 = vmatprep.mubr.bf16.mxu0 0
        %2405 = vmatmul.mubr.bf16.gmra.mrb[0].mxu0 %v1651
        %v2406 = vpop.f32.mrb[0].mxu0
        %v2407 = vadd.f32 0.0, %v2406
        %v2408 = vpop.f32.mrb[0].mxu0
        %v2409 = vpop.f32.mrb[0].mxu0
        %v2410 = vadd.f32 0.0, %v2409
        %v2411 = vpop.f32.mrb[0].mxu0
        %2412 = vdwg.mxu0
        %v2413 = vadd.f32 %v2323, %v2383
        %v2414 = vadd.f32 %v2324, %v2386
        %v2415 = vadd.f32 %v2325, %v2391
        %v2416 = vadd.f32 %v2326, %v2394
        %v2417 = vadd.f32 %v2327, %v2399
        %v2418 = vadd.f32 %v2328, %v2402
        %v2419 = vadd.f32 %v2329, %v2407
        %v2420 = vadd.f32 %v2330, %v2410
        %s2421 = scalar_lea.vmem %s1, 272
        %v2422 = vld [vmem:[%s2421] sm:$0xf]
        %v2423 = vld [vmem:[%s2421 + $0x4] sm:$0xf]
        %v2424 = vld [vmem:[%s2421 + $0x8] sm:$0xf]
        %v2425 = vld [vmem:[%s2421 + $0xc] sm:$0xf]
        %v2430 = vunpack.c.l.b16 %v2422
        %v2431 = vunpack.c.l.b16 %v2423
        %v2432 = vunpack.c.l.b16 %v2424
        %v2433 = vunpack.c.l.b16 %v2425
        %v2434 = vpack.c.b16 %v2431, %v2430
        %v2435 = vpack.c.b16 %v2433, %v2432
        %2438 = vmatprep.subr.bf16.mxu0 0
        %2439 = vmatpush1.bf16.msra.mxu0 %v2434
        %2440 = vmatprep.subr.bf16.mxu0 0
        %2441 = vmatpush1.bf16.msra.mxu0 %v2435
        %2442 = vmatprep.subr.bf16.mxu0 0
        %2443 = vmatpush1.bf16.msra.mxu0 0
        %2444 = vmatprep.subr.bf16.mxu0 0
        %2445 = vmatpush1.bf16.msra.mxu0 0
        %2446 = vmatprep.subr.bf16.mxu0 0
        %2447 = vmatpush1.bf16.msra.mxu0 0
        %2448 = vmatprep.subr.bf16.mxu0 0
        %2449 = vmatpush1.bf16.msra.mxu0 0
        %2450 = vmatprep.subr.bf16.mxu0 0
        %2451 = vmatpush1.bf16.msra.mxu0 0
        %2452 = vmatprep.subr.bf16.mxu0 0
        %2453 = vmatpush1.bf16.msra.mxu0 0
        %2454 = vmatprep.subr.bf16.mxu0 0
        %2455 = vmatpush1.bf16.msra.mxu0 0
        %2456 = vmatprep.subr.bf16.mxu0 0
        %2457 = vmatpush1.bf16.msra.mxu0 0
        %2458 = vmatprep.subr.bf16.mxu0 0
        %2459 = vmatpush1.bf16.msra.mxu0 0
        %2460 = vmatprep.subr.bf16.mxu0 0
        %2461 = vmatpush1.bf16.msra.mxu0 0
        %2462 = vmatprep.subr.bf16.mxu0 0
        %2463 = vmatpush1.bf16.msra.mxu0 0
        %2464 = vmatprep.subr.bf16.mxu0 0
        %2465 = vmatpush1.bf16.msra.mxu0 0
        %2466 = vmatprep.subr.bf16.mxu0 0
        %2467 = vmatpush1.bf16.msra.mxu0 0
        %2468 = vmatprep.subr.bf16.mxu0 0
        %2469 = vmatpush1.bf16.msra.mxu0 0
        %2470 = vmatprep.mubr.bf16.mxu0 0
        %2471 = vmatmul.mubr.bf16.gmra.mrb[0].mxu0 %v1875
        %v2472 = vpop.f32.mrb[0].mxu0
        %v2473 = vadd.f32 0.0, %v2472
        %v2474 = vpop.f32.mrb[0].mxu0
        %v2475 = vpop.f32.mrb[0].mxu0
        %v2476 = vadd.f32 0.0, %v2475
        %v2477 = vpop.f32.mrb[0].mxu0
        %2478 = vmatprep.mubr.bf16.mxu0 0
        %2479 = vmatmul.mubr.bf16.gmra.mrb[0].mxu0 %v1878
        %v2480 = vpop.f32.mrb[0].mxu0
        %v2481 = vadd.f32 0.0, %v2480
        %v2482 = vpop.f32.mrb[0].mxu0
        %v2483 = vpop.f32.mrb[0].mxu0
        %v2484 = vadd.f32 0.0, %v2483
        %v2485 = vpop.f32.mrb[0].mxu0
        %2486 = vmatprep.mubr.bf16.mxu0 0
        %2487 = vmatmul.mubr.bf16.gmra.mrb[0].mxu0 %v2166
        %v2488 = vpop.f32.mrb[0].mxu0
        %v2489 = vadd.f32 0.0, %v2488
        %v2490 = vpop.f32.mrb[0].mxu0
        %v2491 = vpop.f32.mrb[0].mxu0
        %v2492 = vadd.f32 0.0, %v2491
        %v2493 = vpop.f32.mrb[0].mxu0
        %2494 = vmatprep.mubr.bf16.mxu0 0
        %2495 = vmatmul.mubr.bf16.gmra.mrb[0].mxu0 %v1869
        %v2496 = vpop.f32.mrb[0].mxu0
        %v2497 = vadd.f32 0.0, %v2496
        %v2498 = vpop.f32.mrb[0].mxu0
        %v2499 = vpop.f32.mrb[0].mxu0
        %v2500 = vadd.f32 0.0, %v2499
        %v2501 = vpop.f32.mrb[0].mxu0
        %2502 = vdwg.mxu0
        %v2503 = vadd.f32 %v2413, %v2473
        %v2504 = vadd.f32 %v2414, %v2476
        %v2505 = vadd.f32 %v2415, %v2481
        %v2506 = vadd.f32 %v2416, %v2484
        %v2507 = vadd.f32 %v2417, %v2489
        %v2508 = vadd.f32 %v2418, %v2492
        %v2509 = vadd.f32 %v2419, %v2497
        %v2510 = vadd.f32 %v2420, %v2500
        %v2511 = vld [vmem:[%s2 + $0x1] sm:$0x1]
        %v2512 = vlaneseq
        %v2513 = vshrl.u32 %v2512, 7
        %v2514 = vsub.s32 0, %v2513
        %v2515 = vrot.slane %v2511, %v2514
        %v2516 = vmul.f32 %v2503, %v2515
        %v2517 = vmul.f32 %v2504, %v2515
        %v2518 = vmul.f32 %v2505, %v2515
        %v2519 = vmul.f32 %v2506, %v2515
        %v2520 = vmul.f32 %v2507, %v2515
        %v2521 = vmul.f32 %v2508, %v2515
        %v2522 = vmul.f32 %v2509, %v2515
        %v2523 = vmul.f32 %v2510, %v2515
        %v2524 = vld [vmem:[%s3 + $0x1] sm:$0x1]
        %v2525 = vlaneseq
        %v2526 = vshrl.u32 %v2525, 7
        %v2527 = vsub.s32 0, %v2526
        %v2528 = vrot.slane %v2524, %v2527
        %v2529 = vadd.f32 %v2516, %v2528
        %v2530 = vadd.f32 %v2517, %v2528
        %v2531 = vadd.f32 %v2518, %v2528
        %v2532 = vadd.f32 %v2519, %v2528
        %v2533 = vadd.f32 %v2520, %v2528
        %v2534 = vadd.f32 %v2521, %v2528
        %v2535 = vadd.f32 %v2522, %v2528
        %v2536 = vadd.f32 %v2523, %v2528
        %v2537 = vmax.f32 %v2529, 0.0
        %v2538 = vmax.f32 %v2530, 0.0
        %v2539 = vmax.f32 %v2531, 0.0
        %v2540 = vmax.f32 %v2532, 0.0
        %v2541 = vmax.f32 %v2533, 0.0
        %v2542 = vmax.f32 %v2534, 0.0
        %v2543 = vmax.f32 %v2535, 0.0
        %v2544 = vmax.f32 %v2536, 0.0
        %v2545 = vpack.c.bf16 %v2538, %v2537
        %v2546 = vpack.c.bf16 %v2540, %v2539
        %v2547 = vpack.c.bf16 %v2542, %v2541
        %v2548 = vpack.c.bf16 %v2544, %v2543
        %v2553 = vunpack.c.l.b16 %v2545
        %v2554 = vunpack.c.h.b16 %v2545
        %v2555 = vunpack.c.l.b16 %v2546
        %v2556 = vunpack.c.h.b16 %v2546
        %v2557 = vunpack.c.l.b16 %v2547
        %v2558 = vunpack.c.h.b16 %v2547
        %v2559 = vunpack.c.l.b16 %v2548
        %v2560 = vunpack.c.h.b16 %v2548
        %v2561 = vpack.c.b16 %v2553, %v2553
        %v2562 = vpack.c.b16 %v2554, %v2554
        %v2563 = vpack.c.b16 %v2555, %v2555
        %v2564 = vpack.c.b16 %v2556, %v2556
        %v2565 = vpack.c.b16 %v2557, %v2557
        %v2566 = vpack.c.b16 %v2558, %v2558
        %v2567 = vpack.c.b16 %v2559, %v2559
        %v2568 = vpack.c.b16 %v2560, %v2560
        %s2577 = scalar_lea.vmem %s214, 32 [#allocation2]
        %2578 = vst.msk [vmem:[%s2577] sm:$0xf] %vm1595, %v2561
        %2579 = vst.msk [vmem:[%s2577 + $0x4] sm:$0xf] %vm1595, %v2562
        %2580 = vst.msk [vmem:[%s2577 + $0x8] sm:$0xf] %vm1595, %v2563
        %2581 = vst.msk [vmem:[%s2577 + $0xc] sm:$0xf] %vm1595, %v2564
        %2582 = vst.msk [vmem:[%s2577 + $0x10] sm:$0xf] %vm1595, %v2565
        %2583 = vst.msk [vmem:[%s2577 + $0x14] sm:$0xf] %vm1595, %v2566
        %2584 = vst.msk [vmem:[%s2577 + $0x18] sm:$0xf] %vm1595, %v2567
        %2585 = vst.msk [vmem:[%s2577 + $0x1c] sm:$0xf] %vm1595, %v2568
        %v2586 = vsel %vm517, %v2537, 0.0
        %v2587 = vsel %vm517, %v2538, 0.0
        %v2588 = vadd.f32 %v2586, %v2587
        %v2589 = vsel %vm517, %v2539, 0.0
        %v2590 = vadd.f32 %v2588, %v2589
        %v2591 = vsel %vm517, %v2540, 0.0
        %v2592 = vadd.f32 %v2590, %v2591
        %v2593 = vsel %vm517, %v2541, 0.0
        %v2594 = vadd.f32 %v2592, %v2593
        %v2595 = vsel %vm517, %v2542, 0.0
        %v2596 = vadd.f32 %v2594, %v2595
        %v2597 = vsel %vm517, %v2543, 0.0
        %v2598 = vadd.f32 %v2596, %v2597
        %v2599 = vsel %vm517, %v2544, 0.0
        %v2600 = vadd.f32 %v2598, %v2599
        %v2601 = vrot.slane %v2600, 4
        %v2602 = vadd.f32 %v2600, %v2601
        %v2603 = vrot.slane %v2602, 2
        %v2604 = vadd.f32 %v2602, %v2603
        %v2605 = vrot.slane %v2604, 1
        %v2606 = vadd.f32 %v2604, %v2605
        %s2607 = scalar_lea.vmem %s220, 1 [#allocation3]
        %2608 = vst.msk [vmem:[%s2607] sm:$0x1] %vm1625, %v2606
        %s2609 = sand.u32 %s114, 1
        %s2610 = sand.u32 %s114, 1
        %s2611 = smul.addr %s2610, 64
        %s2612 = scalar_lea.vmem [#allocation2], %s2611
        %s2613 = sand.u32 %s140, 1
        %s2614 = sand.u32 %s140, 1
        %s2615 = smul.addr %s2614, 2
        %s2616 = scalar_lea.vmem [#allocation3], %s2615
        // Predicated region
        $region37: #{sk_unit_forward.5} parent=35 // pred_check
          %p2617 = pneg %p124
        $region38: #{sk_unit_forward.5} parent=35 // pred_check_branch
          %2619 = sbr.rel (%p2617) target = $region40
        $region39: #{sk_unit_forward.5} parent=35 // pred_region
          %s2620 = smul.addr %s17, 8
          %s2621 = smul.addr %s2620, 4
          %s2622 = scalar_lea.vmem %s4, %s2621
          // Predicated region
          $region41: #{sk_unit_forward.5} parent=39 // pred_check
            _
          $region42: #{sk_unit_forward.5} parent=39 // pred_check_branch
            %2624 = sbr.rel (0) target = $region44
          $region43: #{sk_unit_forward.5} parent=39 // pred_region
            // Predicated region
            $region45: #{sk_unit_forward.5} parent=43 // pred_check
              _
            $region46: #{sk_unit_forward.5} parent=43 // pred_check_branch
              %2626 = sbr.rel target = $region48
            $region47: #{sk_unit_forward.5} parent=43 // pred_region
              // Predicated region
              $region60: #{sk_unit_forward.5} parent=47 // pred_check
                _
              $region61: #{sk_unit_forward.5} parent=47 // pred_check_branch
                %2671 = sbr.rel (0) target = $region63
              $region62: #{sk_unit_forward.5} parent=47 // pred_region
                loop: start=0, step=1, limit=1
                $region64: #{sk_unit_forward.5} parent=62 // loop_pre_header
                  _
                $region65: #{sk_unit_forward.5} parent=62 // loop_header
                  %s2673 = sphi 0, %s2677
                  %p2674 = scmp.ge.s32.totalorder %s2673, 1
                  %s2678 = sphi %s2612, %s2612
                  %s2679 = sphi %s2622, %s2622
                $region66: #{sk_unit_forward.5} parent=62 // loop_header_branch
                  %2676 = sbr.rel (%p2674) target = $region70
                $region67: #{sk_unit_forward.5} parent=62 // loop_body
                  _
                $region68: #{sk_unit_forward.5} parent=62 // loop_footer
                  %s2677 = sadd.s32 1, %s2673
                $region69: #{sk_unit_forward.5} parent=62 // loop_footer_branch
                  %2672 = sbr.rel target = $region65
                $region70: #{sk_unit_forward.5} parent=62 // loop_exit
                  _
                loop: start=0, step=1, limit=1
                $region71: #{sk_unit_forward.5} parent=62 // loop_pre_header
                  _
                $region72: #{sk_unit_forward.5} parent=62 // loop_header
                  %s2682 = sphi 0, %s2686
                  %p2683 = scmp.ge.s32.totalorder %s2682, 1
                  %s2687 = sphi %s2612, %s2612
                  %s2688 = sphi %s2622, %s2622
                $region73: #{sk_unit_forward.5} parent=62 // loop_header_branch
                  %2685 = sbr.rel (%p2683) target = $region77
                $region74: #{sk_unit_forward.5} parent=62 // loop_body
                  %v2689 = vld [vmem:[%s2687] sm:$0xf]
                  %2690 = vst [vmem:[%s2688] sm:$0xf] %v2689
                  %v2691 = vld [vmem:[%s2687 + $0x4] sm:$0xf]
                  %2692 = vst [vmem:[%s2688 + $0x4] sm:$0xf] %v2691
                  %v2693 = vld [vmem:[%s2687 + $0x8] sm:$0xf]
                  %2694 = vst [vmem:[%s2688 + $0x8] sm:$0xf] %v2693
                  %v2695 = vld [vmem:[%s2687 + $0xc] sm:$0xf]
                  %2696 = vst [vmem:[%s2688 + $0xc] sm:$0xf] %v2695
                  %v2697 = vld [vmem:[%s2687 + $0x10] sm:$0xf]
                  %2698 = vst [vmem:[%s2688 + $0x10] sm:$0xf] %v2697
                  %v2699 = vld [vmem:[%s2687 + $0x14] sm:$0xf]
                  %2700 = vst [vmem:[%s2688 + $0x14] sm:$0xf] %v2699
                  %v2701 = vld [vmem:[%s2687 + $0x18] sm:$0xf]
                  %2702 = vst [vmem:[%s2688 + $0x18] sm:$0xf] %v2701
                  %v2703 = vld [vmem:[%s2687 + $0x1c] sm:$0xf]
                  %2704 = vst [vmem:[%s2688 + $0x1c] sm:$0xf] %v2703
                  %v2705 = vld [vmem:[%s2687 + $0x20] sm:$0xf]
                  %2706 = vst [vmem:[%s2688 + $0x40] sm:$0xf] %v2705
                  %v2707 = vld [vmem:[%s2687 + $0x24] sm:$0xf]
                  %2708 = vst [vmem:[%s2688 + $0x44] sm:$0xf] %v2707
                  %v2709 = vld [vmem:[%s2687 + $0x28] sm:$0xf]
                  %2710 = vst [vmem:[%s2688 + $0x48] sm:$0xf] %v2709
                  %v2711 = vld [vmem:[%s2687 + $0x2c] sm:$0xf]
                  %2712 = vst [vmem:[%s2688 + $0x4c] sm:$0xf] %v2711
                  %v2713 = vld [vmem:[%s2687 + $0x30] sm:$0xf]
                  %2714 = vst [vmem:[%s2688 + $0x50] sm:$0xf] %v2713
                  %v2715 = vld [vmem:[%s2687 + $0x34] sm:$0xf]
                  %2716 = vst [vmem:[%s2688 + $0x54] sm:$0xf] %v2715
                  %v2717 = vld [vmem:[%s2687 + $0x38] sm:$0xf]
                  %2718 = vst [vmem:[%s2688 + $0x58] sm:$0xf] %v2717
                  %v2719 = vld [vmem:[%s2687 + $0x3c] sm:$0xf]
                  %2720 = vst [vmem:[%s2688 + $0x5c] sm:$0xf] %v2719
                $region75: #{sk_unit_forward.5} parent=62 // loop_footer
                  %s2686 = sadd.s32 1, %s2682
                $region76: #{sk_unit_forward.5} parent=62 // loop_footer_branch
                  %2681 = sbr.rel target = $region72
                $region77: #{sk_unit_forward.5} parent=62 // loop_exit
                  _
              $region63: #{sk_unit_forward.5} parent=47 // pred_fallthru
                _
            $region48: #{sk_unit_forward.5} parent=43 // pred_fallthru
              _
            // Predicated region
            $region49: #{sk_unit_forward.5} parent=43 // pred_check
              _
            $region50: #{sk_unit_forward.5} parent=43 // pred_check_branch
              %2628 = sbr.rel (0) target = $region52
            $region51: #{sk_unit_forward.5} parent=43 // pred_region
              loop: start=0, step=1, limit=1
              $region53: #{sk_unit_forward.5} parent=51 // loop_pre_header
                _
              $region54: #{sk_unit_forward.5} parent=51 // loop_header
                %s2631 = sphi 0, %s2635
                %p2632 = scmp.ge.s32.totalorder %s2631, 1
                %s2636 = sphi %s2612, %s2612
                %s2637 = sphi %s2622, %s2622
              $region55: #{sk_unit_forward.5} parent=51 // loop_header_branch
                %2634 = sbr.rel (%p2632) target = $region59
              $region56: #{sk_unit_forward.5} parent=51 // loop_body
                %v2638 = vld [vmem:[%s2636] sm:$0xf]
                %2639 = vst [vmem:[%s2637] sm:$0xf] %v2638
                %v2640 = vld [vmem:[%s2636 + $0x4] sm:$0xf]
                %2641 = vst [vmem:[%s2637 + $0x4] sm:$0xf] %v2640
                %v2642 = vld [vmem:[%s2636 + $0x8] sm:$0xf]
                %2643 = vst [vmem:[%s2637 + $0x8] sm:$0xf] %v2642
                %v2644 = vld [vmem:[%s2636 + $0xc] sm:$0xf]
                %2645 = vst [vmem:[%s2637 + $0xc] sm:$0xf] %v2644
                %v2646 = vld [vmem:[%s2636 + $0x10] sm:$0xf]
                %2647 = vst [vmem:[%s2637 + $0x10] sm:$0xf] %v2646
                %v2648 = vld [vmem:[%s2636 + $0x14] sm:$0xf]
                %2649 = vst [vmem:[%s2637 + $0x14] sm:$0xf] %v2648
                %v2650 = vld [vmem:[%s2636 + $0x18] sm:$0xf]
                %2651 = vst [vmem:[%s2637 + $0x18] sm:$0xf] %v2650
                %v2652 = vld [vmem:[%s2636 + $0x1c] sm:$0xf]
                %2653 = vst [vmem:[%s2637 + $0x1c] sm:$0xf] %v2652
                %v2654 = vld [vmem:[%s2636 + $0x20] sm:$0xf]
                %2655 = vst [vmem:[%s2637 + $0x40] sm:$0xf] %v2654
                %v2656 = vld [vmem:[%s2636 + $0x24] sm:$0xf]
                %2657 = vst [vmem:[%s2637 + $0x44] sm:$0xf] %v2656
                %v2658 = vld [vmem:[%s2636 + $0x28] sm:$0xf]
                %2659 = vst [vmem:[%s2637 + $0x48] sm:$0xf] %v2658
                %v2660 = vld [vmem:[%s2636 + $0x2c] sm:$0xf]
                %2661 = vst [vmem:[%s2637 + $0x4c] sm:$0xf] %v2660
                %v2662 = vld [vmem:[%s2636 + $0x30] sm:$0xf]
                %2663 = vst [vmem:[%s2637 + $0x50] sm:$0xf] %v2662
                %v2664 = vld [vmem:[%s2636 + $0x34] sm:$0xf]
                %2665 = vst [vmem:[%s2637 + $0x54] sm:$0xf] %v2664
                %v2666 = vld [vmem:[%s2636 + $0x38] sm:$0xf]
                %2667 = vst [vmem:[%s2637 + $0x58] sm:$0xf] %v2666
                %v2668 = vld [vmem:[%s2636 + $0x3c] sm:$0xf]
                %2669 = vst [vmem:[%s2637 + $0x5c] sm:$0xf] %v2668
              $region57: #{sk_unit_forward.5} parent=51 // loop_footer
                %s2635 = sadd.s32 1, %s2631
              $region58: #{sk_unit_forward.5} parent=51 // loop_footer_branch
                %2630 = sbr.rel target = $region54
              $region59: #{sk_unit_forward.5} parent=51 // loop_exit
                _
            $region52: #{sk_unit_forward.5} parent=43 // pred_fallthru
              _
          $region44: #{sk_unit_forward.5} parent=39 // pred_fallthru
            _
          %2721 = vnop
        $region40: #{sk_unit_forward.5} parent=35 // pred_fallthru
          _
        // Predicated region
        $region78: #{sk_unit_forward.5} parent=35 // pred_check
          %p2722 = pneg %p150
        $region79: #{sk_unit_forward.5} parent=35 // pred_check_branch
          %2724 = sbr.rel (%p2722) target = $region81
        $region80: #{sk_unit_forward.5} parent=35 // pred_region
          %s2725 = scalar_lea.vmem %s5, %s17
          // Predicated region
          $region82: #{sk_unit_forward.5} parent=80 // pred_check
            _
          $region83: #{sk_unit_forward.5} parent=80 // pred_check_branch
            %2727 = sbr.rel (0) target = $region85
          $region84: #{sk_unit_forward.5} parent=80 // pred_region
            // Predicated region
            $region86: #{sk_unit_forward.5} parent=84 // pred_check
              _
            $region87: #{sk_unit_forward.5} parent=84 // pred_check_branch
              %2729 = sbr.rel target = $region89
            $region88: #{sk_unit_forward.5} parent=84 // pred_region
              // Predicated region
              $region101: #{sk_unit_forward.5} parent=88 // pred_check
                _
              $region102: #{sk_unit_forward.5} parent=88 // pred_check_branch
                %2746 = sbr.rel (0) target = $region104
              $region103: #{sk_unit_forward.5} parent=88 // pred_region
                loop: start=0, step=1, limit=1
                $region105: #{sk_unit_forward.5} parent=103 // loop_pre_header
                  _
                $region106: #{sk_unit_forward.5} parent=103 // loop_header
                  %s2749 = sphi 0, %s2753
                  %p2750 = scmp.ge.s32.totalorder %s2749, 1
                  %s2754 = sphi %s2616, %s2616
                  %s2755 = sphi %s2725, %s2725
                $region107: #{sk_unit_forward.5} parent=103 // loop_header_branch
                  %2752 = sbr.rel (%p2750) target = $region111
                $region108: #{sk_unit_forward.5} parent=103 // loop_body
                  %v2756 = vld [vmem:[%s2754] sm:$0x1]
                  %2757 = vst [vmem:[%s2755] sm:$0x1] %v2756
                  %v2758 = vld [vmem:[%s2754 + $0x1] sm:$0x1]
                  %2759 = vst [vmem:[%s2755 + $0x2] sm:$0x1] %v2758
                $region109: #{sk_unit_forward.5} parent=103 // loop_footer
                  %s2753 = sadd.s32 1, %s2749
                $region110: #{sk_unit_forward.5} parent=103 // loop_footer_branch
                  %2748 = sbr.rel target = $region106
                $region111: #{sk_unit_forward.5} parent=103 // loop_exit
                  _
              $region104: #{sk_unit_forward.5} parent=88 // pred_fallthru
                _
            $region89: #{sk_unit_forward.5} parent=84 // pred_fallthru
              _
            // Predicated region
            $region90: #{sk_unit_forward.5} parent=84 // pred_check
              _
            $region91: #{sk_unit_forward.5} parent=84 // pred_check_branch
              %2731 = sbr.rel (0) target = $region93
            $region92: #{sk_unit_forward.5} parent=84 // pred_region
              loop: start=0, step=1, limit=1
              $region94: #{sk_unit_forward.5} parent=92 // loop_pre_header
                _
              $region95: #{sk_unit_forward.5} parent=92 // loop_header
                %s2734 = sphi 0, %s2738
                %p2735 = scmp.ge.s32.totalorder %s2734, 1
                %s2739 = sphi %s2616, %s2616
                %s2740 = sphi %s2725, %s2725
              $region96: #{sk_unit_forward.5} parent=92 // loop_header_branch
                %2737 = sbr.rel (%p2735) target = $region100
              $region97: #{sk_unit_forward.5} parent=92 // loop_body
                %v2741 = vld [vmem:[%s2739] sm:$0x1]
                %2742 = vst [vmem:[%s2740] sm:$0x1] %v2741
                %v2743 = vld [vmem:[%s2739 + $0x1] sm:$0x1]
                %2744 = vst [vmem:[%s2740 + $0x2] sm:$0x1] %v2743
              $region98: #{sk_unit_forward.5} parent=92 // loop_footer
                %s2738 = sadd.s32 1, %s2734
              $region99: #{sk_unit_forward.5} parent=92 // loop_footer_branch
                %2733 = sbr.rel target = $region95
              $region100: #{sk_unit_forward.5} parent=92 // loop_exit
                _
            $region93: #{sk_unit_forward.5} parent=84 // pred_fallthru
              _
          $region85: #{sk_unit_forward.5} parent=80 // pred_fallthru
            _
          %2760 = vnop
        $region81: #{sk_unit_forward.5} parent=35 // pred_fallthru
          _
      $region36: #{sk_unit_forward.5} parent=5 // pred_fallthru
        _
      %p2761 = scmp.le.s32.totalorder 2, %s12
      // Predicated region
      $region112: #{sk_unit_forward.5} parent=5 // pred_check
        %p2762 = pneg %p2761
      $region113: #{sk_unit_forward.5} parent=5 // pred_check_branch
        %2764 = sbr.rel (%p2762) target = $region115
      $region114: #{sk_unit_forward.5} parent=5 // pred_region
        %s2765 = ssub.s32 %s12, 2
        // Predicated region
        $region116: #{sk_unit_forward.5} parent=114 // pred_check
          %p2766 = pneg %p130
        $region117: #{sk_unit_forward.5} parent=114 // pred_check_branch
          %2768 = sbr.rel (%p2766) target = $region119
        $region118: #{sk_unit_forward.5} parent=114 // pred_region
          %s2769 = sand.u32 %s115, 1
          %s2770 = sand.u32 %s115, 1
          %s2771 = smul.addr %s2770, 64
          %s2772 = scalar_lea.vmem [#allocation2], %s2771
        $region119: #{sk_unit_forward.5} parent=114 // pred_fallthru
          _
        // Predicated region
        $region120: #{sk_unit_forward.5} parent=114 // pred_check
          %p2773 = pneg %p156
        $region121: #{sk_unit_forward.5} parent=114 // pred_check_branch
          %2775 = sbr.rel (%p2773) target = $region123
        $region122: #{sk_unit_forward.5} parent=114 // pred_region
          %s2776 = sand.u32 %s141, 1
          %s2777 = sand.u32 %s141, 1
          %s2778 = smul.addr %s2777, 2
          %s2779 = scalar_lea.vmem [#allocation3], %s2778
        $region123: #{sk_unit_forward.5} parent=114 // pred_fallthru
          _
      $region115: #{sk_unit_forward.5} parent=5 // pred_fallthru
        _
    $region6: #{sk_unit_forward.5} parent=1 // loop_footer
      %s16 = sadd.s32 1, %s12
    $region7: #{sk_unit_forward.5} parent=1 // loop_footer_branch
      %11 = sbr.rel target = $region3
    $region8: #{sk_unit_forward.5} parent=1 // loop_exit
      _

</llo_original>
